<compile_context>
chip_gen: v6e
topology: v6e:2x2x1
jax: 0.10.0
libtpu: 0.0.40
codegen_flags: <defaults>
</compile_context>

<pallas_src>
import functools

import jax
import jax.numpy as jnp
import numpy as np
from jax import lax
from jax.experimental import pallas as pl
from jax.experimental.pallas import tpu as pltpu


def _round_up(x, m):
    return (x + m - 1) // m * m


def _hint_multiple(x, m):
    """Apply pl.multiple_of only to traced values (indices may be concrete when
    the recurrence loop is fully unrolled)."""
    if isinstance(x, jax.Array):
        return pl.multiple_of(x, m)
    return x


def _encoder_kernel(xf_ref, xb_ref,                 # (chunk*Bp, Ep) chunk slabs
                    wih_f_ref, wih_b_ref,           # (Ep, 3Hp)
                    whh_f_ref, whh_b_ref,           # (Hp, 3Hp)
                    bpre_f_ref, bpre_b_ref,         # (1, 3Hp): b_ih + [b_hr, b_hz, 0]
                    bhn_f_ref, bhn_b_ref,           # (1, Hp):  b_hn
                    wfc_f_ref, wfc_b_ref,           # (Hp, DHp) (fc split by direction)
                    bfc_ref,                        # (1, DHp)
                    out_f_ref, out_b_ref,           # (chunk*Bp, Hp) chunk slabs
                    hid_ref,                        # (Bp, DHp)
                    gif_scr, gib_scr,               # (chunk*Bp, 3Hp) scratch
                    hf_scr, hb_scr,                 # (Bp, Hp) carried hidden state
                    *, chunk, seq_len, b_pad):
    g = pl.program_id(0)
    n_chunks = pl.num_programs(0)
    Bp = b_pad
    Hp = whh_f_ref.shape[0]
    mm = whh_f_ref.dtype                            # matmul input dtype (f32 or bf16)

    # TODO(synk): dropout implemented as identity (inference/eval semantics);
    # training-mode Bernoulli masking is omitted.

    @pl.when(g == 0)
    def _init():
        hf_scr[...] = jnp.zeros_like(hf_scr)
        hb_scr[...] = jnp.zeros_like(hb_scr)

    # ---- Hoisted input projection for this chunk: one big matmul per dir ----
    gif_scr[...] = (jnp.dot(xf_ref[...], wih_f_ref[...],
                            preferred_element_type=jnp.float32) + bpre_f_ref[...])
    gib_scr[...] = (jnp.dot(xb_ref[...], wih_b_ref[...],
                            preferred_element_type=jnp.float32) + bpre_b_ref[...])

    # Hoist weight loads and the b_hn broadcast out of the loop.
    whh_f = whh_f_ref[...]
    whh_b = whh_b_ref[...]
    bhn_f = jnp.broadcast_to(bhn_f_ref[...], (Bp, Hp))
    bhn_b = jnp.broadcast_to(bhn_b_ref[...], (Bp, Hp))

    base_f = g * chunk                       # fwd chunk covers [base_f, base_f+chunk)
    base_b = (n_chunks - 1 - g) * chunk      # bwd chunk covers [base_b, base_b+chunk)

    def gru_update(gi, gh, bhn, h_prev):
        # PyTorch gate order [r, z, n]; b_ih / b_hr / b_hz already folded in gi.
        r = jax.nn.sigmoid(gi[:, 0:Hp] + gh[:, 0:Hp])
        z = jax.nn.sigmoid(gi[:, Hp:2 * Hp] + gh[:, Hp:2 * Hp])
        n = jnp.tanh(gi[:, 2 * Hp:3 * Hp] + r * (gh[:, 2 * Hp:3 * Hp] + bhn))
        return (1.0 - z) * n + z * h_prev

    def body(i, carry):
        h_f, h_b = carry
        j = chunk - 1 - i
        rf = _hint_multiple(i * Bp, Bp)
        rb = _hint_multiple(j * Bp, Bp)
        # Two independent recurrence chains issued back-to-back on the MXU.
        gh_f = jnp.dot(h_f.astype(mm), whh_f, preferred_element_type=jnp.float32)
        gh_b = jnp.dot(h_b.astype(mm), whh_b, preferred_element_type=jnp.float32)
        hf_new = gru_update(gif_scr[pl.ds(rf, Bp), :], gh_f, bhn_f, h_f)
        hb_new = gru_update(gib_scr[pl.ds(rb, Bp), :], gh_b, bhn_b, h_b)
        # Mask the zero-padded tail timesteps (only present in the last real chunk).
        h_f = jnp.where(base_f + i < seq_len, hf_new, h_f)
        h_b = jnp.where(base_b + j < seq_len, hb_new, h_b)
        out_f_ref[pl.ds(rf, Bp), :] = h_f.astype(out_f_ref.dtype)
        out_b_ref[pl.ds(rb, Bp), :] = h_b.astype(out_b_ref.dtype)
        return (h_f, h_b)

    # Hidden states carried in vregs within the chunk; modest unroll to keep
    # vreg pressure under the 64-register file at production sizes.
    h_f, h_b = lax.fori_loop(0, chunk, body, (hf_scr[...], hb_scr[...]),
                             unroll=True if chunk <= 8 else 2)
    hf_scr[...] = h_f
    hb_scr[...] = h_b

    # hidden = tanh(concat(h_fwd_final, h_bwd_final) @ W_fc^T + b_fc), as a
    # split matmul (no lane-dim concat), computed once on the final grid step.
    @pl.when(g == n_chunks - 1)
    def _fc():
        fc = (jnp.dot(h_f.astype(mm), wfc_f_ref[...], preferred_element_type=jnp.float32)
              + jnp.dot(h_b.astype(mm), wfc_b_ref[...], preferred_element_type=jnp.float32)
              + bfc_ref[...])
        hid_ref[...] = jnp.tanh(fc).astype(hid_ref.dtype)


def encoder_forward(src, params, *, matmul_dtype=jnp.float32, target_chunk=32):
    """src: (src_len, batch, emb_dim) float32 -> (outputs, hidden)."""
    T, B, E = src.shape
    H = params["whh_f"].shape[0]
    DH = params["wfc"].shape[1]
    f32 = jnp.float32
    mm = jnp.dtype(matmul_dtype)

    # Lane/sublane padding: batch -> multiple of 8, feature dims -> multiples
    # of 128.  Zero padding is exact for the GRU (padded hidden lanes stay 0);
    # padded rows/cols are sliced off after the call.
    Bp = _round_up(B, 8)
    Hp = _round_up(H, 128)
    Ep = _round_up(E, 128)
    DHp = _round_up(DH, 128)

    chunk = min(T, target_chunk)
    n_chunks = pl.cdiv(T, chunk)
    T_pad = n_chunks * chunk

    # Fold biases: b_ih + [b_hr, b_hz, 0] goes into the precomputed input
    # projection; b_hn stays separate (needed inside r * (W_hn h + b_hn)).
    def fold_bias(b):                      # b: (2, 3H) = [b_ih, b_hh]
        b_ih, b_hh = b[0], b[1]
        bpre = b_ih + jnp.concatenate([b_hh[:2 * H], jnp.zeros((H,), f32)])
        return bpre[None, :], b_hh[2 * H:][None, :]

    bpre_f, bhn_f = fold_bias(params["b_f"])
    bpre_b, bhn_b = fold_bias(params["b_b"])

    def pad_gates(w, rows_p):              # (rows, 3H) -> (rows_p, 3Hp), per-gate pad
        rows = w.shape[0]
        w3 = w.reshape(rows, 3, H)
        w3 = jnp.pad(w3, ((0, rows_p - rows), (0, 0), (0, Hp - H)))
        return w3.reshape(rows_p, 3 * Hp)

    def pad2(w, rows_p, cols_p):
        return jnp.pad(w, ((0, rows_p - w.shape[0]), (0, cols_p - w.shape[1])))

    wih_f = pad_gates(params["wih_f"], Ep).astype(mm)
    wih_b = pad_gates(params["wih_b"], Ep).astype(mm)
    whh_f = pad_gates(params["whh_f"], Hp).astype(mm)
    whh_b = pad_gates(params["whh_b"], Hp).astype(mm)
    bpre_f = pad_gates(bpre_f, 1)
    bpre_b = pad_gates(bpre_b, 1)
    bhn_f = pad2(bhn_f, 1, Hp)
    bhn_b = pad2(bhn_b, 1, Hp)
    wfc_f = pad2(params["wfc"][:H], Hp, DHp).astype(mm)
    wfc_b = pad2(params["wfc"][H:], Hp, DHp).astype(mm)
    bfc = pad2(params["bfc"], 1, DHp)

    # Pad + flatten src to a 2D lane/sublane-aligned slab (no in-kernel reshape).
    xp = jnp.pad(src, ((0, T_pad - T), (0, Bp - B), (0, Ep - E)))
    xp = xp.reshape(T_pad * Bp, Ep).astype(mm)

    # Explicit VMEM budget sized to the resident set, capped below physical VMEM.
    wbytes = mm.itemsize
    vmem_need = (
        2 * 2 * chunk * Bp * Ep * wbytes          # x fwd/bwd blocks (double-buffered)
        + 2 * 2 * chunk * Bp * Hp * 4             # out fwd/bwd blocks (double-buffered)
        + 2 * Bp * DHp * 4                        # hidden block
        + (2 * Ep + 2 * Hp) * 3 * Hp * wbytes     # W_ih / W_hh (resident)
        + 2 * Hp * DHp * wbytes                   # fc weights (resident)
        + (2 * 3 * Hp + 2 * Hp + DHp) * 4         # biases (resident)
        + 2 * chunk * Bp * 3 * Hp * 4             # gi scratch
        + 2 * Bp * Hp * 4                         # carried hidden scratch
    )
    try:
        vmem_cap = pltpu.get_tpu_info().vmem_capacity_bytes
    except Exception:
        vmem_cap = 64 << 20                       # v7x per-core floor
    vmem_limit = int(min(max(2 * vmem_need + (1 << 20), 4 << 20),
                         (vmem_cap * 3) // 4))

    vmem_full = pl.BlockSpec(memory_space=pltpu.MemorySpace.VMEM)
    x_blk = chunk * Bp
    in_specs = [
        pl.BlockSpec((x_blk, Ep), lambda g: (g, 0)),                    # x, fwd order
        pl.BlockSpec((x_blk, Ep), lambda g: (n_chunks - 1 - g, 0)),     # x, bwd order
    ] + [vmem_full] * 11
    out_specs = (
        pl.BlockSpec((x_blk, Hp), lambda g: (g, 0)),                    # fwd outputs
        pl.BlockSpec((x_blk, Hp), lambda g: (n_chunks - 1 - g, 0)),     # bwd outputs
        pl.BlockSpec((Bp, DHp), lambda g: (0, 0)),                      # decoder hidden
    )
    out_shape = (jax.ShapeDtypeStruct((T_pad * Bp, Hp), f32),
                 jax.ShapeDtypeStruct((T_pad * Bp, Hp), f32),
                 jax.ShapeDtypeStruct((Bp, DHp), f32))

    kernel = functools.partial(_encoder_kernel, chunk=chunk, seq_len=T, b_pad=Bp)

    fn = pl.pallas_call(
        kernel,
        grid=(n_chunks,),
        in_specs=in_specs,
        out_specs=out_specs,
        out_shape=out_shape,
        scratch_shapes=[
            pltpu.VMEM((x_blk, 3 * Hp), f32),     # precomputed gi, forward chunk
            pltpu.VMEM((x_blk, 3 * Hp), f32),     # precomputed gi, backward chunk
            pltpu.VMEM((Bp, Hp), f32),            # carried h_fwd
            pltpu.VMEM((Bp, Hp), f32),            # carried h_bwd
        ],
        compiler_params=pltpu.CompilerParams(
            dimension_semantics=("arbitrary",),   # sequential recurrence over chunks
            vmem_limit_bytes=vmem_limit),
    )
    out_f, out_b, hid = fn(xp, xp,
                           wih_f, wih_b, whh_f, whh_b,
                           bpre_f, bpre_b, bhn_f, bhn_b,
                           wfc_f, wfc_b, bfc)

    out_f = out_f.reshape(T_pad, Bp, Hp)[:T, :B, :H]
    out_b = out_b.reshape(T_pad, Bp, Hp)[:T, :B, :H]
    outputs = jnp.concatenate([out_f, out_b], axis=-1)   # cheap, fused by XLA
    hidden = hid[:B, :DH]
    return outputs, hidden


def encoder_reference(src, params):
    """Pure-JAX reference (mirrors the PyTorch Encoder forward in eval mode)."""
    T, B, E = src.shape
    H = params["whh_f"].shape[0]

    def gru(x_t, h, wih, whh, b):
        gi = x_t @ wih + b[0]
        gh = h @ whh + b[1]
        r = jax.nn.sigmoid(gi[:, :H] + gh[:, :H])
        z = jax.nn.sigmoid(gi[:, H:2 * H] + gh[:, H:2 * H])
        n = jnp.tanh(gi[:, 2 * H:] + r * gh[:, 2 * H:])
        return (1.0 - z) * n + z * h

    def scan_f(h, x_t):
        h2 = gru(x_t, h, params["wih_f"], params["whh_f"], params["b_f"])
        return h2, h2

    def scan_b(h, x_t):
        h2 = gru(x_t, h, params["wih_b"], params["whh_b"], params["b_b"])
        return h2, h2

    h0 = jnp.zeros((B, H), jnp.float32)
    hT_f, outs_f = lax.scan(scan_f, h0, src)
    hT_b, outs_b_rev = lax.scan(scan_b, h0, src[::-1])
    outs_b = outs_b_rev[::-1]
    outputs = jnp.concatenate([outs_f, outs_b], axis=-1)
    hidden = jnp.tanh(
        jnp.concatenate([hT_f, hT_b], axis=-1) @ params["wfc"] + params["bfc"][0])
    return outputs, hidden


def make_params(key, emb_dim, enc_hid_dim, dec_hid_dim):
    """Deterministic synthetic parameters (shapes per nn.GRU / nn.Linear)."""
    ks = jax.random.split(key, 10)
    s = 0.1
    H, E, DH = enc_hid_dim, emb_dim, dec_hid_dim
    # GRU weights stored pre-transposed: W_ih^T -> (E, 3H), W_hh^T -> (H, 3H)
    # biases stacked as (2, 3H) rows = [b_ih, b_hh]; gate order [r, z, n].
    return {
        "wih_f": s * jax.random.normal(ks[0], (E, 3 * H), jnp.float32),
        "whh_f": s * jax.random.normal(ks[1], (H, 3 * H), jnp.float32),
        "b_f":   s * jax.random.normal(ks[2], (2, 3 * H), jnp.float32),
        "wih_b": s * jax.random.normal(ks[3], (E, 3 * H), jnp.float32),
        "whh_b": s * jax.random.normal(ks[4], (H, 3 * H), jnp.float32),
        "b_b":   s * jax.random.normal(ks[5], (2, 3 * H), jnp.float32),
        # fc: Linear(2H -> DH), stored pre-transposed as (2H, DH), bias (1, DH)
        "wfc":   s * jax.random.normal(ks[6], (2 * H, DH), jnp.float32),
        "bfc":   s * jax.random.normal(ks[7], (1, DH), jnp.float32),
    }


if __name__ == "__main__":
    SRC_LEN, BATCH, EMB_DIM = 8, 2, 32
    ENC_HID, DEC_HID = 32, 32

    key = jax.random.PRNGKey(0)
    k_src, k_par = jax.random.split(key)
    src = jax.random.normal(k_src, (SRC_LEN, BATCH, EMB_DIM), jnp.float32)
    params = make_params(k_par, EMB_DIM, ENC_HID, DEC_HID)

    ref_outputs, ref_hidden = jax.block_until_ready(encoder_reference(src, params))

    # 1) f32 matmuls, single chunk (whole sequence resident) — tight tolerance.
    outputs, hidden = jax.block_until_ready(
        encoder_forward(src, params, matmul_dtype=jnp.float32, target_chunk=8))
    np.testing.assert_allclose(np.asarray(outputs), np.asarray(ref_outputs),
                               rtol=1e-4, atol=1e-4)
    np.testing.assert_allclose(np.asarray(hidden), np.asarray(ref_hidden),
                               rtol=1e-4, atol=1e-4)

    # 2) f32 matmuls, chunked grid over T (exercises the multi-chunk grid and
    #    the padded-timestep masking used for long sequences / v7x VMEM limits).
    outputs_c, hidden_c = jax.block_until_ready(
        encoder_forward(src, params, matmul_dtype=jnp.float32, target_chunk=3))
    np.testing.assert_allclose(np.asarray(outputs_c), np.asarray(ref_outputs),
                               rtol=1e-4, atol=1e-4)
    np.testing.assert_allclose(np.asarray(hidden_c), np.asarray(ref_hidden),
                               rtol=1e-4, atol=1e-4)

    # 3) bf16 matmul inputs (f32 accumulate / f32 gate math) — the production
    #    perf configuration; validated at a correspondingly looser tolerance.
    outputs_bf, hidden_bf = jax.block_until_ready(
        encoder_forward(src, params, matmul_dtype=jnp.bfloat16, target_chunk=4))
    np.testing.assert_allclose(np.asarray(outputs_bf), np.asarray(ref_outputs),
                               rtol=5e-2, atol=5e-2)
    np.testing.assert_allclose(np.asarray(hidden_bf), np.asarray(ref_hidden),
                               rtol=5e-2, atol=5e-2)

    assert outputs.shape == (SRC_LEN, BATCH, 2 * ENC_HID)
    assert hidden.shape == (BATCH, DEC_HID)
    print("KERNEL_OK")
</pallas_src>

<mosaic_0001>
module attributes {stable_mosaic.version = 11 : i64} {
  func.func @_encoder_kernel(%arg0: i32, %arg1: memref<64x128xf32, #tpu.memory_space<vmem>>, %arg2: memref<64x128xf32, #tpu.memory_space<vmem>>, %arg3: memref<128x384xf32, #tpu.memory_space<vmem>>, %arg4: memref<128x384xf32, #tpu.memory_space<vmem>>, %arg5: memref<128x384xf32, #tpu.memory_space<vmem>>, %arg6: memref<128x384xf32, #tpu.memory_space<vmem>>, %arg7: memref<1x384xf32, #tpu.memory_space<vmem>>, %arg8: memref<1x384xf32, #tpu.memory_space<vmem>>, %arg9: memref<1x128xf32, #tpu.memory_space<vmem>>, %arg10: memref<1x128xf32, #tpu.memory_space<vmem>>, %arg11: memref<128x128xf32, #tpu.memory_space<vmem>>, %arg12: memref<128x128xf32, #tpu.memory_space<vmem>>, %arg13: memref<1x128xf32, #tpu.memory_space<vmem>>, %arg14: memref<64x128xf32, #tpu.memory_space<vmem>>, %arg15: memref<64x128xf32, #tpu.memory_space<vmem>>, %arg16: memref<8x128xf32, #tpu.memory_space<vmem>>, %arg17: memref<64x384xf32, #tpu.memory_space<vmem>>, %arg18: memref<64x384xf32, #tpu.memory_space<vmem>>, %arg19: memref<8x128xf32, #tpu.memory_space<vmem>>, %arg20: memref<8x128xf32, #tpu.memory_space<vmem>>) attributes {dimension_semantics = [#tpu.dimension_semantics<arbitrary>], iteration_bounds = array<i64: 1>, scalar_prefetch = 0 : i64, scratch_operands = 4 : i64, tpu.core_type = #tpu.core_type<tc>, window_params = [{transform_indices = @transform_0, window_bounds = array<i64: 64, 128>}, {transform_indices = @transform_1, window_bounds = array<i64: 64, 128>}, {pipeline_mode = #tpu.pipeline_mode<synchronous>, transform_indices = @transform_2, window_bounds = array<i64: 128, 384>}, {pipeline_mode = #tpu.pipeline_mode<synchronous>, transform_indices = @transform_3, window_bounds = array<i64: 128, 384>}, {pipeline_mode = #tpu.pipeline_mode<synchronous>, transform_indices = @transform_4, window_bounds = array<i64: 128, 384>}, {pipeline_mode = #tpu.pipeline_mode<synchronous>, transform_indices = @transform_5, window_bounds = array<i64: 128, 384>}, {pipeline_mode = #tpu.pipeline_mode<synchronous>, transform_indices = @transform_6, window_bounds = array<i64: 1, 384>}, {pipeline_mode = #tpu.pipeline_mode<synchronous>, transform_indices = @transform_7, window_bounds = array<i64: 1, 384>}, {pipeline_mode = #tpu.pipeline_mode<synchronous>, transform_indices = @transform_8, window_bounds = array<i64: 1, 128>}, {pipeline_mode = #tpu.pipeline_mode<synchronous>, transform_indices = @transform_9, window_bounds = array<i64: 1, 128>}, {pipeline_mode = #tpu.pipeline_mode<synchronous>, transform_indices = @transform_10, window_bounds = array<i64: 128, 128>}, {pipeline_mode = #tpu.pipeline_mode<synchronous>, transform_indices = @transform_11, window_bounds = array<i64: 128, 128>}, {pipeline_mode = #tpu.pipeline_mode<synchronous>, transform_indices = @transform_12, window_bounds = array<i64: 1, 128>}, {transform_indices = @transform_13, window_bounds = array<i64: 64, 128>}, {transform_indices = @transform_14, window_bounds = array<i64: 64, 128>}, {pipeline_mode = #tpu.pipeline_mode<synchronous>, transform_indices = @transform_15, window_bounds = array<i64: 8, 128>}]} {
    %c0_i32 = arith.constant 0 : i32
    %0 = arith.cmpi eq, %arg0, %c0_i32 : i32
    %1 = arith.extui %0 : i1 to i32
    %c0_i32_0 = arith.constant 0 : i32
    %2 = arith.cmpi ne, %1, %c0_i32_0 : i32
    scf.if %2 {
      %cst_175 = arith.constant 0.000000e+00 : f32
      %635 = vector.broadcast %cst_175 : f32 to vector<8x128xf32>
      %c0_176 = arith.constant 0 : index
      %c0_177 = arith.constant 0 : index
      %636 = vector.load %arg19[%c0_176, %c0_177] : memref<8x128xf32, #tpu.memory_space<vmem>>, vector<8x128xf32>
      tpu.vector_store %arg19[%c0_176, %c0_177], %635 {strides = array<i32>} : memref<8x128xf32, #tpu.memory_space<vmem>>, vector<8x128xf32>,
      %cst_178 = arith.constant 0.000000e+00 : f32
      %637 = vector.broadcast %cst_178 : f32 to vector<8x128xf32>
      %c0_179 = arith.constant 0 : index
      %c0_180 = arith.constant 0 : index
      %638 = vector.load %arg20[%c0_179, %c0_180] : memref<8x128xf32, #tpu.memory_space<vmem>>, vector<8x128xf32>
      tpu.vector_store %arg20[%c0_179, %c0_180], %637 {strides = array<i32>} : memref<8x128xf32, #tpu.memory_space<vmem>>, vector<8x128xf32>,
    } else {
    }
    %c0 = arith.constant 0 : index
    %c0_1 = arith.constant 0 : index
    %3 = vector.load %arg1[%c0, %c0_1] : memref<64x128xf32, #tpu.memory_space<vmem>>, vector<64x128xf32>
    %c0_2 = arith.constant 0 : index
    %c0_3 = arith.constant 0 : index
    %4 = vector.load %arg3[%c0_2, %c0_3] : memref<128x384xf32, #tpu.memory_space<vmem>>, vector<128x384xf32>
    %cst = arith.constant dense<0.000000e+00> : vector<64x384xf32>
    %5 = tpu.matmul %3, %4, %cst {dimension_numbers = #tpu.dot_dimension_numbers<[1], [0], [0], [1], [0, 0, 1, 1], [], []>} : vector<64x128xf32>, vector<128x384xf32>, vector<64x384xf32> -> vector<64x384xf32>
    %c0_4 = arith.constant 0 : index
    %c0_5 = arith.constant 0 : index
    %6 = vector.load %arg7[%c0_4, %c0_5] : memref<1x384xf32, #tpu.memory_space<vmem>>, vector<1x384xf32>
    %7 = vector.broadcast %6 : vector<1x384xf32> to vector<64x384xf32>
    %8 = arith.addf %5, %7 : vector<64x384xf32>
    %c0_6 = arith.constant 0 : index
    %c0_7 = arith.constant 0 : index
    %9 = vector.load %arg17[%c0_6, %c0_7] : memref<64x384xf32, #tpu.memory_space<vmem>>, vector<64x384xf32>
    tpu.vector_store %arg17[%c0_6, %c0_7], %8 {strides = array<i32>} : memref<64x384xf32, #tpu.memory_space<vmem>>, vector<64x384xf32>,
    %c0_8 = arith.constant 0 : index
    %c0_9 = arith.constant 0 : index
    %10 = vector.load %arg2[%c0_8, %c0_9] : memref<64x128xf32, #tpu.memory_space<vmem>>, vector<64x128xf32>
    %c0_10 = arith.constant 0 : index
    %c0_11 = arith.constant 0 : index
    %11 = vector.load %arg4[%c0_10, %c0_11] : memref<128x384xf32, #tpu.memory_space<vmem>>, vector<128x384xf32>
    %cst_12 = arith.constant dense<0.000000e+00> : vector<64x384xf32>
    %12 = tpu.matmul %10, %11, %cst_12 {dimension_numbers = #tpu.dot_dimension_numbers<[1], [0], [0], [1], [0, 0, 1, 1], [], []>} : vector<64x128xf32>, vector<128x384xf32>, vector<64x384xf32> -> vector<64x384xf32>
    %c0_13 = arith.constant 0 : index
    %c0_14 = arith.constant 0 : index
    %13 = vector.load %arg8[%c0_13, %c0_14] : memref<1x384xf32, #tpu.memory_space<vmem>>, vector<1x384xf32>
    %14 = vector.broadcast %13 : vector<1x384xf32> to vector<64x384xf32>
    %15 = arith.addf %12, %14 : vector<64x384xf32>
    %c0_15 = arith.constant 0 : index
    %c0_16 = arith.constant 0 : index
    %16 = vector.load %arg18[%c0_15, %c0_16] : memref<64x384xf32, #tpu.memory_space<vmem>>, vector<64x384xf32>
    tpu.vector_store %arg18[%c0_15, %c0_16], %15 {strides = array<i32>} : memref<64x384xf32, #tpu.memory_space<vmem>>, vector<64x384xf32>,
    %c0_17 = arith.constant 0 : index
    %c0_18 = arith.constant 0 : index
    %17 = vector.load %arg5[%c0_17, %c0_18] : memref<128x384xf32, #tpu.memory_space<vmem>>, vector<128x384xf32>
    %c0_19 = arith.constant 0 : index
    %c0_20 = arith.constant 0 : index
    %18 = vector.load %arg6[%c0_19, %c0_20] : memref<128x384xf32, #tpu.memory_space<vmem>>, vector<128x384xf32>
    %c0_21 = arith.constant 0 : index
    %c0_22 = arith.constant 0 : index
    %19 = vector.load %arg9[%c0_21, %c0_22] : memref<1x128xf32, #tpu.memory_space<vmem>>, vector<1x128xf32>
    %20 = vector.shape_cast %19 : vector<1x128xf32> to vector<1x128xf32>
    %21 = vector.broadcast %20 : vector<1x128xf32> to vector<8x128xf32>
    %c0_23 = arith.constant 0 : index
    %c0_24 = arith.constant 0 : index
    %22 = vector.load %arg10[%c0_23, %c0_24] : memref<1x128xf32, #tpu.memory_space<vmem>>, vector<1x128xf32>
    %23 = vector.shape_cast %22 : vector<1x128xf32> to vector<1x128xf32>
    %24 = vector.broadcast %23 : vector<1x128xf32> to vector<8x128xf32>
    %c8_i32 = arith.constant 8 : i32
    %25 = arith.muli %arg0, %c8_i32 : i32
    %c0_i32_25 = arith.constant 0 : i32
    %26 = arith.subi %c0_i32_25, %arg0 : i32
    %c8_i32_26 = arith.constant 8 : i32
    %27 = arith.muli %26, %c8_i32_26 : i32
    %c0_27 = arith.constant 0 : index
    %c0_28 = arith.constant 0 : index
    %28 = vector.load %arg19[%c0_27, %c0_28] : memref<8x128xf32, #tpu.memory_space<vmem>>, vector<8x128xf32>
    %c0_29 = arith.constant 0 : index
    %c0_30 = arith.constant 0 : index
    %29 = vector.load %arg20[%c0_29, %c0_30] : memref<8x128xf32, #tpu.memory_space<vmem>>, vector<8x128xf32>
    %c0_i32_31 = arith.constant 0 : i32
    %c7_i32 = arith.constant 7 : i32
    %30 = arith.subi %c7_i32, %c0_i32_31 : i32
    %c8_i32_32 = arith.constant 8 : i32
    %31 = arith.muli %c0_i32_31, %c8_i32_32 : i32
    %32 = tpu.assume_multiple %31, 8 : i32
    %c8_i32_33 = arith.constant 8 : i32
    %33 = arith.muli %30, %c8_i32_33 : i32
    %34 = tpu.assume_multiple %33, 8 : i32
    %cst_34 = arith.constant dense<0.000000e+00> : vector<8x384xf32>
    %35 = tpu.matmul %28, %17, %cst_34 {dimension_numbers = #tpu.dot_dimension_numbers<[1], [0], [0], [1], [0, 0, 1, 1], [], []>} : vector<8x128xf32>, vector<128x384xf32>, vector<8x384xf32> -> vector<8x384xf32>
    %cst_35 = arith.constant dense<0.000000e+00> : vector<8x384xf32>
    %36 = tpu.matmul %29, %18, %cst_35 {dimension_numbers = #tpu.dot_dimension_numbers<[1], [0], [0], [1], [0, 0, 1, 1], [], []>} : vector<8x128xf32>, vector<128x384xf32>, vector<8x384xf32> -> vector<8x384xf32>
    %37 = arith.index_cast %32 : i32 to index
    %c0_36 = arith.constant 0 : index
    %38 = vector.load %arg17[%37, %c0_36] : memref<64x384xf32, #tpu.memory_space<vmem>>, vector<8x384xf32>
    %39 = vector.extract_strided_slice %38 {offsets = [0, 0], sizes = [8, 128], strides = [1, 1]} : vector<8x384xf32> to vector<8x128xf32>
    %40 = vector.extract_strided_slice %35 {offsets = [0, 0], sizes = [8, 128], strides = [1, 1]} : vector<8x384xf32> to vector<8x128xf32>
    %41 = arith.addf %39, %40 : vector<8x128xf32>
    %42 = arith.negf %41 : vector<8x128xf32>
    %43 = math.exp %42 : vector<8x128xf32>
    %cst_37 = arith.constant 1.000000e+00 : f32
    %44 = vector.broadcast %cst_37 : f32 to vector<8x128xf32>
    %45 = arith.addf %44, %43 : vector<8x128xf32>
    %46 = arith.divf %44, %45 : vector<8x128xf32>
    %47 = vector.extract_strided_slice %38 {offsets = [0, 128], sizes = [8, 128], strides = [1, 1]} : vector<8x384xf32> to vector<8x128xf32>
    %48 = vector.extract_strided_slice %35 {offsets = [0, 128], sizes = [8, 128], strides = [1, 1]} : vector<8x384xf32> to vector<8x128xf32>
    %49 = arith.addf %47, %48 : vector<8x128xf32>
    %50 = arith.negf %49 : vector<8x128xf32>
    %51 = math.exp %50 : vector<8x128xf32>
    %cst_38 = arith.constant 1.000000e+00 : f32
    %52 = vector.broadcast %cst_38 : f32 to vector<8x128xf32>
    %53 = arith.addf %52, %51 : vector<8x128xf32>
    %54 = arith.divf %52, %53 : vector<8x128xf32>
    %55 = vector.extract_strided_slice %38 {offsets = [0, 256], sizes = [8, 128], strides = [1, 1]} : vector<8x384xf32> to vector<8x128xf32>
    %56 = vector.extract_strided_slice %35 {offsets = [0, 256], sizes = [8, 128], strides = [1, 1]} : vector<8x384xf32> to vector<8x128xf32>
    %57 = arith.addf %56, %21 : vector<8x128xf32>
    %58 = arith.mulf %46, %57 : vector<8x128xf32>
    %59 = arith.addf %55, %58 : vector<8x128xf32>
    %60 = math.tanh %59 : vector<8x128xf32>
    %cst_39 = arith.constant 1.000000e+00 : f32
    %61 = vector.broadcast %cst_39 : f32 to vector<8x128xf32>
    %62 = arith.subf %61, %54 : vector<8x128xf32>
    %63 = arith.mulf %62, %60 : vector<8x128xf32>
    %64 = arith.mulf %54, %28 : vector<8x128xf32>
    %65 = arith.addf %63, %64 : vector<8x128xf32>
    %66 = arith.index_cast %34 : i32 to index
    %c0_40 = arith.constant 0 : index
    %67 = vector.load %arg18[%66, %c0_40] : memref<64x384xf32, #tpu.memory_space<vmem>>, vector<8x384xf32>
    %68 = vector.extract_strided_slice %67 {offsets = [0, 0], sizes = [8, 128], strides = [1, 1]} : vector<8x384xf32> to vector<8x128xf32>
    %69 = vector.extract_strided_slice %36 {offsets = [0, 0], sizes = [8, 128], strides = [1, 1]} : vector<8x384xf32> to vector<8x128xf32>
    %70 = arith.addf %68, %69 : vector<8x128xf32>
    %71 = arith.negf %70 : vector<8x128xf32>
    %72 = math.exp %71 : vector<8x128xf32>
    %cst_41 = arith.constant 1.000000e+00 : f32
    %73 = vector.broadcast %cst_41 : f32 to vector<8x128xf32>
    %74 = arith.addf %73, %72 : vector<8x128xf32>
    %75 = arith.divf %73, %74 : vector<8x128xf32>
    %76 = vector.extract_strided_slice %67 {offsets = [0, 128], sizes = [8, 128], strides = [1, 1]} : vector<8x384xf32> to vector<8x128xf32>
    %77 = vector.extract_strided_slice %36 {offsets = [0, 128], sizes = [8, 128], strides = [1, 1]} : vector<8x384xf32> to vector<8x128xf32>
    %78 = arith.addf %76, %77 : vector<8x128xf32>
    %79 = arith.negf %78 : vector<8x128xf32>
    %80 = math.exp %79 : vector<8x128xf32>
    %cst_42 = arith.constant 1.000000e+00 : f32
    %81 = vector.broadcast %cst_42 : f32 to vector<8x128xf32>
    %82 = arith.addf %81, %80 : vector<8x128xf32>
    %83 = arith.divf %81, %82 : vector<8x128xf32>
    %84 = vector.extract_strided_slice %67 {offsets = [0, 256], sizes = [8, 128], strides = [1, 1]} : vector<8x384xf32> to vector<8x128xf32>
    %85 = vector.extract_strided_slice %36 {offsets = [0, 256], sizes = [8, 128], strides = [1, 1]} : vector<8x384xf32> to vector<8x128xf32>
    %86 = arith.addf %85, %24 : vector<8x128xf32>
    %87 = arith.mulf %75, %86 : vector<8x128xf32>
    %88 = arith.addf %84, %87 : vector<8x128xf32>
    %89 = math.tanh %88 : vector<8x128xf32>
    %cst_43 = arith.constant 1.000000e+00 : f32
    %90 = vector.broadcast %cst_43 : f32 to vector<8x128xf32>
    %91 = arith.subf %90, %83 : vector<8x128xf32>
    %92 = arith.mulf %91, %89 : vector<8x128xf32>
    %93 = arith.mulf %83, %29 : vector<8x128xf32>
    %94 = arith.addf %92, %93 : vector<8x128xf32>
    %95 = arith.addi %25, %c0_i32_31 : i32
    %c8_i32_44 = arith.constant 8 : i32
    %96 = arith.cmpi slt, %95, %c8_i32_44 : i32
    %97 = arith.select %96, %65, %28 : vector<8x128xf32>
    %98 = arith.addi %27, %30 : i32
    %c8_i32_45 = arith.constant 8 : i32
    %99 = arith.cmpi slt, %98, %c8_i32_45 : i32
    %100 = arith.select %99, %94, %29 : vector<8x128xf32>
    %101 = arith.index_cast %32 : i32 to index
    %c0_46 = arith.constant 0 : index
    %102 = vector.load %arg14[%101, %c0_46] : memref<64x128xf32, #tpu.memory_space<vmem>>, vector<8x128xf32>
    tpu.vector_store %arg14[%101, %c0_46], %97 {strides = array<i32>} : memref<64x128xf32, #tpu.memory_space<vmem>>, vector<8x128xf32>,
    %103 = arith.index_cast %34 : i32 to index
    %c0_47 = arith.constant 0 : index
    %104 = vector.load %arg15[%103, %c0_47] : memref<64x128xf32, #tpu.memory_space<vmem>>, vector<8x128xf32>
    tpu.vector_store %arg15[%103, %c0_47], %100 {strides = array<i32>} : memref<64x128xf32, #tpu.memory_space<vmem>>, vector<8x128xf32>,
    %c1_i32 = arith.constant 1 : i32
    %c7_i32_48 = arith.constant 7 : i32
    %105 = arith.subi %c7_i32_48, %c1_i32 : i32
    %c8_i32_49 = arith.constant 8 : i32
    %106 = arith.muli %c1_i32, %c8_i32_49 : i32
    %107 = tpu.assume_multiple %106, 8 : i32
    %c8_i32_50 = arith.constant 8 : i32
    %108 = arith.muli %105, %c8_i32_50 : i32
    %109 = tpu.assume_multiple %108, 8 : i32
    %cst_51 = arith.constant dense<0.000000e+00> : vector<8x384xf32>
    %110 = tpu.matmul %97, %17, %cst_51 {dimension_numbers = #tpu.dot_dimension_numbers<[1], [0], [0], [1], [0, 0, 1, 1], [], []>} : vector<8x128xf32>, vector<128x384xf32>, vector<8x384xf32> -> vector<8x384xf32>
    %cst_52 = arith.constant dense<0.000000e+00> : vector<8x384xf32>
    %111 = tpu.matmul %100, %18, %cst_52 {dimension_numbers = #tpu.dot_dimension_numbers<[1], [0], [0], [1], [0, 0, 1, 1], [], []>} : vector<8x128xf32>, vector<128x384xf32>, vector<8x384xf32> -> vector<8x384xf32>
    %112 = arith.index_cast %107 : i32 to index
    %c0_53 = arith.constant 0 : index
    %113 = vector.load %arg17[%112, %c0_53] : memref<64x384xf32, #tpu.memory_space<vmem>>, vector<8x384xf32>
    %114 = vector.extract_strided_slice %113 {offsets = [0, 0], sizes = [8, 128], strides = [1, 1]} : vector<8x384xf32> to vector<8x128xf32>
    %115 = vector.extract_strided_slice %110 {offsets = [0, 0], sizes = [8, 128], strides = [1, 1]} : vector<8x384xf32> to vector<8x128xf32>
    %116 = arith.addf %114, %115 : vector<8x128xf32>
    %117 = arith.negf %116 : vector<8x128xf32>
    %118 = math.exp %117 : vector<8x128xf32>
    %cst_54 = arith.constant 1.000000e+00 : f32
    %119 = vector.broadcast %cst_54 : f32 to vector<8x128xf32>
    %120 = arith.addf %119, %118 : vector<8x128xf32>
    %121 = arith.divf %119, %120 : vector<8x128xf32>
    %122 = vector.extract_strided_slice %113 {offsets = [0, 128], sizes = [8, 128], strides = [1, 1]} : vector<8x384xf32> to vector<8x128xf32>
    %123 = vector.extract_strided_slice %110 {offsets = [0, 128], sizes = [8, 128], strides = [1, 1]} : vector<8x384xf32> to vector<8x128xf32>
    %124 = arith.addf %122, %123 : vector<8x128xf32>
    %125 = arith.negf %124 : vector<8x128xf32>
    %126 = math.exp %125 : vector<8x128xf32>
    %cst_55 = arith.constant 1.000000e+00 : f32
    %127 = vector.broadcast %cst_55 : f32 to vector<8x128xf32>
    %128 = arith.addf %127, %126 : vector<8x128xf32>
    %129 = arith.divf %127, %128 : vector<8x128xf32>
    %130 = vector.extract_strided_slice %113 {offsets = [0, 256], sizes = [8, 128], strides = [1, 1]} : vector<8x384xf32> to vector<8x128xf32>
    %131 = vector.extract_strided_slice %110 {offsets = [0, 256], sizes = [8, 128], strides = [1, 1]} : vector<8x384xf32> to vector<8x128xf32>
    %132 = arith.addf %131, %21 : vector<8x128xf32>
    %133 = arith.mulf %121, %132 : vector<8x128xf32>
    %134 = arith.addf %130, %133 : vector<8x128xf32>
    %135 = math.tanh %134 : vector<8x128xf32>
    %cst_56 = arith.constant 1.000000e+00 : f32
    %136 = vector.broadcast %cst_56 : f32 to vector<8x128xf32>
    %137 = arith.subf %136, %129 : vector<8x128xf32>
    %138 = arith.mulf %137, %135 : vector<8x128xf32>
    %139 = arith.mulf %129, %97 : vector<8x128xf32>
    %140 = arith.addf %138, %139 : vector<8x128xf32>
    %141 = arith.index_cast %109 : i32 to index
    %c0_57 = arith.constant 0 : index
    %142 = vector.load %arg18[%141, %c0_57] : memref<64x384xf32, #tpu.memory_space<vmem>>, vector<8x384xf32>
    %143 = vector.extract_strided_slice %142 {offsets = [0, 0], sizes = [8, 128], strides = [1, 1]} : vector<8x384xf32> to vector<8x128xf32>
    %144 = vector.extract_strided_slice %111 {offsets = [0, 0], sizes = [8, 128], strides = [1, 1]} : vector<8x384xf32> to vector<8x128xf32>
    %145 = arith.addf %143, %144 : vector<8x128xf32>
    %146 = arith.negf %145 : vector<8x128xf32>
    %147 = math.exp %146 : vector<8x128xf32>
    %cst_58 = arith.constant 1.000000e+00 : f32
    %148 = vector.broadcast %cst_58 : f32 to vector<8x128xf32>
    %149 = arith.addf %148, %147 : vector<8x128xf32>
    %150 = arith.divf %148, %149 : vector<8x128xf32>
    %151 = vector.extract_strided_slice %142 {offsets = [0, 128], sizes = [8, 128], strides = [1, 1]} : vector<8x384xf32> to vector<8x128xf32>
    %152 = vector.extract_strided_slice %111 {offsets = [0, 128], sizes = [8, 128], strides = [1, 1]} : vector<8x384xf32> to vector<8x128xf32>
    %153 = arith.addf %151, %152 : vector<8x128xf32>
    %154 = arith.negf %153 : vector<8x128xf32>
    %155 = math.exp %154 : vector<8x128xf32>
    %cst_59 = arith.constant 1.000000e+00 : f32
    %156 = vector.broadcast %cst_59 : f32 to vector<8x128xf32>
    %157 = arith.addf %156, %155 : vector<8x128xf32>
    %158 = arith.divf %156, %157 : vector<8x128xf32>
    %159 = vector.extract_strided_slice %142 {offsets = [0, 256], sizes = [8, 128], strides = [1, 1]} : vector<8x384xf32> to vector<8x128xf32>
    %160 = vector.extract_strided_slice %111 {offsets = [0, 256], sizes = [8, 128], strides = [1, 1]} : vector<8x384xf32> to vector<8x128xf32>
    %161 = arith.addf %160, %24 : vector<8x128xf32>
    %162 = arith.mulf %150, %161 : vector<8x128xf32>
    %163 = arith.addf %159, %162 : vector<8x128xf32>
    %164 = math.tanh %163 : vector<8x128xf32>
    %cst_60 = arith.constant 1.000000e+00 : f32
    %165 = vector.broadcast %cst_60 : f32 to vector<8x128xf32>
    %166 = arith.subf %165, %158 : vector<8x128xf32>
    %167 = arith.mulf %166, %164 : vector<8x128xf32>
    %168 = arith.mulf %158, %100 : vector<8x128xf32>
    %169 = arith.addf %167, %168 : vector<8x128xf32>
    %170 = arith.addi %25, %c1_i32 : i32
    %c8_i32_61 = arith.constant 8 : i32
    %171 = arith.cmpi slt, %170, %c8_i32_61 : i32
    %172 = arith.select %171, %140, %97 : vector<8x128xf32>
    %173 = arith.addi %27, %105 : i32
    %c8_i32_62 = arith.constant 8 : i32
    %174 = arith.cmpi slt, %173, %c8_i32_62 : i32
    %175 = arith.select %174, %169, %100 : vector<8x128xf32>
    %176 = arith.index_cast %107 : i32 to index
    %c0_63 = arith.constant 0 : index
    %177 = vector.load %arg14[%176, %c0_63] : memref<64x128xf32, #tpu.memory_space<vmem>>, vector<8x128xf32>
    tpu.vector_store %arg14[%176, %c0_63], %172 {strides = array<i32>} : memref<64x128xf32, #tpu.memory_space<vmem>>, vector<8x128xf32>,
    %178 = arith.index_cast %109 : i32 to index
    %c0_64 = arith.constant 0 : index
    %179 = vector.load %arg15[%178, %c0_64] : memref<64x128xf32, #tpu.memory_space<vmem>>, vector<8x128xf32>
    tpu.vector_store %arg15[%178, %c0_64], %175 {strides = array<i32>} : memref<64x128xf32, #tpu.memory_space<vmem>>, vector<8x128xf32>,
    %c2_i32 = arith.constant 2 : i32
    %c7_i32_65 = arith.constant 7 : i32
    %180 = arith.subi %c7_i32_65, %c2_i32 : i32
    %c8_i32_66 = arith.constant 8 : i32
    %181 = arith.muli %c2_i32, %c8_i32_66 : i32
    %182 = tpu.assume_multiple %181, 8 : i32
    %c8_i32_67 = arith.constant 8 : i32
    %183 = arith.muli %180, %c8_i32_67 : i32
    %184 = tpu.assume_multiple %183, 8 : i32
    %cst_68 = arith.constant dense<0.000000e+00> : vector<8x384xf32>
    %185 = tpu.matmul %172, %17, %cst_68 {dimension_numbers = #tpu.dot_dimension_numbers<[1], [0], [0], [1], [0, 0, 1, 1], [], []>} : vector<8x128xf32>, vector<128x384xf32>, vector<8x384xf32> -> vector<8x384xf32>
    %cst_69 = arith.constant dense<0.000000e+00> : vector<8x384xf32>
    %186 = tpu.matmul %175, %18, %cst_69 {dimension_numbers = #tpu.dot_dimension_numbers<[1], [0], [0], [1], [0, 0, 1, 1], [], []>} : vector<8x128xf32>, vector<128x384xf32>, vector<8x384xf32> -> vector<8x384xf32>
    %187 = arith.index_cast %182 : i32 to index
    %c0_70 = arith.constant 0 : index
    %188 = vector.load %arg17[%187, %c0_70] : memref<64x384xf32, #tpu.memory_space<vmem>>, vector<8x384xf32>
    %189 = vector.extract_strided_slice %188 {offsets = [0, 0], sizes = [8, 128], strides = [1, 1]} : vector<8x384xf32> to vector<8x128xf32>
    %190 = vector.extract_strided_slice %185 {offsets = [0, 0], sizes = [8, 128], strides = [1, 1]} : vector<8x384xf32> to vector<8x128xf32>
    %191 = arith.addf %189, %190 : vector<8x128xf32>
    %192 = arith.negf %191 : vector<8x128xf32>
    %193 = math.exp %192 : vector<8x128xf32>
    %cst_71 = arith.constant 1.000000e+00 : f32
    %194 = vector.broadcast %cst_71 : f32 to vector<8x128xf32>
    %195 = arith.addf %194, %193 : vector<8x128xf32>
    %196 = arith.divf %194, %195 : vector<8x128xf32>
    %197 = vector.extract_strided_slice %188 {offsets = [0, 128], sizes = [8, 128], strides = [1, 1]} : vector<8x384xf32> to vector<8x128xf32>
    %198 = vector.extract_strided_slice %185 {offsets = [0, 128], sizes = [8, 128], strides = [1, 1]} : vector<8x384xf32> to vector<8x128xf32>
    %199 = arith.addf %197, %198 : vector<8x128xf32>
    %200 = arith.negf %199 : vector<8x128xf32>
    %201 = math.exp %200 : vector<8x128xf32>
    %cst_72 = arith.constant 1.000000e+00 : f32
    %202 = vector.broadcast %cst_72 : f32 to vector<8x128xf32>
    %203 = arith.addf %202, %201 : vector<8x128xf32>
    %204 = arith.divf %202, %203 : vector<8x128xf32>
    %205 = vector.extract_strided_slice %188 {offsets = [0, 256], sizes = [8, 128], strides = [1, 1]} : vector<8x384xf32> to vector<8x128xf32>
    %206 = vector.extract_strided_slice %185 {offsets = [0, 256], sizes = [8, 128], strides = [1, 1]} : vector<8x384xf32> to vector<8x128xf32>
    %207 = arith.addf %206, %21 : vector<8x128xf32>
    %208 = arith.mulf %196, %207 : vector<8x128xf32>
    %209 = arith.addf %205, %208 : vector<8x128xf32>
    %210 = math.tanh %209 : vector<8x128xf32>
    %cst_73 = arith.constant 1.000000e+00 : f32
    %211 = vector.broadcast %cst_73 : f32 to vector<8x128xf32>
    %212 = arith.subf %211, %204 : vector<8x128xf32>
    %213 = arith.mulf %212, %210 : vector<8x128xf32>
    %214 = arith.mulf %204, %172 : vector<8x128xf32>
    %215 = arith.addf %213, %214 : vector<8x128xf32>
    %216 = arith.index_cast %184 : i32 to index
    %c0_74 = arith.constant 0 : index
    %217 = vector.load %arg18[%216, %c0_74] : memref<64x384xf32, #tpu.memory_space<vmem>>, vector<8x384xf32>
    %218 = vector.extract_strided_slice %217 {offsets = [0, 0], sizes = [8, 128], strides = [1, 1]} : vector<8x384xf32> to vector<8x128xf32>
    %219 = vector.extract_strided_slice %186 {offsets = [0, 0], sizes = [8, 128], strides = [1, 1]} : vector<8x384xf32> to vector<8x128xf32>
    %220 = arith.addf %218, %219 : vector<8x128xf32>
    %221 = arith.negf %220 : vector<8x128xf32>
    %222 = math.exp %221 : vector<8x128xf32>
    %cst_75 = arith.constant 1.000000e+00 : f32
    %223 = vector.broadcast %cst_75 : f32 to vector<8x128xf32>
    %224 = arith.addf %223, %222 : vector<8x128xf32>
    %225 = arith.divf %223, %224 : vector<8x128xf32>
    %226 = vector.extract_strided_slice %217 {offsets = [0, 128], sizes = [8, 128], strides = [1, 1]} : vector<8x384xf32> to vector<8x128xf32>
    %227 = vector.extract_strided_slice %186 {offsets = [0, 128], sizes = [8, 128], strides = [1, 1]} : vector<8x384xf32> to vector<8x128xf32>
    %228 = arith.addf %226, %227 : vector<8x128xf32>
    %229 = arith.negf %228 : vector<8x128xf32>
    %230 = math.exp %229 : vector<8x128xf32>
    %cst_76 = arith.constant 1.000000e+00 : f32
    %231 = vector.broadcast %cst_76 : f32 to vector<8x128xf32>
    %232 = arith.addf %231, %230 : vector<8x128xf32>
    %233 = arith.divf %231, %232 : vector<8x128xf32>
    %234 = vector.extract_strided_slice %217 {offsets = [0, 256], sizes = [8, 128], strides = [1, 1]} : vector<8x384xf32> to vector<8x128xf32>
    %235 = vector.extract_strided_slice %186 {offsets = [0, 256], sizes = [8, 128], strides = [1, 1]} : vector<8x384xf32> to vector<8x128xf32>
    %236 = arith.addf %235, %24 : vector<8x128xf32>
    %237 = arith.mulf %225, %236 : vector<8x128xf32>
    %238 = arith.addf %234, %237 : vector<8x128xf32>
    %239 = math.tanh %238 : vector<8x128xf32>
    %cst_77 = arith.constant 1.000000e+00 : f32
    %240 = vector.broadcast %cst_77 : f32 to vector<8x128xf32>
    %241 = arith.subf %240, %233 : vector<8x128xf32>
    %242 = arith.mulf %241, %239 : vector<8x128xf32>
    %243 = arith.mulf %233, %175 : vector<8x128xf32>
    %244 = arith.addf %242, %243 : vector<8x128xf32>
    %245 = arith.addi %25, %c2_i32 : i32
    %c8_i32_78 = arith.constant 8 : i32
    %246 = arith.cmpi slt, %245, %c8_i32_78 : i32
    %247 = arith.select %246, %215, %172 : vector<8x128xf32>
    %248 = arith.addi %27, %180 : i32
    %c8_i32_79 = arith.constant 8 : i32
    %249 = arith.cmpi slt, %248, %c8_i32_79 : i32
    %250 = arith.select %249, %244, %175 : vector<8x128xf32>
    %251 = arith.index_cast %182 : i32 to index
    %c0_80 = arith.constant 0 : index
    %252 = vector.load %arg14[%251, %c0_80] : memref<64x128xf32, #tpu.memory_space<vmem>>, vector<8x128xf32>
    tpu.vector_store %arg14[%251, %c0_80], %247 {strides = array<i32>} : memref<64x128xf32, #tpu.memory_space<vmem>>, vector<8x128xf32>,
    %253 = arith.index_cast %184 : i32 to index
    %c0_81 = arith.constant 0 : index
    %254 = vector.load %arg15[%253, %c0_81] : memref<64x128xf32, #tpu.memory_space<vmem>>, vector<8x128xf32>
    tpu.vector_store %arg15[%253, %c0_81], %250 {strides = array<i32>} : memref<64x128xf32, #tpu.memory_space<vmem>>, vector<8x128xf32>,
    %c3_i32 = arith.constant 3 : i32
    %c7_i32_82 = arith.constant 7 : i32
    %255 = arith.subi %c7_i32_82, %c3_i32 : i32
    %c8_i32_83 = arith.constant 8 : i32
    %256 = arith.muli %c3_i32, %c8_i32_83 : i32
    %257 = tpu.assume_multiple %256, 8 : i32
    %c8_i32_84 = arith.constant 8 : i32
    %258 = arith.muli %255, %c8_i32_84 : i32
    %259 = tpu.assume_multiple %258, 8 : i32
    %cst_85 = arith.constant dense<0.000000e+00> : vector<8x384xf32>
    %260 = tpu.matmul %247, %17, %cst_85 {dimension_numbers = #tpu.dot_dimension_numbers<[1], [0], [0], [1], [0, 0, 1, 1], [], []>} : vector<8x128xf32>, vector<128x384xf32>, vector<8x384xf32> -> vector<8x384xf32>
    %cst_86 = arith.constant dense<0.000000e+00> : vector<8x384xf32>
    %261 = tpu.matmul %250, %18, %cst_86 {dimension_numbers = #tpu.dot_dimension_numbers<[1], [0], [0], [1], [0, 0, 1, 1], [], []>} : vector<8x128xf32>, vector<128x384xf32>, vector<8x384xf32> -> vector<8x384xf32>
    %262 = arith.index_cast %257 : i32 to index
    %c0_87 = arith.constant 0 : index
    %263 = vector.load %arg17[%262, %c0_87] : memref<64x384xf32, #tpu.memory_space<vmem>>, vector<8x384xf32>
    %264 = vector.extract_strided_slice %263 {offsets = [0, 0], sizes = [8, 128], strides = [1, 1]} : vector<8x384xf32> to vector<8x128xf32>
    %265 = vector.extract_strided_slice %260 {offsets = [0, 0], sizes = [8, 128], strides = [1, 1]} : vector<8x384xf32> to vector<8x128xf32>
    %266 = arith.addf %264, %265 : vector<8x128xf32>
    %267 = arith.negf %266 : vector<8x128xf32>
    %268 = math.exp %267 : vector<8x128xf32>
    %cst_88 = arith.constant 1.000000e+00 : f32
    %269 = vector.broadcast %cst_88 : f32 to vector<8x128xf32>
    %270 = arith.addf %269, %268 : vector<8x128xf32>
    %271 = arith.divf %269, %270 : vector<8x128xf32>
    %272 = vector.extract_strided_slice %263 {offsets = [0, 128], sizes = [8, 128], strides = [1, 1]} : vector<8x384xf32> to vector<8x128xf32>
    %273 = vector.extract_strided_slice %260 {offsets = [0, 128], sizes = [8, 128], strides = [1, 1]} : vector<8x384xf32> to vector<8x128xf32>
    %274 = arith.addf %272, %273 : vector<8x128xf32>
    %275 = arith.negf %274 : vector<8x128xf32>
    %276 = math.exp %275 : vector<8x128xf32>
    %cst_89 = arith.constant 1.000000e+00 : f32
    %277 = vector.broadcast %cst_89 : f32 to vector<8x128xf32>
    %278 = arith.addf %277, %276 : vector<8x128xf32>
    %279 = arith.divf %277, %278 : vector<8x128xf32>
    %280 = vector.extract_strided_slice %263 {offsets = [0, 256], sizes = [8, 128], strides = [1, 1]} : vector<8x384xf32> to vector<8x128xf32>
    %281 = vector.extract_strided_slice %260 {offsets = [0, 256], sizes = [8, 128], strides = [1, 1]} : vector<8x384xf32> to vector<8x128xf32>
    %282 = arith.addf %281, %21 : vector<8x128xf32>
    %283 = arith.mulf %271, %282 : vector<8x128xf32>
    %284 = arith.addf %280, %283 : vector<8x128xf32>
    %285 = math.tanh %284 : vector<8x128xf32>
    %cst_90 = arith.constant 1.000000e+00 : f32
    %286 = vector.broadcast %cst_90 : f32 to vector<8x128xf32>
    %287 = arith.subf %286, %279 : vector<8x128xf32>
    %288 = arith.mulf %287, %285 : vector<8x128xf32>
    %289 = arith.mulf %279, %247 : vector<8x128xf32>
    %290 = arith.addf %288, %289 : vector<8x128xf32>
    %291 = arith.index_cast %259 : i32 to index
    %c0_91 = arith.constant 0 : index
    %292 = vector.load %arg18[%291, %c0_91] : memref<64x384xf32, #tpu.memory_space<vmem>>, vector<8x384xf32>
    %293 = vector.extract_strided_slice %292 {offsets = [0, 0], sizes = [8, 128], strides = [1, 1]} : vector<8x384xf32> to vector<8x128xf32>
    %294 = vector.extract_strided_slice %261 {offsets = [0, 0], sizes = [8, 128], strides = [1, 1]} : vector<8x384xf32> to vector<8x128xf32>
    %295 = arith.addf %293, %294 : vector<8x128xf32>
    %296 = arith.negf %295 : vector<8x128xf32>
    %297 = math.exp %296 : vector<8x128xf32>
    %cst_92 = arith.constant 1.000000e+00 : f32
    %298 = vector.broadcast %cst_92 : f32 to vector<8x128xf32>
    %299 = arith.addf %298, %297 : vector<8x128xf32>
    %300 = arith.divf %298, %299 : vector<8x128xf32>
    %301 = vector.extract_strided_slice %292 {offsets = [0, 128], sizes = [8, 128], strides = [1, 1]} : vector<8x384xf32> to vector<8x128xf32>
    %302 = vector.extract_strided_slice %261 {offsets = [0, 128], sizes = [8, 128], strides = [1, 1]} : vector<8x384xf32> to vector<8x128xf32>
    %303 = arith.addf %301, %302 : vector<8x128xf32>
    %304 = arith.negf %303 : vector<8x128xf32>
    %305 = math.exp %304 : vector<8x128xf32>
    %cst_93 = arith.constant 1.000000e+00 : f32
    %306 = vector.broadcast %cst_93 : f32 to vector<8x128xf32>
    %307 = arith.addf %306, %305 : vector<8x128xf32>
    %308 = arith.divf %306, %307 : vector<8x128xf32>
    %309 = vector.extract_strided_slice %292 {offsets = [0, 256], sizes = [8, 128], strides = [1, 1]} : vector<8x384xf32> to vector<8x128xf32>
    %310 = vector.extract_strided_slice %261 {offsets = [0, 256], sizes = [8, 128], strides = [1, 1]} : vector<8x384xf32> to vector<8x128xf32>
    %311 = arith.addf %310, %24 : vector<8x128xf32>
    %312 = arith.mulf %300, %311 : vector<8x128xf32>
    %313 = arith.addf %309, %312 : vector<8x128xf32>
    %314 = math.tanh %313 : vector<8x128xf32>
    %cst_94 = arith.constant 1.000000e+00 : f32
    %315 = vector.broadcast %cst_94 : f32 to vector<8x128xf32>
    %316 = arith.subf %315, %308 : vector<8x128xf32>
    %317 = arith.mulf %316, %314 : vector<8x128xf32>
    %318 = arith.mulf %308, %250 : vector<8x128xf32>
    %319 = arith.addf %317, %318 : vector<8x128xf32>
    %320 = arith.addi %25, %c3_i32 : i32
    %c8_i32_95 = arith.constant 8 : i32
    %321 = arith.cmpi slt, %320, %c8_i32_95 : i32
    %322 = arith.select %321, %290, %247 : vector<8x128xf32>
    %323 = arith.addi %27, %255 : i32
    %c8_i32_96 = arith.constant 8 : i32
    %324 = arith.cmpi slt, %323, %c8_i32_96 : i32
    %325 = arith.select %324, %319, %250 : vector<8x128xf32>
    %326 = arith.index_cast %257 : i32 to index
    %c0_97 = arith.constant 0 : index
    %327 = vector.load %arg14[%326, %c0_97] : memref<64x128xf32, #tpu.memory_space<vmem>>, vector<8x128xf32>
    tpu.vector_store %arg14[%326, %c0_97], %322 {strides = array<i32>} : memref<64x128xf32, #tpu.memory_space<vmem>>, vector<8x128xf32>,
    %328 = arith.index_cast %259 : i32 to index
    %c0_98 = arith.constant 0 : index
    %329 = vector.load %arg15[%328, %c0_98] : memref<64x128xf32, #tpu.memory_space<vmem>>, vector<8x128xf32>
    tpu.vector_store %arg15[%328, %c0_98], %325 {strides = array<i32>} : memref<64x128xf32, #tpu.memory_space<vmem>>, vector<8x128xf32>,
    %c4_i32 = arith.constant 4 : i32
    %c7_i32_99 = arith.constant 7 : i32
    %330 = arith.subi %c7_i32_99, %c4_i32 : i32
    %c8_i32_100 = arith.constant 8 : i32
    %331 = arith.muli %c4_i32, %c8_i32_100 : i32
    %332 = tpu.assume_multiple %331, 8 : i32
    %c8_i32_101 = arith.constant 8 : i32
    %333 = arith.muli %330, %c8_i32_101 : i32
    %334 = tpu.assume_multiple %333, 8 : i32
    %cst_102 = arith.constant dense<0.000000e+00> : vector<8x384xf32>
    %335 = tpu.matmul %322, %17, %cst_102 {dimension_numbers = #tpu.dot_dimension_numbers<[1], [0], [0], [1], [0, 0, 1, 1], [], []>} : vector<8x128xf32>, vector<128x384xf32>, vector<8x384xf32> -> vector<8x384xf32>
    %cst_103 = arith.constant dense<0.000000e+00> : vector<8x384xf32>
    %336 = tpu.matmul %325, %18, %cst_103 {dimension_numbers = #tpu.dot_dimension_numbers<[1], [0], [0], [1], [0, 0, 1, 1], [], []>} : vector<8x128xf32>, vector<128x384xf32>, vector<8x384xf32> -> vector<8x384xf32>
    %337 = arith.index_cast %332 : i32 to index
    %c0_104 = arith.constant 0 : index
    %338 = vector.load %arg17[%337, %c0_104] : memref<64x384xf32, #tpu.memory_space<vmem>>, vector<8x384xf32>
    %339 = vector.extract_strided_slice %338 {offsets = [0, 0], sizes = [8, 128], strides = [1, 1]} : vector<8x384xf32> to vector<8x128xf32>
    %340 = vector.extract_strided_slice %335 {offsets = [0, 0], sizes = [8, 128], strides = [1, 1]} : vector<8x384xf32> to vector<8x128xf32>
    %341 = arith.addf %339, %340 : vector<8x128xf32>
    %342 = arith.negf %341 : vector<8x128xf32>
    %343 = math.exp %342 : vector<8x128xf32>
    %cst_105 = arith.constant 1.000000e+00 : f32
    %344 = vector.broadcast %cst_105 : f32 to vector<8x128xf32>
    %345 = arith.addf %344, %343 : vector<8x128xf32>
    %346 = arith.divf %344, %345 : vector<8x128xf32>
    %347 = vector.extract_strided_slice %338 {offsets = [0, 128], sizes = [8, 128], strides = [1, 1]} : vector<8x384xf32> to vector<8x128xf32>
    %348 = vector.extract_strided_slice %335 {offsets = [0, 128], sizes = [8, 128], strides = [1, 1]} : vector<8x384xf32> to vector<8x128xf32>
    %349 = arith.addf %347, %348 : vector<8x128xf32>
    %350 = arith.negf %349 : vector<8x128xf32>
    %351 = math.exp %350 : vector<8x128xf32>
    %cst_106 = arith.constant 1.000000e+00 : f32
    %352 = vector.broadcast %cst_106 : f32 to vector<8x128xf32>
    %353 = arith.addf %352, %351 : vector<8x128xf32>
    %354 = arith.divf %352, %353 : vector<8x128xf32>
    %355 = vector.extract_strided_slice %338 {offsets = [0, 256], sizes = [8, 128], strides = [1, 1]} : vector<8x384xf32> to vector<8x128xf32>
    %356 = vector.extract_strided_slice %335 {offsets = [0, 256], sizes = [8, 128], strides = [1, 1]} : vector<8x384xf32> to vector<8x128xf32>
    %357 = arith.addf %356, %21 : vector<8x128xf32>
    %358 = arith.mulf %346, %357 : vector<8x128xf32>
    %359 = arith.addf %355, %358 : vector<8x128xf32>
    %360 = math.tanh %359 : vector<8x128xf32>
    %cst_107 = arith.constant 1.000000e+00 : f32
    %361 = vector.broadcast %cst_107 : f32 to vector<8x128xf32>
    %362 = arith.subf %361, %354 : vector<8x128xf32>
    %363 = arith.mulf %362, %360 : vector<8x128xf32>
    %364 = arith.mulf %354, %322 : vector<8x128xf32>
    %365 = arith.addf %363, %364 : vector<8x128xf32>
    %366 = arith.index_cast %334 : i32 to index
    %c0_108 = arith.constant 0 : index
    %367 = vector.load %arg18[%366, %c0_108] : memref<64x384xf32, #tpu.memory_space<vmem>>, vector<8x384xf32>
    %368 = vector.extract_strided_slice %367 {offsets = [0, 0], sizes = [8, 128], strides = [1, 1]} : vector<8x384xf32> to vector<8x128xf32>
    %369 = vector.extract_strided_slice %336 {offsets = [0, 0], sizes = [8, 128], strides = [1, 1]} : vector<8x384xf32> to vector<8x128xf32>
    %370 = arith.addf %368, %369 : vector<8x128xf32>
    %371 = arith.negf %370 : vector<8x128xf32>
    %372 = math.exp %371 : vector<8x128xf32>
    %cst_109 = arith.constant 1.000000e+00 : f32
    %373 = vector.broadcast %cst_109 : f32 to vector<8x128xf32>
    %374 = arith.addf %373, %372 : vector<8x128xf32>
    %375 = arith.divf %373, %374 : vector<8x128xf32>
    %376 = vector.extract_strided_slice %367 {offsets = [0, 128], sizes = [8, 128], strides = [1, 1]} : vector<8x384xf32> to vector<8x128xf32>
    %377 = vector.extract_strided_slice %336 {offsets = [0, 128], sizes = [8, 128], strides = [1, 1]} : vector<8x384xf32> to vector<8x128xf32>
    %378 = arith.addf %376, %377 : vector<8x128xf32>
    %379 = arith.negf %378 : vector<8x128xf32>
    %380 = math.exp %379 : vector<8x128xf32>
    %cst_110 = arith.constant 1.000000e+00 : f32
    %381 = vector.broadcast %cst_110 : f32 to vector<8x128xf32>
    %382 = arith.addf %381, %380 : vector<8x128xf32>
    %383 = arith.divf %381, %382 : vector<8x128xf32>
    %384 = vector.extract_strided_slice %367 {offsets = [0, 256], sizes = [8, 128], strides = [1, 1]} : vector<8x384xf32> to vector<8x128xf32>
    %385 = vector.extract_strided_slice %336 {offsets = [0, 256], sizes = [8, 128], strides = [1, 1]} : vector<8x384xf32> to vector<8x128xf32>
    %386 = arith.addf %385, %24 : vector<8x128xf32>
    %387 = arith.mulf %375, %386 : vector<8x128xf32>
    %388 = arith.addf %384, %387 : vector<8x128xf32>
    %389 = math.tanh %388 : vector<8x128xf32>
    %cst_111 = arith.constant 1.000000e+00 : f32
    %390 = vector.broadcast %cst_111 : f32 to vector<8x128xf32>
    %391 = arith.subf %390, %383 : vector<8x128xf32>
    %392 = arith.mulf %391, %389 : vector<8x128xf32>
    %393 = arith.mulf %383, %325 : vector<8x128xf32>
    %394 = arith.addf %392, %393 : vector<8x128xf32>
    %395 = arith.addi %25, %c4_i32 : i32
    %c8_i32_112 = arith.constant 8 : i32
    %396 = arith.cmpi slt, %395, %c8_i32_112 : i32
    %397 = arith.select %396, %365, %322 : vector<8x128xf32>
    %398 = arith.addi %27, %330 : i32
    %c8_i32_113 = arith.constant 8 : i32
    %399 = arith.cmpi slt, %398, %c8_i32_113 : i32
    %400 = arith.select %399, %394, %325 : vector<8x128xf32>
    %401 = arith.index_cast %332 : i32 to index
    %c0_114 = arith.constant 0 : index
    %402 = vector.load %arg14[%401, %c0_114] : memref<64x128xf32, #tpu.memory_space<vmem>>, vector<8x128xf32>
    tpu.vector_store %arg14[%401, %c0_114], %397 {strides = array<i32>} : memref<64x128xf32, #tpu.memory_space<vmem>>, vector<8x128xf32>,
    %403 = arith.index_cast %334 : i32 to index
    %c0_115 = arith.constant 0 : index
    %404 = vector.load %arg15[%403, %c0_115] : memref<64x128xf32, #tpu.memory_space<vmem>>, vector<8x128xf32>
    tpu.vector_store %arg15[%403, %c0_115], %400 {strides = array<i32>} : memref<64x128xf32, #tpu.memory_space<vmem>>, vector<8x128xf32>,
    %c5_i32 = arith.constant 5 : i32
    %c7_i32_116 = arith.constant 7 : i32
    %405 = arith.subi %c7_i32_116, %c5_i32 : i32
    %c8_i32_117 = arith.constant 8 : i32
    %406 = arith.muli %c5_i32, %c8_i32_117 : i32
    %407 = tpu.assume_multiple %406, 8 : i32
    %c8_i32_118 = arith.constant 8 : i32
    %408 = arith.muli %405, %c8_i32_118 : i32
    %409 = tpu.assume_multiple %408, 8 : i32
    %cst_119 = arith.constant dense<0.000000e+00> : vector<8x384xf32>
    %410 = tpu.matmul %397, %17, %cst_119 {dimension_numbers = #tpu.dot_dimension_numbers<[1], [0], [0], [1], [0, 0, 1, 1], [], []>} : vector<8x128xf32>, vector<128x384xf32>, vector<8x384xf32> -> vector<8x384xf32>
    %cst_120 = arith.constant dense<0.000000e+00> : vector<8x384xf32>
    %411 = tpu.matmul %400, %18, %cst_120 {dimension_numbers = #tpu.dot_dimension_numbers<[1], [0], [0], [1], [0, 0, 1, 1], [], []>} : vector<8x128xf32>, vector<128x384xf32>, vector<8x384xf32> -> vector<8x384xf32>
    %412 = arith.index_cast %407 : i32 to index
    %c0_121 = arith.constant 0 : index
    %413 = vector.load %arg17[%412, %c0_121] : memref<64x384xf32, #tpu.memory_space<vmem>>, vector<8x384xf32>
    %414 = vector.extract_strided_slice %413 {offsets = [0, 0], sizes = [8, 128], strides = [1, 1]} : vector<8x384xf32> to vector<8x128xf32>
    %415 = vector.extract_strided_slice %410 {offsets = [0, 0], sizes = [8, 128], strides = [1, 1]} : vector<8x384xf32> to vector<8x128xf32>
    %416 = arith.addf %414, %415 : vector<8x128xf32>
    %417 = arith.negf %416 : vector<8x128xf32>
    %418 = math.exp %417 : vector<8x128xf32>
    %cst_122 = arith.constant 1.000000e+00 : f32
    %419 = vector.broadcast %cst_122 : f32 to vector<8x128xf32>
    %420 = arith.addf %419, %418 : vector<8x128xf32>
    %421 = arith.divf %419, %420 : vector<8x128xf32>
    %422 = vector.extract_strided_slice %413 {offsets = [0, 128], sizes = [8, 128], strides = [1, 1]} : vector<8x384xf32> to vector<8x128xf32>
    %423 = vector.extract_strided_slice %410 {offsets = [0, 128], sizes = [8, 128], strides = [1, 1]} : vector<8x384xf32> to vector<8x128xf32>
    %424 = arith.addf %422, %423 : vector<8x128xf32>
    %425 = arith.negf %424 : vector<8x128xf32>
    %426 = math.exp %425 : vector<8x128xf32>
    %cst_123 = arith.constant 1.000000e+00 : f32
    %427 = vector.broadcast %cst_123 : f32 to vector<8x128xf32>
    %428 = arith.addf %427, %426 : vector<8x128xf32>
    %429 = arith.divf %427, %428 : vector<8x128xf32>
    %430 = vector.extract_strided_slice %413 {offsets = [0, 256], sizes = [8, 128], strides = [1, 1]} : vector<8x384xf32> to vector<8x128xf32>
    %431 = vector.extract_strided_slice %410 {offsets = [0, 256], sizes = [8, 128], strides = [1, 1]} : vector<8x384xf32> to vector<8x128xf32>
    %432 = arith.addf %431, %21 : vector<8x128xf32>
    %433 = arith.mulf %421, %432 : vector<8x128xf32>
    %434 = arith.addf %430, %433 : vector<8x128xf32>
    %435 = math.tanh %434 : vector<8x128xf32>
    %cst_124 = arith.constant 1.000000e+00 : f32
    %436 = vector.broadcast %cst_124 : f32 to vector<8x128xf32>
    %437 = arith.subf %436, %429 : vector<8x128xf32>
    %438 = arith.mulf %437, %435 : vector<8x128xf32>
    %439 = arith.mulf %429, %397 : vector<8x128xf32>
    %440 = arith.addf %438, %439 : vector<8x128xf32>
    %441 = arith.index_cast %409 : i32 to index
    %c0_125 = arith.constant 0 : index
    %442 = vector.load %arg18[%441, %c0_125] : memref<64x384xf32, #tpu.memory_space<vmem>>, vector<8x384xf32>
    %443 = vector.extract_strided_slice %442 {offsets = [0, 0], sizes = [8, 128], strides = [1, 1]} : vector<8x384xf32> to vector<8x128xf32>
    %444 = vector.extract_strided_slice %411 {offsets = [0, 0], sizes = [8, 128], strides = [1, 1]} : vector<8x384xf32> to vector<8x128xf32>
    %445 = arith.addf %443, %444 : vector<8x128xf32>
    %446 = arith.negf %445 : vector<8x128xf32>
    %447 = math.exp %446 : vector<8x128xf32>
    %cst_126 = arith.constant 1.000000e+00 : f32
    %448 = vector.broadcast %cst_126 : f32 to vector<8x128xf32>
    %449 = arith.addf %448, %447 : vector<8x128xf32>
    %450 = arith.divf %448, %449 : vector<8x128xf32>
    %451 = vector.extract_strided_slice %442 {offsets = [0, 128], sizes = [8, 128], strides = [1, 1]} : vector<8x384xf32> to vector<8x128xf32>
    %452 = vector.extract_strided_slice %411 {offsets = [0, 128], sizes = [8, 128], strides = [1, 1]} : vector<8x384xf32> to vector<8x128xf32>
    %453 = arith.addf %451, %452 : vector<8x128xf32>
    %454 = arith.negf %453 : vector<8x128xf32>
    %455 = math.exp %454 : vector<8x128xf32>
    %cst_127 = arith.constant 1.000000e+00 : f32
    %456 = vector.broadcast %cst_127 : f32 to vector<8x128xf32>
    %457 = arith.addf %456, %455 : vector<8x128xf32>
    %458 = arith.divf %456, %457 : vector<8x128xf32>
    %459 = vector.extract_strided_slice %442 {offsets = [0, 256], sizes = [8, 128], strides = [1, 1]} : vector<8x384xf32> to vector<8x128xf32>
    %460 = vector.extract_strided_slice %411 {offsets = [0, 256], sizes = [8, 128], strides = [1, 1]} : vector<8x384xf32> to vector<8x128xf32>
    %461 = arith.addf %460, %24 : vector<8x128xf32>
    %462 = arith.mulf %450, %461 : vector<8x128xf32>
    %463 = arith.addf %459, %462 : vector<8x128xf32>
    %464 = math.tanh %463 : vector<8x128xf32>
    %cst_128 = arith.constant 1.000000e+00 : f32
    %465 = vector.broadcast %cst_128 : f32 to vector<8x128xf32>
    %466 = arith.subf %465, %458 : vector<8x128xf32>
    %467 = arith.mulf %466, %464 : vector<8x128xf32>
    %468 = arith.mulf %458, %400 : vector<8x128xf32>
    %469 = arith.addf %467, %468 : vector<8x128xf32>
    %470 = arith.addi %25, %c5_i32 : i32
    %c8_i32_129 = arith.constant 8 : i32
    %471 = arith.cmpi slt, %470, %c8_i32_129 : i32
    %472 = arith.select %471, %440, %397 : vector<8x128xf32>
    %473 = arith.addi %27, %405 : i32
    %c8_i32_130 = arith.constant 8 : i32
    %474 = arith.cmpi slt, %473, %c8_i32_130 : i32
    %475 = arith.select %474, %469, %400 : vector<8x128xf32>
    %476 = arith.index_cast %407 : i32 to index
    %c0_131 = arith.constant 0 : index
    %477 = vector.load %arg14[%476, %c0_131] : memref<64x128xf32, #tpu.memory_space<vmem>>, vector<8x128xf32>
    tpu.vector_store %arg14[%476, %c0_131], %472 {strides = array<i32>} : memref<64x128xf32, #tpu.memory_space<vmem>>, vector<8x128xf32>,
    %478 = arith.index_cast %409 : i32 to index
    %c0_132 = arith.constant 0 : index
    %479 = vector.load %arg15[%478, %c0_132] : memref<64x128xf32, #tpu.memory_space<vmem>>, vector<8x128xf32>
    tpu.vector_store %arg15[%478, %c0_132], %475 {strides = array<i32>} : memref<64x128xf32, #tpu.memory_space<vmem>>, vector<8x128xf32>,
    %c6_i32 = arith.constant 6 : i32
    %c7_i32_133 = arith.constant 7 : i32
    %480 = arith.subi %c7_i32_133, %c6_i32 : i32
    %c8_i32_134 = arith.constant 8 : i32
    %481 = arith.muli %c6_i32, %c8_i32_134 : i32
    %482 = tpu.assume_multiple %481, 8 : i32
    %c8_i32_135 = arith.constant 8 : i32
    %483 = arith.muli %480, %c8_i32_135 : i32
    %484 = tpu.assume_multiple %483, 8 : i32
    %cst_136 = arith.constant dense<0.000000e+00> : vector<8x384xf32>
    %485 = tpu.matmul %472, %17, %cst_136 {dimension_numbers = #tpu.dot_dimension_numbers<[1], [0], [0], [1], [0, 0, 1, 1], [], []>} : vector<8x128xf32>, vector<128x384xf32>, vector<8x384xf32> -> vector<8x384xf32>
    %cst_137 = arith.constant dense<0.000000e+00> : vector<8x384xf32>
    %486 = tpu.matmul %475, %18, %cst_137 {dimension_numbers = #tpu.dot_dimension_numbers<[1], [0], [0], [1], [0, 0, 1, 1], [], []>} : vector<8x128xf32>, vector<128x384xf32>, vector<8x384xf32> -> vector<8x384xf32>
    %487 = arith.index_cast %482 : i32 to index
    %c0_138 = arith.constant 0 : index
    %488 = vector.load %arg17[%487, %c0_138] : memref<64x384xf32, #tpu.memory_space<vmem>>, vector<8x384xf32>
    %489 = vector.extract_strided_slice %488 {offsets = [0, 0], sizes = [8, 128], strides = [1, 1]} : vector<8x384xf32> to vector<8x128xf32>
    %490 = vector.extract_strided_slice %485 {offsets = [0, 0], sizes = [8, 128], strides = [1, 1]} : vector<8x384xf32> to vector<8x128xf32>
    %491 = arith.addf %489, %490 : vector<8x128xf32>
    %492 = arith.negf %491 : vector<8x128xf32>
    %493 = math.exp %492 : vector<8x128xf32>
    %cst_139 = arith.constant 1.000000e+00 : f32
    %494 = vector.broadcast %cst_139 : f32 to vector<8x128xf32>
    %495 = arith.addf %494, %493 : vector<8x128xf32>
    %496 = arith.divf %494, %495 : vector<8x128xf32>
    %497 = vector.extract_strided_slice %488 {offsets = [0, 128], sizes = [8, 128], strides = [1, 1]} : vector<8x384xf32> to vector<8x128xf32>
    %498 = vector.extract_strided_slice %485 {offsets = [0, 128], sizes = [8, 128], strides = [1, 1]} : vector<8x384xf32> to vector<8x128xf32>
    %499 = arith.addf %497, %498 : vector<8x128xf32>
    %500 = arith.negf %499 : vector<8x128xf32>
    %501 = math.exp %500 : vector<8x128xf32>
    %cst_140 = arith.constant 1.000000e+00 : f32
    %502 = vector.broadcast %cst_140 : f32 to vector<8x128xf32>
    %503 = arith.addf %502, %501 : vector<8x128xf32>
    %504 = arith.divf %502, %503 : vector<8x128xf32>
    %505 = vector.extract_strided_slice %488 {offsets = [0, 256], sizes = [8, 128], strides = [1, 1]} : vector<8x384xf32> to vector<8x128xf32>
    %506 = vector.extract_strided_slice %485 {offsets = [0, 256], sizes = [8, 128], strides = [1, 1]} : vector<8x384xf32> to vector<8x128xf32>
    %507 = arith.addf %506, %21 : vector<8x128xf32>
    %508 = arith.mulf %496, %507 : vector<8x128xf32>
    %509 = arith.addf %505, %508 : vector<8x128xf32>
    %510 = math.tanh %509 : vector<8x128xf32>
    %cst_141 = arith.constant 1.000000e+00 : f32
    %511 = vector.broadcast %cst_141 : f32 to vector<8x128xf32>
    %512 = arith.subf %511, %504 : vector<8x128xf32>
    %513 = arith.mulf %512, %510 : vector<8x128xf32>
    %514 = arith.mulf %504, %472 : vector<8x128xf32>
    %515 = arith.addf %513, %514 : vector<8x128xf32>
    %516 = arith.index_cast %484 : i32 to index
    %c0_142 = arith.constant 0 : index
    %517 = vector.load %arg18[%516, %c0_142] : memref<64x384xf32, #tpu.memory_space<vmem>>, vector<8x384xf32>
    %518 = vector.extract_strided_slice %517 {offsets = [0, 0], sizes = [8, 128], strides = [1, 1]} : vector<8x384xf32> to vector<8x128xf32>
    %519 = vector.extract_strided_slice %486 {offsets = [0, 0], sizes = [8, 128], strides = [1, 1]} : vector<8x384xf32> to vector<8x128xf32>
    %520 = arith.addf %518, %519 : vector<8x128xf32>
    %521 = arith.negf %520 : vector<8x128xf32>
    %522 = math.exp %521 : vector<8x128xf32>
    %cst_143 = arith.constant 1.000000e+00 : f32
    %523 = vector.broadcast %cst_143 : f32 to vector<8x128xf32>
    %524 = arith.addf %523, %522 : vector<8x128xf32>
    %525 = arith.divf %523, %524 : vector<8x128xf32>
    %526 = vector.extract_strided_slice %517 {offsets = [0, 128], sizes = [8, 128], strides = [1, 1]} : vector<8x384xf32> to vector<8x128xf32>
    %527 = vector.extract_strided_slice %486 {offsets = [0, 128], sizes = [8, 128], strides = [1, 1]} : vector<8x384xf32> to vector<8x128xf32>
    %528 = arith.addf %526, %527 : vector<8x128xf32>
    %529 = arith.negf %528 : vector<8x128xf32>
    %530 = math.exp %529 : vector<8x128xf32>
    %cst_144 = arith.constant 1.000000e+00 : f32
    %531 = vector.broadcast %cst_144 : f32 to vector<8x128xf32>
    %532 = arith.addf %531, %530 : vector<8x128xf32>
    %533 = arith.divf %531, %532 : vector<8x128xf32>
    %534 = vector.extract_strided_slice %517 {offsets = [0, 256], sizes = [8, 128], strides = [1, 1]} : vector<8x384xf32> to vector<8x128xf32>
    %535 = vector.extract_strided_slice %486 {offsets = [0, 256], sizes = [8, 128], strides = [1, 1]} : vector<8x384xf32> to vector<8x128xf32>
    %536 = arith.addf %535, %24 : vector<8x128xf32>
    %537 = arith.mulf %525, %536 : vector<8x128xf32>
    %538 = arith.addf %534, %537 : vector<8x128xf32>
    %539 = math.tanh %538 : vector<8x128xf32>
    %cst_145 = arith.constant 1.000000e+00 : f32
    %540 = vector.broadcast %cst_145 : f32 to vector<8x128xf32>
    %541 = arith.subf %540, %533 : vector<8x128xf32>
    %542 = arith.mulf %541, %539 : vector<8x128xf32>
    %543 = arith.mulf %533, %475 : vector<8x128xf32>
    %544 = arith.addf %542, %543 : vector<8x128xf32>
    %545 = arith.addi %25, %c6_i32 : i32
    %c8_i32_146 = arith.constant 8 : i32
    %546 = arith.cmpi slt, %545, %c8_i32_146 : i32
    %547 = arith.select %546, %515, %472 : vector<8x128xf32>
    %548 = arith.addi %27, %480 : i32
    %c8_i32_147 = arith.constant 8 : i32
    %549 = arith.cmpi slt, %548, %c8_i32_147 : i32
    %550 = arith.select %549, %544, %475 : vector<8x128xf32>
    %551 = arith.index_cast %482 : i32 to index
    %c0_148 = arith.constant 0 : index
    %552 = vector.load %arg14[%551, %c0_148] : memref<64x128xf32, #tpu.memory_space<vmem>>, vector<8x128xf32>
    tpu.vector_store %arg14[%551, %c0_148], %547 {strides = array<i32>} : memref<64x128xf32, #tpu.memory_space<vmem>>, vector<8x128xf32>,
    %553 = arith.index_cast %484 : i32 to index
    %c0_149 = arith.constant 0 : index
    %554 = vector.load %arg15[%553, %c0_149] : memref<64x128xf32, #tpu.memory_space<vmem>>, vector<8x128xf32>
    tpu.vector_store %arg15[%553, %c0_149], %550 {strides = array<i32>} : memref<64x128xf32, #tpu.memory_space<vmem>>, vector<8x128xf32>,
    %c7_i32_150 = arith.constant 7 : i32
    %c7_i32_151 = arith.constant 7 : i32
    %555 = arith.subi %c7_i32_151, %c7_i32_150 : i32
    %c8_i32_152 = arith.constant 8 : i32
    %556 = arith.muli %c7_i32_150, %c8_i32_152 : i32
    %557 = tpu.assume_multiple %556, 8 : i32
    %c8_i32_153 = arith.constant 8 : i32
    %558 = arith.muli %555, %c8_i32_153 : i32
    %559 = tpu.assume_multiple %558, 8 : i32
    %cst_154 = arith.constant dense<0.000000e+00> : vector<8x384xf32>
    %560 = tpu.matmul %547, %17, %cst_154 {dimension_numbers = #tpu.dot_dimension_numbers<[1], [0], [0], [1], [0, 0, 1, 1], [], []>} : vector<8x128xf32>, vector<128x384xf32>, vector<8x384xf32> -> vector<8x384xf32>
    %cst_155 = arith.constant dense<0.000000e+00> : vector<8x384xf32>
    %561 = tpu.matmul %550, %18, %cst_155 {dimension_numbers = #tpu.dot_dimension_numbers<[1], [0], [0], [1], [0, 0, 1, 1], [], []>} : vector<8x128xf32>, vector<128x384xf32>, vector<8x384xf32> -> vector<8x384xf32>
    %562 = arith.index_cast %557 : i32 to index
    %c0_156 = arith.constant 0 : index
    %563 = vector.load %arg17[%562, %c0_156] : memref<64x384xf32, #tpu.memory_space<vmem>>, vector<8x384xf32>
    %564 = vector.extract_strided_slice %563 {offsets = [0, 0], sizes = [8, 128], strides = [1, 1]} : vector<8x384xf32> to vector<8x128xf32>
    %565 = vector.extract_strided_slice %560 {offsets = [0, 0], sizes = [8, 128], strides = [1, 1]} : vector<8x384xf32> to vector<8x128xf32>
    %566 = arith.addf %564, %565 : vector<8x128xf32>
    %567 = arith.negf %566 : vector<8x128xf32>
    %568 = math.exp %567 : vector<8x128xf32>
    %cst_157 = arith.constant 1.000000e+00 : f32
    %569 = vector.broadcast %cst_157 : f32 to vector<8x128xf32>
    %570 = arith.addf %569, %568 : vector<8x128xf32>
    %571 = arith.divf %569, %570 : vector<8x128xf32>
    %572 = vector.extract_strided_slice %563 {offsets = [0, 128], sizes = [8, 128], strides = [1, 1]} : vector<8x384xf32> to vector<8x128xf32>
    %573 = vector.extract_strided_slice %560 {offsets = [0, 128], sizes = [8, 128], strides = [1, 1]} : vector<8x384xf32> to vector<8x128xf32>
    %574 = arith.addf %572, %573 : vector<8x128xf32>
    %575 = arith.negf %574 : vector<8x128xf32>
    %576 = math.exp %575 : vector<8x128xf32>
    %cst_158 = arith.constant 1.000000e+00 : f32
    %577 = vector.broadcast %cst_158 : f32 to vector<8x128xf32>
    %578 = arith.addf %577, %576 : vector<8x128xf32>
    %579 = arith.divf %577, %578 : vector<8x128xf32>
    %580 = vector.extract_strided_slice %563 {offsets = [0, 256], sizes = [8, 128], strides = [1, 1]} : vector<8x384xf32> to vector<8x128xf32>
    %581 = vector.extract_strided_slice %560 {offsets = [0, 256], sizes = [8, 128], strides = [1, 1]} : vector<8x384xf32> to vector<8x128xf32>
    %582 = arith.addf %581, %21 : vector<8x128xf32>
    %583 = arith.mulf %571, %582 : vector<8x128xf32>
    %584 = arith.addf %580, %583 : vector<8x128xf32>
    %585 = math.tanh %584 : vector<8x128xf32>
    %cst_159 = arith.constant 1.000000e+00 : f32
    %586 = vector.broadcast %cst_159 : f32 to vector<8x128xf32>
    %587 = arith.subf %586, %579 : vector<8x128xf32>
    %588 = arith.mulf %587, %585 : vector<8x128xf32>
    %589 = arith.mulf %579, %547 : vector<8x128xf32>
    %590 = arith.addf %588, %589 : vector<8x128xf32>
    %591 = arith.index_cast %559 : i32 to index
    %c0_160 = arith.constant 0 : index
    %592 = vector.load %arg18[%591, %c0_160] : memref<64x384xf32, #tpu.memory_space<vmem>>, vector<8x384xf32>
    %593 = vector.extract_strided_slice %592 {offsets = [0, 0], sizes = [8, 128], strides = [1, 1]} : vector<8x384xf32> to vector<8x128xf32>
    %594 = vector.extract_strided_slice %561 {offsets = [0, 0], sizes = [8, 128], strides = [1, 1]} : vector<8x384xf32> to vector<8x128xf32>
    %595 = arith.addf %593, %594 : vector<8x128xf32>
    %596 = arith.negf %595 : vector<8x128xf32>
    %597 = math.exp %596 : vector<8x128xf32>
    %cst_161 = arith.constant 1.000000e+00 : f32
    %598 = vector.broadcast %cst_161 : f32 to vector<8x128xf32>
    %599 = arith.addf %598, %597 : vector<8x128xf32>
    %600 = arith.divf %598, %599 : vector<8x128xf32>
    %601 = vector.extract_strided_slice %592 {offsets = [0, 128], sizes = [8, 128], strides = [1, 1]} : vector<8x384xf32> to vector<8x128xf32>
    %602 = vector.extract_strided_slice %561 {offsets = [0, 128], sizes = [8, 128], strides = [1, 1]} : vector<8x384xf32> to vector<8x128xf32>
    %603 = arith.addf %601, %602 : vector<8x128xf32>
    %604 = arith.negf %603 : vector<8x128xf32>
    %605 = math.exp %604 : vector<8x128xf32>
    %cst_162 = arith.constant 1.000000e+00 : f32
    %606 = vector.broadcast %cst_162 : f32 to vector<8x128xf32>
    %607 = arith.addf %606, %605 : vector<8x128xf32>
    %608 = arith.divf %606, %607 : vector<8x128xf32>
    %609 = vector.extract_strided_slice %592 {offsets = [0, 256], sizes = [8, 128], strides = [1, 1]} : vector<8x384xf32> to vector<8x128xf32>
    %610 = vector.extract_strided_slice %561 {offsets = [0, 256], sizes = [8, 128], strides = [1, 1]} : vector<8x384xf32> to vector<8x128xf32>
    %611 = arith.addf %610, %24 : vector<8x128xf32>
    %612 = arith.mulf %600, %611 : vector<8x128xf32>
    %613 = arith.addf %609, %612 : vector<8x128xf32>
    %614 = math.tanh %613 : vector<8x128xf32>
    %cst_163 = arith.constant 1.000000e+00 : f32
    %615 = vector.broadcast %cst_163 : f32 to vector<8x128xf32>
    %616 = arith.subf %615, %608 : vector<8x128xf32>
    %617 = arith.mulf %616, %614 : vector<8x128xf32>
    %618 = arith.mulf %608, %550 : vector<8x128xf32>
    %619 = arith.addf %617, %618 : vector<8x128xf32>
    %620 = arith.addi %25, %c7_i32_150 : i32
    %c8_i32_164 = arith.constant 8 : i32
    %621 = arith.cmpi slt, %620, %c8_i32_164 : i32
    %622 = arith.select %621, %590, %547 : vector<8x128xf32>
    %623 = arith.addi %27, %555 : i32
    %c8_i32_165 = arith.constant 8 : i32
    %624 = arith.cmpi slt, %623, %c8_i32_165 : i32
    %625 = arith.select %624, %619, %550 : vector<8x128xf32>
    %626 = arith.index_cast %557 : i32 to index
    %c0_166 = arith.constant 0 : index
    %627 = vector.load %arg14[%626, %c0_166] : memref<64x128xf32, #tpu.memory_space<vmem>>, vector<8x128xf32>
    tpu.vector_store %arg14[%626, %c0_166], %622 {strides = array<i32>} : memref<64x128xf32, #tpu.memory_space<vmem>>, vector<8x128xf32>,
    %628 = arith.index_cast %559 : i32 to index
    %c0_167 = arith.constant 0 : index
    %629 = vector.load %arg15[%628, %c0_167] : memref<64x128xf32, #tpu.memory_space<vmem>>, vector<8x128xf32>
    tpu.vector_store %arg15[%628, %c0_167], %625 {strides = array<i32>} : memref<64x128xf32, #tpu.memory_space<vmem>>, vector<8x128xf32>,
    %c8_i32_168 = arith.constant 8 : i32
    %c0_169 = arith.constant 0 : index
    %c0_170 = arith.constant 0 : index
    %630 = vector.load %arg19[%c0_169, %c0_170] : memref<8x128xf32, #tpu.memory_space<vmem>>, vector<8x128xf32>
    tpu.vector_store %arg19[%c0_169, %c0_170], %622 {strides = array<i32>} : memref<8x128xf32, #tpu.memory_space<vmem>>, vector<8x128xf32>,
    %c0_171 = arith.constant 0 : index
    %c0_172 = arith.constant 0 : index
    %631 = vector.load %arg20[%c0_171, %c0_172] : memref<8x128xf32, #tpu.memory_space<vmem>>, vector<8x128xf32>
    tpu.vector_store %arg20[%c0_171, %c0_172], %625 {strides = array<i32>} : memref<8x128xf32, #tpu.memory_space<vmem>>, vector<8x128xf32>,
    %c0_i32_173 = arith.constant 0 : i32
    %632 = arith.cmpi eq, %arg0, %c0_i32_173 : i32
    %633 = arith.extui %632 : i1 to i32
    %c0_i32_174 = arith.constant 0 : i32
    %634 = arith.cmpi ne, %633, %c0_i32_174 : i32
    scf.if %634 {
      %c0_175 = arith.constant 0 : index
      %c0_176 = arith.constant 0 : index
      %635 = vector.load %arg11[%c0_175, %c0_176] : memref<128x128xf32, #tpu.memory_space<vmem>>, vector<128x128xf32>
      %cst_177 = arith.constant dense<0.000000e+00> : vector<8x128xf32>
      %636 = tpu.matmul %622, %635, %cst_177 {dimension_numbers = #tpu.dot_dimension_numbers<[1], [0], [0], [1], [0, 0, 1, 1], [], []>} : vector<8x128xf32>, vector<128x128xf32>, vector<8x128xf32> -> vector<8x128xf32>
      %c0_178 = arith.constant 0 : index
      %c0_179 = arith.constant 0 : index
      %637 = vector.load %arg12[%c0_178, %c0_179] : memref<128x128xf32, #tpu.memory_space<vmem>>, vector<128x128xf32>
      %cst_180 = arith.constant dense<0.000000e+00> : vector<8x128xf32>
      %638 = tpu.matmul %625, %637, %cst_180 {dimension_numbers = #tpu.dot_dimension_numbers<[1], [0], [0], [1], [0, 0, 1, 1], [], []>} : vector<8x128xf32>, vector<128x128xf32>, vector<8x128xf32> -> vector<8x128xf32>
      %639 = arith.addf %636, %638 : vector<8x128xf32>
      %c0_181 = arith.constant 0 : index
      %c0_182 = arith.constant 0 : index
      %640 = vector.load %arg13[%c0_181, %c0_182] : memref<1x128xf32, #tpu.memory_space<vmem>>, vector<1x128xf32>
      %641 = vector.broadcast %640 : vector<1x128xf32> to vector<8x128xf32>
      %642 = arith.addf %639, %641 : vector<8x128xf32>
      %643 = math.tanh %642 : vector<8x128xf32>
      %c0_183 = arith.constant 0 : index
      %c0_184 = arith.constant 0 : index
      %644 = vector.load %arg16[%c0_183, %c0_184] : memref<8x128xf32, #tpu.memory_space<vmem>>, vector<8x128xf32>
      tpu.vector_store %arg16[%c0_183, %c0_184], %643 {strides = array<i32>} : memref<8x128xf32, #tpu.memory_space<vmem>>, vector<8x128xf32>,
    } else {
    }
    return
  }
  func.func @transform_0(%arg0: i32) -> (i32, i32) {
    %c0_i32 = arith.constant 0 : i32
    %c0_i32_0 = arith.constant 0 : i32
    return %arg0, %c0_i32 : i32, i32
  }
  func.func @transform_1(%arg0: i32) -> (i32, i32) {
    %c0_i32 = arith.constant 0 : i32
    %0 = arith.subi %c0_i32, %arg0 : i32
    %c0_i32_0 = arith.constant 0 : i32
    %c0_i32_1 = arith.constant 0 : i32
    return %0, %c0_i32_0 : i32, i32
  }
  func.func @transform_2(%arg0: i32) -> (i32, i32) {
    %c0_i32 = arith.constant 0 : i32
    %c0_i32_0 = arith.constant 0 : i32
    %c0_i32_1 = arith.constant 0 : i32
    return %c0_i32, %c0_i32_0 : i32, i32
  }
  func.func @transform_3(%arg0: i32) -> (i32, i32) {
    %c0_i32 = arith.constant 0 : i32
    %c0_i32_0 = arith.constant 0 : i32
    %c0_i32_1 = arith.constant 0 : i32
    return %c0_i32, %c0_i32_0 : i32, i32
  }
  func.func @transform_4(%arg0: i32) -> (i32, i32) {
    %c0_i32 = arith.constant 0 : i32
    %c0_i32_0 = arith.constant 0 : i32
    %c0_i32_1 = arith.constant 0 : i32
    return %c0_i32, %c0_i32_0 : i32, i32
  }
  func.func @transform_5(%arg0: i32) -> (i32, i32) {
    %c0_i32 = arith.constant 0 : i32
    %c0_i32_0 = arith.constant 0 : i32
    %c0_i32_1 = arith.constant 0 : i32
    return %c0_i32, %c0_i32_0 : i32, i32
  }
  func.func @transform_6(%arg0: i32) -> (i32, i32) {
    %c0_i32 = arith.constant 0 : i32
    %c0_i32_0 = arith.constant 0 : i32
    %c0_i32_1 = arith.constant 0 : i32
    return %c0_i32, %c0_i32_0 : i32, i32
  }
  func.func @transform_7(%arg0: i32) -> (i32, i32) {
    %c0_i32 = arith.constant 0 : i32
    %c0_i32_0 = arith.constant 0 : i32
    %c0_i32_1 = arith.constant 0 : i32
    return %c0_i32, %c0_i32_0 : i32, i32
  }
  func.func @transform_8(%arg0: i32) -> (i32, i32) {
    %c0_i32 = arith.constant 0 : i32
    %c0_i32_0 = arith.constant 0 : i32
    %c0_i32_1 = arith.constant 0 : i32
    return %c0_i32, %c0_i32_0 : i32, i32
  }
  func.func @transform_9(%arg0: i32) -> (i32, i32) {
    %c0_i32 = arith.constant 0 : i32
    %c0_i32_0 = arith.constant 0 : i32
    %c0_i32_1 = arith.constant 0 : i32
    return %c0_i32, %c0_i32_0 : i32, i32
  }
  func.func @transform_10(%arg0: i32) -> (i32, i32) {
    %c0_i32 = arith.constant 0 : i32
    %c0_i32_0 = arith.constant 0 : i32
    %c0_i32_1 = arith.constant 0 : i32
    return %c0_i32, %c0_i32_0 : i32, i32
  }
  func.func @transform_11(%arg0: i32) -> (i32, i32) {
    %c0_i32 = arith.constant 0 : i32
    %c0_i32_0 = arith.constant 0 : i32
    %c0_i32_1 = arith.constant 0 : i32
    return %c0_i32, %c0_i32_0 : i32, i32
  }
  func.func @transform_12(%arg0: i32) -> (i32, i32) {
    %c0_i32 = arith.constant 0 : i32
    %c0_i32_0 = arith.constant 0 : i32
    %c0_i32_1 = arith.constant 0 : i32
    return %c0_i32, %c0_i32_0 : i32, i32
  }
  func.func @transform_13(%arg0: i32) -> (i32, i32) {
    %c0_i32 = arith.constant 0 : i32
    %c0_i32_0 = arith.constant 0 : i32
    return %arg0, %c0_i32 : i32, i32
  }
  func.func @transform_14(%arg0: i32) -> (i32, i32) {
    %c0_i32 = arith.constant 0 : i32
    %0 = arith.subi %c0_i32, %arg0 : i32
    %c0_i32_0 = arith.constant 0 : i32
    %c0_i32_1 = arith.constant 0 : i32
    return %0, %c0_i32_0 : i32, i32
  }
  func.func @transform_15(%arg0: i32) -> (i32, i32) {
    %c0_i32 = arith.constant 0 : i32
    %c0_i32_0 = arith.constant 0 : i32
    %c0_i32_1 = arith.constant 0 : i32
    return %c0_i32, %c0_i32_0 : i32, i32
  }
}

</mosaic_0001>

<llo_original>
// kernel: tpu_custom_call.1
$region0: #{tpu_custom_call.1}
  #allocation0 [shape = 'u32[]', space=smem, size = 0x4, offset = 0x4, fixed_abs, tag = 'smem constant byte address 0x4 - core index']
  #allocation1 [shape = 'u32[144,128]{1,0:T(1,128)}', space=vmem, size = 0x12000, scoped, tag = 'internal scratch']
  #allocation2 [shape = 'f32[64,384]{1,0:T(8,128)}', space=vmem, size = 0x18000, scoped, tag = 'scratch operand']
  #allocation3 [shape = 'f32[64,384]{1,0:T(8,128)}', space=vmem, size = 0x18000, scoped, tag = 'scratch operand']
  #allocation4 [shape = 'f32[8,128]{1,0:T(8,128)}', space=vmem, size = 0x1000, scoped, tag = 'scratch operand']
  #allocation5 [shape = 'f32[8,128]{1,0:T(8,128)}', space=vmem, size = 0x1000, scoped, tag = 'scratch operand']
  %s0 = inlined_call_operand.hbm [shape: f32[64,128], index: 0, kind: input, shape index: {}]
  %s1 = inlined_call_operand.hbm [shape: f32[64,128], index: 1, kind: input, shape index: {}]
  %s2 = inlined_call_operand.hbm [shape: f32[128,384], index: 2, kind: input, shape index: {}]
  %s3 = inlined_call_operand.hbm [shape: f32[128,384], index: 3, kind: input, shape index: {}]
  %s4 = inlined_call_operand.hbm [shape: f32[128,384], index: 4, kind: input, shape index: {}]
  %s5 = inlined_call_operand.hbm [shape: f32[128,384], index: 5, kind: input, shape index: {}]
  %s6 = inlined_call_operand.vmem [shape: f32[1,384], index: 6, kind: input, shape index: {}]
  %s7 = inlined_call_operand.vmem [shape: f32[1,384], index: 7, kind: input, shape index: {}]
  %s8 = inlined_call_operand.vmem [shape: f32[1,128], index: 8, kind: input, shape index: {}]
  %s9 = inlined_call_operand.vmem [shape: f32[1,128], index: 9, kind: input, shape index: {}]
  %s10 = inlined_call_operand.hbm [shape: f32[128,128], index: 10, kind: input, shape index: {}]
  %s11 = inlined_call_operand.hbm [shape: f32[128,128], index: 11, kind: input, shape index: {}]
  %s12 = inlined_call_operand.vmem [shape: f32[1,128], index: 12, kind: input, shape index: {}]
  %s13 = inlined_call_operand.hbm [shape: f32[64,128], index: 13, kind: output, shape index: {0}]
  %s14 = inlined_call_operand.hbm [shape: f32[64,128], index: 14, kind: output, shape index: {1}]
  %s15 = inlined_call_operand.hbm [shape: f32[8,128], index: 15, kind: output, shape index: {2}]
  %16 = xla_tuple %s13, %s14, %s15
  %s17 = sld [smem:[#allocation0]]
  $region118: #{tpu_custom_call.1} parent=0
    _
  %s19 = ssub.s32 1, %s17
  %s20 = scalar_select 0, %s19, %s17
  $region1: #{tpu_custom_call.1} parent=0
    #allocation6 [shape = 'u8[32768]{0}', space=vmem, size = 0x8000, scoped, tag = 'input window, operand 0, single buffered']
    #allocation7 [shape = 's32[1]{0}', space=sflag, size = 0x4, scoped, tag = 'scoped memory for tpu_custom_call.1']
    #allocation8 [shape = 's32[1]{0}', space=sflag, size = 0x4, scoped, tag = 'scoped memory for tpu_custom_call.1']
    #allocation9 [shape = 'u8[32768]{0}', space=vmem, size = 0x8000, scoped, tag = 'input window, operand 1, single buffered']
    #allocation10 [shape = 's32[1]{0}', space=sflag, size = 0x4, scoped, tag = 'scoped memory for tpu_custom_call.1']
    #allocation11 [shape = 'u8[196608]{0}', space=vmem, size = 0x30000, scoped, tag = 'input window, operand 2, single buffered']
    #allocation12 [shape = 'u8[196608]{0}', space=vmem, size = 0x30000, scoped, tag = 'input window, operand 3, single buffered']
    #allocation13 [shape = 's32[1]{0}', space=sflag, size = 0x4, scoped, tag = 'scoped memory for tpu_custom_call.1']
    #allocation14 [shape = 'u8[196608]{0}', space=vmem, size = 0x30000, scoped, tag = 'input window, operand 4, single buffered']
    #allocation15 [shape = 'u8[196608]{0}', space=vmem, size = 0x30000, scoped, tag = 'input window, operand 5, single buffered']
    #allocation16 [shape = 's32[1]{0}', space=sflag, size = 0x4, scoped, tag = 'scoped memory for tpu_custom_call.1']
    #allocation17 [shape = 'u8[65536]{0}', space=vmem, size = 0x10000, scoped, tag = 'input window, operand 10, single buffered']
    #allocation18 [shape = 'u8[65536]{0}', space=vmem, size = 0x10000, scoped, tag = 'input window, operand 11, single buffered']
    #allocation19 [shape = 's32[1]{0}', space=sflag, size = 0x4, scoped, tag = 'scoped memory for tpu_custom_call.1']
    #allocation20 [shape = 'u8[32768]{0}', space=vmem, size = 0x8000, scoped, tag = 'output window, operand 0, single buffered']
    #allocation21 [shape = 'u8[32768]{0}', space=vmem, size = 0x8000, scoped, tag = 'output window, operand 1, single buffered']
    #allocation22 [shape = 's32[1]{0}', space=sflag, size = 0x4, scoped, tag = 'scoped memory for tpu_custom_call.1']
    #allocation23 [shape = 'u8[4096]{0}', space=vmem, size = 0x1000, scoped, tag = 'output window, operand 2, single buffered']
    %21 = vsyncpa [#allocation7], 0
    %22 = vsyncpa [#allocation10], 0
    %23 = vsyncpa [#allocation13], 0
    %24 = vsyncpa [#allocation16], 0
    %25 = vsyncpa [#allocation19], 0
    %26 = vsyncpa [#allocation8], 0
    %27 = vsyncpa [#allocation22], 0
    // Predicated region
    $region2: #{tpu_custom_call.1} parent=1 // pred_check
      _
    $region3: #{tpu_custom_call.1} parent=1 // pred_check_branch
      %29 = sbr.rel (0) target = $region5
    $region4: #{tpu_custom_call.1} parent=1 // pred_region
      %s31 = ssub.s32 1024, 1024
      %32 = vsyncadd [#allocation7], %s31
      %s33 = sshll.u32 [#allocation6], 4
      %s34 = int_to_ptr.vmem [resolvable:$true] %s33
      %39 = dma.hbm_to_vmem [thread:$0]  %s0, 1024, %s34, [#allocation7], 128, 128, 8
    $region5: #{tpu_custom_call.1} parent=1 // pred_fallthru
      _
    // Predicated region
    $region6: #{tpu_custom_call.1} parent=1 // pred_check
      _
    $region7: #{tpu_custom_call.1} parent=1 // pred_check_branch
      %41 = sbr.rel (0) target = $region9
    $region8: #{tpu_custom_call.1} parent=1 // pred_region
      %s42 = ssub.s32 0, 0
      %s43 = smul.u32 8, %s42
      %s45 = ssub.s32 1024, 1024
      %46 = vsyncadd [#allocation10], %s45
      %s47 = smul.addr %s43, 128
      %s48 = scalar_lea.hbm %s1, %s47
      %s49 = sshll.u32 [#allocation9], 4
      %s50 = int_to_ptr.vmem [resolvable:$true] %s49
      %55 = dma.hbm_to_vmem [thread:$0]  %s48, 1024, %s50, [#allocation10], 128, 128, 8
    $region9: #{tpu_custom_call.1} parent=1 // pred_fallthru
      _
    // Predicated region
    $region10: #{tpu_custom_call.1} parent=1 // pred_check
      _
    $region11: #{tpu_custom_call.1} parent=1 // pred_check_branch
      %57 = sbr.rel (0) target = $region13
    $region12: #{tpu_custom_call.1} parent=1 // pred_region
      %s59 = ssub.s32 6144, 6144
      %60 = vsyncadd [#allocation10], %s59
      %s61 = sshll.u32 [#allocation11], 4
      %s62 = int_to_ptr.vmem [resolvable:$true] %s61
      %67 = dma.hbm_to_vmem [thread:$0]  %s2, 6144, %s62, [#allocation10], 384, 384, 24
    $region13: #{tpu_custom_call.1} parent=1 // pred_fallthru
      _
    // Predicated region
    $region14: #{tpu_custom_call.1} parent=1 // pred_check
      _
    $region15: #{tpu_custom_call.1} parent=1 // pred_check_branch
      %69 = sbr.rel (0) target = $region17
    $region16: #{tpu_custom_call.1} parent=1 // pred_region
      %s71 = ssub.s32 6144, 6144
      %72 = vsyncadd [#allocation13], %s71
      %s73 = sshll.u32 [#allocation12], 4
      %s74 = int_to_ptr.vmem [resolvable:$true] %s73
      %79 = dma.hbm_to_vmem [thread:$0]  %s3, 6144, %s74, [#allocation13], 384, 384, 24
    $region17: #{tpu_custom_call.1} parent=1 // pred_fallthru
      _
    // Predicated region
    $region18: #{tpu_custom_call.1} parent=1 // pred_check
      _
    $region19: #{tpu_custom_call.1} parent=1 // pred_check_branch
      %81 = sbr.rel (0) target = $region21
    $region20: #{tpu_custom_call.1} parent=1 // pred_region
      %s83 = ssub.s32 6144, 6144
      %84 = vsyncadd [#allocation13], %s83
      %s85 = sshll.u32 [#allocation14], 4
      %s86 = int_to_ptr.vmem [resolvable:$true] %s85
      %91 = dma.hbm_to_vmem [thread:$0]  %s4, 6144, %s86, [#allocation13], 384, 384, 24
    $region21: #{tpu_custom_call.1} parent=1 // pred_fallthru
      _
    // Predicated region
    $region22: #{tpu_custom_call.1} parent=1 // pred_check
      _
    $region23: #{tpu_custom_call.1} parent=1 // pred_check_branch
      %93 = sbr.rel (0) target = $region25
    $region24: #{tpu_custom_call.1} parent=1 // pred_region
      %s95 = ssub.s32 6144, 6144
      %96 = vsyncadd [#allocation16], %s95
      %s97 = sshll.u32 [#allocation15], 4
      %s98 = int_to_ptr.vmem [resolvable:$true] %s97
      %103 = dma.hbm_to_vmem [thread:$0]  %s5, 6144, %s98, [#allocation16], 384, 384, 24
    $region25: #{tpu_custom_call.1} parent=1 // pred_fallthru
      _
    // Predicated region
    $region26: #{tpu_custom_call.1} parent=1 // pred_check
      _
    $region27: #{tpu_custom_call.1} parent=1 // pred_check_branch
      %105 = sbr.rel (0) target = $region29
    $region28: #{tpu_custom_call.1} parent=1 // pred_region
      _
    $region29: #{tpu_custom_call.1} parent=1 // pred_fallthru
      _
    // Predicated region
    $region30: #{tpu_custom_call.1} parent=1 // pred_check
      _
    $region31: #{tpu_custom_call.1} parent=1 // pred_check_branch
      %107 = sbr.rel (0) target = $region33
    $region32: #{tpu_custom_call.1} parent=1 // pred_region
      _
    $region33: #{tpu_custom_call.1} parent=1 // pred_fallthru
      _
    // Predicated region
    $region34: #{tpu_custom_call.1} parent=1 // pred_check
      _
    $region35: #{tpu_custom_call.1} parent=1 // pred_check_branch
      %109 = sbr.rel (0) target = $region37
    $region36: #{tpu_custom_call.1} parent=1 // pred_region
      _
    $region37: #{tpu_custom_call.1} parent=1 // pred_fallthru
      _
    // Predicated region
    $region38: #{tpu_custom_call.1} parent=1 // pred_check
      _
    $region39: #{tpu_custom_call.1} parent=1 // pred_check_branch
      %111 = sbr.rel (0) target = $region41
    $region40: #{tpu_custom_call.1} parent=1 // pred_region
      _
    $region41: #{tpu_custom_call.1} parent=1 // pred_fallthru
      _
    // Predicated region
    $region42: #{tpu_custom_call.1} parent=1 // pred_check
      _
    $region43: #{tpu_custom_call.1} parent=1 // pred_check_branch
      %113 = sbr.rel (0) target = $region45
    $region44: #{tpu_custom_call.1} parent=1 // pred_region
      %s115 = ssub.s32 2048, 2048
      %116 = vsyncadd [#allocation16], %s115
      %s117 = sshll.u32 [#allocation17], 4
      %s118 = int_to_ptr.vmem [resolvable:$true] %s117
      %123 = dma.hbm_to_vmem [thread:$0]  %s10, 2048, %s118, [#allocation16], 128, 128, 8
    $region45: #{tpu_custom_call.1} parent=1 // pred_fallthru
      _
    // Predicated region
    $region46: #{tpu_custom_call.1} parent=1 // pred_check
      _
    $region47: #{tpu_custom_call.1} parent=1 // pred_check_branch
      %125 = sbr.rel (0) target = $region49
    $region48: #{tpu_custom_call.1} parent=1 // pred_region
      %s127 = ssub.s32 2048, 2048
      %128 = vsyncadd [#allocation19], %s127
      %s129 = sshll.u32 [#allocation18], 4
      %s130 = int_to_ptr.vmem [resolvable:$true] %s129
      %135 = dma.hbm_to_vmem [thread:$0]  %s11, 2048, %s130, [#allocation19], 128, 128, 8
    $region49: #{tpu_custom_call.1} parent=1 // pred_fallthru
      _
    // Predicated region
    $region50: #{tpu_custom_call.1} parent=1 // pred_check
      _
    $region51: #{tpu_custom_call.1} parent=1 // pred_check_branch
      %137 = sbr.rel (0) target = $region53
    $region52: #{tpu_custom_call.1} parent=1 // pred_region
      _
    $region53: #{tpu_custom_call.1} parent=1 // pred_fallthru
      _
    // Predicated region
    $region54: #{tpu_custom_call.1} parent=1 // pred_check
      _
    $region55: #{tpu_custom_call.1} parent=1 // pred_check_branch
      %139 = sbr.rel (0) target = $region57
    $region56: #{tpu_custom_call.1} parent=1 // pred_region
      %140 = dma.done [#allocation7], 1024
    $region57: #{tpu_custom_call.1} parent=1 // pred_fallthru
      _
    // Predicated region
    $region58: #{tpu_custom_call.1} parent=1 // pred_check
      _
    $region59: #{tpu_custom_call.1} parent=1 // pred_check_branch
      %142 = sbr.rel (0) target = $region61
    $region60: #{tpu_custom_call.1} parent=1 // pred_region
      %143 = dma.done [#allocation10], 1024
    $region61: #{tpu_custom_call.1} parent=1 // pred_fallthru
      _
    // Predicated region
    $region62: #{tpu_custom_call.1} parent=1 // pred_check
      _
    $region63: #{tpu_custom_call.1} parent=1 // pred_check_branch
      %145 = sbr.rel (0) target = $region65
    $region64: #{tpu_custom_call.1} parent=1 // pred_region
      %146 = dma.done [#allocation10], 6144
    $region65: #{tpu_custom_call.1} parent=1 // pred_fallthru
      _
    // Predicated region
    $region66: #{tpu_custom_call.1} parent=1 // pred_check
      _
    $region67: #{tpu_custom_call.1} parent=1 // pred_check_branch
      %148 = sbr.rel (0) target = $region69
    $region68: #{tpu_custom_call.1} parent=1 // pred_region
      %149 = dma.done [#allocation13], 6144
    $region69: #{tpu_custom_call.1} parent=1 // pred_fallthru
      _
    // Predicated region
    $region70: #{tpu_custom_call.1} parent=1 // pred_check
      _
    $region71: #{tpu_custom_call.1} parent=1 // pred_check_branch
      %151 = sbr.rel (0) target = $region73
    $region72: #{tpu_custom_call.1} parent=1 // pred_region
      %152 = dma.done [#allocation13], 6144
    $region73: #{tpu_custom_call.1} parent=1 // pred_fallthru
      _
    // Predicated region
    $region74: #{tpu_custom_call.1} parent=1 // pred_check
      _
    $region75: #{tpu_custom_call.1} parent=1 // pred_check_branch
      %154 = sbr.rel (0) target = $region77
    $region76: #{tpu_custom_call.1} parent=1 // pred_region
      %155 = dma.done [#allocation16], 6144
    $region77: #{tpu_custom_call.1} parent=1 // pred_fallthru
      _
    // Predicated region
    $region78: #{tpu_custom_call.1} parent=1 // pred_check
      _
    $region79: #{tpu_custom_call.1} parent=1 // pred_check_branch
      %157 = sbr.rel (0) target = $region81
    $region80: #{tpu_custom_call.1} parent=1 // pred_region
      %158 = dma.done [#allocation16], 2048
    $region81: #{tpu_custom_call.1} parent=1 // pred_fallthru
      _
    // Predicated region
    $region82: #{tpu_custom_call.1} parent=1 // pred_check
      _
    $region83: #{tpu_custom_call.1} parent=1 // pred_check_branch
      %160 = sbr.rel (0) target = $region85
    $region84: #{tpu_custom_call.1} parent=1 // pred_region
      %161 = dma.done [#allocation19], 2048
    $region85: #{tpu_custom_call.1} parent=1 // pred_fallthru
      _
    %s162 = ssub.s32 0, 0
    %s163 = smul.u32 8, %s162
    %s164 = ssub.s32 0, 0
    %s165 = smul.u32 8, %s164
    %p166 = scmp.eq.s32.totalorder 0, 0
    // Predicated region
    $region86: #{tpu_custom_call.1} parent=1 // pred_check
      %p167 = pneg %p166
    $region87: #{tpu_custom_call.1} parent=1 // pred_check_branch
      %169 = sbr.rel (%p167) target = $region89
    $region88: #{tpu_custom_call.1} parent=1 // pred_region
      %170 = vst [vmem:[#allocation4] sm:$0xff] 0.0
      %171 = vst [vmem:[#allocation5] sm:$0xff] 0.0
    $region89: #{tpu_custom_call.1} parent=1 // pred_fallthru
      _
    %v172 = vld [vmem:[#allocation6] sm:$0xff]
    %v173 = vld [vmem:[#allocation6 + $0x8] sm:$0xff]
    %v174 = vld [vmem:[#allocation6 + $0x10] sm:$0xff]
    %v175 = vld [vmem:[#allocation6 + $0x18] sm:$0xff]
    %v176 = vld [vmem:[#allocation6 + $0x20] sm:$0xff]
    %v177 = vld [vmem:[#allocation6 + $0x28] sm:$0xff]
    %v178 = vld [vmem:[#allocation6 + $0x30] sm:$0xff]
    %v179 = vld [vmem:[#allocation6 + $0x38] sm:$0xff]
    %v180 = vld [vmem:[#allocation11] sm:$0xff]
    %v181 = vld [vmem:[#allocation11 + $0x8] sm:$0xff]
    %v182 = vld [vmem:[#allocation11 + $0x10] sm:$0xff]
    %v183 = vld [vmem:[#allocation11 + $0x18] sm:$0xff]
    %v184 = vld [vmem:[#allocation11 + $0x20] sm:$0xff]
    %v185 = vld [vmem:[#allocation11 + $0x28] sm:$0xff]
    %v186 = vld [vmem:[#allocation11 + $0x30] sm:$0xff]
    %v187 = vld [vmem:[#allocation11 + $0x38] sm:$0xff]
    %v188 = vld [vmem:[#allocation11 + $0x40] sm:$0xff]
    %v189 = vld [vmem:[#allocation11 + $0x48] sm:$0xff]
    %v190 = vld [vmem:[#allocation11 + $0x50] sm:$0xff]
    %v191 = vld [vmem:[#allocation11 + $0x58] sm:$0xff]
    %v192 = vld [vmem:[#allocation11 + $0x60] sm:$0xff]
    %v193 = vld [vmem:[#allocation11 + $0x68] sm:$0xff]
    %v194 = vld [vmem:[#allocation11 + $0x70] sm:$0xff]
    %v195 = vld [vmem:[#allocation11 + $0x78] sm:$0xff]
    %v196 = vld [vmem:[#allocation11 + $0x80] sm:$0xff]
    %v197 = vld [vmem:[#allocation11 + $0x88] sm:$0xff]
    %v198 = vld [vmem:[#allocation11 + $0x90] sm:$0xff]
    %v199 = vld [vmem:[#allocation11 + $0x98] sm:$0xff]
    %v200 = vld [vmem:[#allocation11 + $0xa0] sm:$0xff]
    %v201 = vld [vmem:[#allocation11 + $0xa8] sm:$0xff]
    %v202 = vld [vmem:[#allocation11 + $0xb0] sm:$0xff]
    %v203 = vld [vmem:[#allocation11 + $0xb8] sm:$0xff]
    %v204 = vld [vmem:[#allocation11 + $0xc0] sm:$0xff]
    %v205 = vld [vmem:[#allocation11 + $0xc8] sm:$0xff]
    %v206 = vld [vmem:[#allocation11 + $0xd0] sm:$0xff]
    %v207 = vld [vmem:[#allocation11 + $0xd8] sm:$0xff]
    %v208 = vld [vmem:[#allocation11 + $0xe0] sm:$0xff]
    %v209 = vld [vmem:[#allocation11 + $0xe8] sm:$0xff]
    %v210 = vld [vmem:[#allocation11 + $0xf0] sm:$0xff]
    %v211 = vld [vmem:[#allocation11 + $0xf8] sm:$0xff]
    %v212 = vld [vmem:[#allocation11 + $0x100] sm:$0xff]
    %v213 = vld [vmem:[#allocation11 + $0x108] sm:$0xff]
    %v214 = vld [vmem:[#allocation11 + $0x110] sm:$0xff]
    %v215 = vld [vmem:[#allocation11 + $0x118] sm:$0xff]
    %v216 = vld [vmem:[#allocation11 + $0x120] sm:$0xff]
    %v217 = vld [vmem:[#allocation11 + $0x128] sm:$0xff]
    %v218 = vld [vmem:[#allocation11 + $0x130] sm:$0xff]
    %v219 = vld [vmem:[#allocation11 + $0x138] sm:$0xff]
    %v220 = vld [vmem:[#allocation11 + $0x140] sm:$0xff]
    %v221 = vld [vmem:[#allocation11 + $0x148] sm:$0xff]
    %v222 = vld [vmem:[#allocation11 + $0x150] sm:$0xff]
    %v223 = vld [vmem:[#allocation11 + $0x158] sm:$0xff]
    %v224 = vld [vmem:[#allocation11 + $0x160] sm:$0xff]
    %v225 = vld [vmem:[#allocation11 + $0x168] sm:$0xff]
    %v226 = vld [vmem:[#allocation11 + $0x170] sm:$0xff]
    %v227 = vld [vmem:[#allocation11 + $0x178] sm:$0xff]
    %v228 = vld [vmem:[%s6] sm:$0x7]
    %v230 = vlaneseq
    %v231 = vshrl.u32 %v230, 7
    %v232 = vsub.s32 0, %v231
    %v233 = vrot.slane %v228, %v232
    %v234 = vlaneseq
    %v235 = vshrl.u32 %v234, 7
    %v236 = vsub.s32 1, %v235
    %v237 = vrot.slane %v228, %v236
    %v238 = vlaneseq
    %v239 = vshrl.u32 %v238, 7
    %v240 = vsub.s32 2, %v239
    %v241 = vrot.slane %v228, %v240
    %245 = vmatprep.subr.mxu0 %v226
    %246 = vmatpush1.msra.mxu0 %v225
    %247 = vmatprep.subr.mxu0 %v223
    %248 = vmatpush1.msra.mxu0 %v222
    %249 = vmatprep.subr.mxu0 %v220
    %250 = vmatpush1.msra.mxu0 %v219
    %251 = vmatprep.subr.mxu0 %v217
    %252 = vmatpush1.msra.mxu0 %v216
    %253 = vmatprep.subr.mxu0 %v214
    %254 = vmatpush1.msra.mxu0 %v213
    %255 = vmatprep.subr.mxu0 %v211
    %256 = vmatpush1.msra.mxu0 %v210
    %257 = vmatprep.subr.mxu0 %v208
    %258 = vmatpush1.msra.mxu0 %v207
    %259 = vmatprep.subr.mxu0 %v205
    %260 = vmatpush1.msra.mxu0 %v204
    %261 = vmatprep.subr.mxu0 %v202
    %262 = vmatpush1.msra.mxu0 %v201
    %263 = vmatprep.subr.mxu0 %v199
    %264 = vmatpush1.msra.mxu0 %v198
    %265 = vmatprep.subr.mxu0 %v196
    %266 = vmatpush1.msra.mxu0 %v195
    %267 = vmatprep.subr.mxu0 %v193
    %268 = vmatpush1.msra.mxu0 %v192
    %269 = vmatprep.subr.mxu0 %v190
    %270 = vmatpush1.msra.mxu0 %v189
    %271 = vmatprep.subr.mxu0 %v187
    %272 = vmatpush1.msra.mxu0 %v186
    %273 = vmatprep.subr.mxu0 %v184
    %274 = vmatpush1.msra.mxu0 %v183
    %275 = vmatprep.subr.mxu0 %v181
    %276 = vmatpush1.msra.mxu0 %v180
    %277 = vmatprep.subr.mxu0 0.0
    %278 = vmatpush2.msra.mxu0 0.0
    %279 = vmatprep.subr.mxu0 0.0
    %280 = vmatpush2.msra.mxu0 0.0
    %281 = vmatprep.subr.mxu0 0.0
    %282 = vmatpush2.msra.mxu0 0.0
    %283 = vmatprep.subr.mxu0 0.0
    %284 = vmatpush2.msra.mxu0 0.0
    %285 = vmatprep.subr.mxu0 0.0
    %286 = vmatpush2.msra.mxu0 0.0
    %287 = vmatprep.subr.mxu0 0.0
    %288 = vmatpush2.msra.mxu0 0.0
    %289 = vmatprep.subr.mxu0 0.0
    %290 = vmatpush2.msra.mxu0 0.0
    %291 = vmatprep.subr.mxu0 0.0
    %292 = vmatpush2.msra.mxu0 0.0
    %293 = vmatprep.subr.mxu0 0.0
    %294 = vmatpush2.msra.mxu0 0.0
    %295 = vmatprep.subr.mxu0 0.0
    %296 = vmatpush2.msra.mxu0 0.0
    %297 = vmatprep.subr.mxu0 0.0
    %298 = vmatpush2.msra.mxu0 0.0
    %299 = vmatprep.subr.mxu0 0.0
    %300 = vmatpush2.msra.mxu0 0.0
    %301 = vmatprep.subr.mxu0 0.0
    %302 = vmatpush2.msra.mxu0 0.0
    %303 = vmatprep.subr.mxu0 0.0
    %304 = vmatpush2.msra.mxu0 0.0
    %305 = vmatprep.subr.mxu0 0.0
    %306 = vmatpush2.msra.mxu0 0.0
    %307 = vmatprep.subr.mxu0 0.0
    %308 = vmatpush2.msra.mxu0 0.0
    %309 = vmatprep.mubr.f32.mxu0 0.0
    %310 = vmatmul.mubr.f32.gmra.mxu0 %v172
    %v311 = vpop.f32.mrf.mxu0
    %v312 = vadd.f32 %v233, %v311
    %v313 = vpop.f32.mrf.mxu0
    %v314 = vadd.f32 %v237, %v313
    %315 = vmatprep.mubr.f32.mxu0 0.0
    %316 = vmatmul.mubr.f32.gmra.mxu0 %v173
    %v317 = vpop.f32.mrf.mxu0
    %v318 = vadd.f32 %v233, %v317
    %v319 = vpop.f32.mrf.mxu0
    %v320 = vadd.f32 %v237, %v319
    %321 = vmatprep.mubr.f32.mxu0 0.0
    %322 = vmatmul.mubr.f32.gmra.mxu0 %v174
    %v323 = vpop.f32.mrf.mxu0
    %v324 = vadd.f32 %v233, %v323
    %v325 = vpop.f32.mrf.mxu0
    %v326 = vadd.f32 %v237, %v325
    %327 = vmatprep.mubr.f32.mxu0 0.0
    %328 = vmatmul.mubr.f32.gmra.mxu0 %v175
    %v329 = vpop.f32.mrf.mxu0
    %v330 = vadd.f32 %v233, %v329
    %v331 = vpop.f32.mrf.mxu0
    %v332 = vadd.f32 %v237, %v331
    %333 = vmatprep.mubr.f32.mxu0 0.0
    %334 = vmatmul.mubr.f32.gmra.mxu0 %v176
    %v335 = vpop.f32.mrf.mxu0
    %v336 = vadd.f32 %v233, %v335
    %v337 = vpop.f32.mrf.mxu0
    %v338 = vadd.f32 %v237, %v337
    %339 = vmatprep.mubr.f32.mxu0 0.0
    %340 = vmatmul.mubr.f32.gmra.mxu0 %v177
    %v341 = vpop.f32.mrf.mxu0
    %v342 = vadd.f32 %v233, %v341
    %v343 = vpop.f32.mrf.mxu0
    %v344 = vadd.f32 %v237, %v343
    %345 = vmatprep.mubr.f32.mxu0 0.0
    %346 = vmatmul.mubr.f32.gmra.mxu0 %v178
    %v347 = vpop.f32.mrf.mxu0
    %v348 = vadd.f32 %v233, %v347
    %v349 = vpop.f32.mrf.mxu0
    %v350 = vadd.f32 %v237, %v349
    %351 = vmatprep.mubr.f32.mxu0 0.0
    %352 = vmatmul.mubr.f32.gmra.mxu0 %v179
    %v353 = vpop.f32.mrf.mxu0
    %v354 = vadd.f32 %v233, %v353
    %v355 = vpop.f32.mrf.mxu0
    %v356 = vadd.f32 %v237, %v355
    %357 = vdwg.mxu0
    %358 = vmatprep.subr.mxu0 0.0
    %359 = vmatpush1.msra.mxu0 %v227
    %360 = vmatprep.subr.mxu0 0.0
    %361 = vmatpush1.msra.mxu0 %v224
    %362 = vmatprep.subr.mxu0 0.0
    %363 = vmatpush1.msra.mxu0 %v221
    %364 = vmatprep.subr.mxu0 0.0
    %365 = vmatpush1.msra.mxu0 %v218
    %366 = vmatprep.subr.mxu0 0.0
    %367 = vmatpush1.msra.mxu0 %v215
    %368 = vmatprep.subr.mxu0 0.0
    %369 = vmatpush1.msra.mxu0 %v212
    %370 = vmatprep.subr.mxu0 0.0
    %371 = vmatpush1.msra.mxu0 %v209
    %372 = vmatprep.subr.mxu0 0.0
    %373 = vmatpush1.msra.mxu0 %v206
    %374 = vmatprep.subr.mxu0 0.0
    %375 = vmatpush1.msra.mxu0 %v203
    %376 = vmatprep.subr.mxu0 0.0
    %377 = vmatpush1.msra.mxu0 %v200
    %378 = vmatprep.subr.mxu0 0.0
    %379 = vmatpush1.msra.mxu0 %v197
    %380 = vmatprep.subr.mxu0 0.0
    %381 = vmatpush1.msra.mxu0 %v194
    %382 = vmatprep.subr.mxu0 0.0
    %383 = vmatpush1.msra.mxu0 %v191
    %384 = vmatprep.subr.mxu0 0.0
    %385 = vmatpush1.msra.mxu0 %v188
    %386 = vmatprep.subr.mxu0 0.0
    %387 = vmatpush1.msra.mxu0 %v185
    %388 = vmatprep.subr.mxu0 0.0
    %389 = vmatpush1.msra.mxu0 %v182
    %390 = vmatprep.subr.mxu0 0.0
    %391 = vmatpush2.msra.mxu0 0.0
    %392 = vmatprep.subr.mxu0 0.0
    %393 = vmatpush2.msra.mxu0 0.0
    %394 = vmatprep.subr.mxu0 0.0
    %395 = vmatpush2.msra.mxu0 0.0
    %396 = vmatprep.subr.mxu0 0.0
    %397 = vmatpush2.msra.mxu0 0.0
    %398 = vmatprep.subr.mxu0 0.0
    %399 = vmatpush2.msra.mxu0 0.0
    %400 = vmatprep.subr.mxu0 0.0
    %401 = vmatpush2.msra.mxu0 0.0
    %402 = vmatprep.subr.mxu0 0.0
    %403 = vmatpush2.msra.mxu0 0.0
    %404 = vmatprep.subr.mxu0 0.0
    %405 = vmatpush2.msra.mxu0 0.0
    %406 = vmatprep.subr.mxu0 0.0
    %407 = vmatpush2.msra.mxu0 0.0
    %408 = vmatprep.subr.mxu0 0.0
    %409 = vmatpush2.msra.mxu0 0.0
    %410 = vmatprep.subr.mxu0 0.0
    %411 = vmatpush2.msra.mxu0 0.0
    %412 = vmatprep.subr.mxu0 0.0
    %413 = vmatpush2.msra.mxu0 0.0
    %414 = vmatprep.subr.mxu0 0.0
    %415 = vmatpush2.msra.mxu0 0.0
    %416 = vmatprep.subr.mxu0 0.0
    %417 = vmatpush2.msra.mxu0 0.0
    %418 = vmatprep.subr.mxu0 0.0
    %419 = vmatpush2.msra.mxu0 0.0
    %420 = vmatprep.subr.mxu0 0.0
    %421 = vmatpush2.msra.mxu0 0.0
    %422 = vmatprep.mubr.f32.mxu0 0.0
    %423 = vmatmul.mubr.f32.gmra.mxu0 %v172
    %v424 = vpop.f32.mrf.mxu0
    %v425 = vadd.f32 %v241, %v424
    %v426 = vpop.f32.mrf.mxu0
    %427 = vmatprep.mubr.f32.mxu0 0.0
    %428 = vmatmul.mubr.f32.gmra.mxu0 %v173
    %v429 = vpop.f32.mrf.mxu0
    %v430 = vadd.f32 %v241, %v429
    %v431 = vpop.f32.mrf.mxu0
    %432 = vmatprep.mubr.f32.mxu0 0.0
    %433 = vmatmul.mubr.f32.gmra.mxu0 %v174
    %v434 = vpop.f32.mrf.mxu0
    %v435 = vadd.f32 %v241, %v434
    %v436 = vpop.f32.mrf.mxu0
    %437 = vmatprep.mubr.f32.mxu0 0.0
    %438 = vmatmul.mubr.f32.gmra.mxu0 %v175
    %v439 = vpop.f32.mrf.mxu0
    %v440 = vadd.f32 %v241, %v439
    %v441 = vpop.f32.mrf.mxu0
    %442 = vmatprep.mubr.f32.mxu0 0.0
    %443 = vmatmul.mubr.f32.gmra.mxu0 %v176
    %v444 = vpop.f32.mrf.mxu0
    %v445 = vadd.f32 %v241, %v444
    %v446 = vpop.f32.mrf.mxu0
    %447 = vmatprep.mubr.f32.mxu0 0.0
    %448 = vmatmul.mubr.f32.gmra.mxu0 %v177
    %v449 = vpop.f32.mrf.mxu0
    %v450 = vadd.f32 %v241, %v449
    %v451 = vpop.f32.mrf.mxu0
    %452 = vmatprep.mubr.f32.mxu0 0.0
    %453 = vmatmul.mubr.f32.gmra.mxu0 %v178
    %v454 = vpop.f32.mrf.mxu0
    %v455 = vadd.f32 %v241, %v454
    %v456 = vpop.f32.mrf.mxu0
    %457 = vmatprep.mubr.f32.mxu0 0.0
    %458 = vmatmul.mubr.f32.gmra.mxu0 %v179
    %v459 = vpop.f32.mrf.mxu0
    %v460 = vadd.f32 %v241, %v459
    %v461 = vpop.f32.mrf.mxu0
    %462 = vdwg.mxu0
    %463 = vst [vmem:[#allocation2] sm:$0xff] %v312
    %464 = vst [vmem:[#allocation2 + $0x8] sm:$0xff] %v314
    %465 = vst [vmem:[#allocation2 + $0x10] sm:$0xff] %v425
    %466 = vst [vmem:[#allocation2 + $0x18] sm:$0xff] %v318
    %467 = vst [vmem:[#allocation2 + $0x20] sm:$0xff] %v320
    %468 = vst [vmem:[#allocation2 + $0x28] sm:$0xff] %v430
    %469 = vst [vmem:[#allocation2 + $0x30] sm:$0xff] %v324
    %470 = vst [vmem:[#allocation2 + $0x38] sm:$0xff] %v326
    %471 = vst [vmem:[#allocation2 + $0x40] sm:$0xff] %v435
    %472 = vst [vmem:[#allocation2 + $0x48] sm:$0xff] %v330
    %473 = vst [vmem:[#allocation2 + $0x50] sm:$0xff] %v332
    %474 = vst [vmem:[#allocation2 + $0x58] sm:$0xff] %v440
    %475 = vst [vmem:[#allocation2 + $0x60] sm:$0xff] %v336
    %476 = vst [vmem:[#allocation2 + $0x68] sm:$0xff] %v338
    %477 = vst [vmem:[#allocation2 + $0x70] sm:$0xff] %v445
    %478 = vst [vmem:[#allocation2 + $0x78] sm:$0xff] %v342
    %479 = vst [vmem:[#allocation2 + $0x80] sm:$0xff] %v344
    %480 = vst [vmem:[#allocation2 + $0x88] sm:$0xff] %v450
    %481 = vst [vmem:[#allocation2 + $0x90] sm:$0xff] %v348
    %482 = vst [vmem:[#allocation2 + $0x98] sm:$0xff] %v350
    %483 = vst [vmem:[#allocation2 + $0xa0] sm:$0xff] %v455
    %484 = vst [vmem:[#allocation2 + $0xa8] sm:$0xff] %v354
    %485 = vst [vmem:[#allocation2 + $0xb0] sm:$0xff] %v356
    %486 = vst [vmem:[#allocation2 + $0xb8] sm:$0xff] %v460
    %v487 = vld [vmem:[#allocation9] sm:$0xff]
    %v488 = vld [vmem:[#allocation9 + $0x8] sm:$0xff]
    %v489 = vld [vmem:[#allocation9 + $0x10] sm:$0xff]
    %v490 = vld [vmem:[#allocation9 + $0x18] sm:$0xff]
    %v491 = vld [vmem:[#allocation9 + $0x20] sm:$0xff]
    %v492 = vld [vmem:[#allocation9 + $0x28] sm:$0xff]
    %v493 = vld [vmem:[#allocation9 + $0x30] sm:$0xff]
    %v494 = vld [vmem:[#allocation9 + $0x38] sm:$0xff]
    %v495 = vld [vmem:[#allocation12] sm:$0xff]
    %v496 = vld [vmem:[#allocation12 + $0x8] sm:$0xff]
    %v497 = vld [vmem:[#allocation12 + $0x10] sm:$0xff]
    %v498 = vld [vmem:[#allocation12 + $0x18] sm:$0xff]
    %v499 = vld [vmem:[#allocation12 + $0x20] sm:$0xff]
    %v500 = vld [vmem:[#allocation12 + $0x28] sm:$0xff]
    %v501 = vld [vmem:[#allocation12 + $0x30] sm:$0xff]
    %v502 = vld [vmem:[#allocation12 + $0x38] sm:$0xff]
    %v503 = vld [vmem:[#allocation12 + $0x40] sm:$0xff]
    %v504 = vld [vmem:[#allocation12 + $0x48] sm:$0xff]
    %v505 = vld [vmem:[#allocation12 + $0x50] sm:$0xff]
    %v506 = vld [vmem:[#allocation12 + $0x58] sm:$0xff]
    %v507 = vld [vmem:[#allocation12 + $0x60] sm:$0xff]
    %v508 = vld [vmem:[#allocation12 + $0x68] sm:$0xff]
    %v509 = vld [vmem:[#allocation12 + $0x70] sm:$0xff]
    %v510 = vld [vmem:[#allocation12 + $0x78] sm:$0xff]
    %v511 = vld [vmem:[#allocation12 + $0x80] sm:$0xff]
    %v512 = vld [vmem:[#allocation12 + $0x88] sm:$0xff]
    %v513 = vld [vmem:[#allocation12 + $0x90] sm:$0xff]
    %v514 = vld [vmem:[#allocation12 + $0x98] sm:$0xff]
    %v515 = vld [vmem:[#allocation12 + $0xa0] sm:$0xff]
    %v516 = vld [vmem:[#allocation12 + $0xa8] sm:$0xff]
    %v517 = vld [vmem:[#allocation12 + $0xb0] sm:$0xff]
    %v518 = vld [vmem:[#allocation12 + $0xb8] sm:$0xff]
    %v519 = vld [vmem:[#allocation12 + $0xc0] sm:$0xff]
    %v520 = vld [vmem:[#allocation12 + $0xc8] sm:$0xff]
    %v521 = vld [vmem:[#allocation12 + $0xd0] sm:$0xff]
    %v522 = vld [vmem:[#allocation12 + $0xd8] sm:$0xff]
    %v523 = vld [vmem:[#allocation12 + $0xe0] sm:$0xff]
    %v524 = vld [vmem:[#allocation12 + $0xe8] sm:$0xff]
    %v525 = vld [vmem:[#allocation12 + $0xf0] sm:$0xff]
    %v526 = vld [vmem:[#allocation12 + $0xf8] sm:$0xff]
    %v527 = vld [vmem:[#allocation12 + $0x100] sm:$0xff]
    %v528 = vld [vmem:[#allocation12 + $0x108] sm:$0xff]
    %v529 = vld [vmem:[#allocation12 + $0x110] sm:$0xff]
    %v530 = vld [vmem:[#allocation12 + $0x118] sm:$0xff]
    %v531 = vld [vmem:[#allocation12 + $0x120] sm:$0xff]
    %v532 = vld [vmem:[#allocation12 + $0x128] sm:$0xff]
    %v533 = vld [vmem:[#allocation12 + $0x130] sm:$0xff]
    %v534 = vld [vmem:[#allocation12 + $0x138] sm:$0xff]
    %v535 = vld [vmem:[#allocation12 + $0x140] sm:$0xff]
    %v536 = vld [vmem:[#allocation12 + $0x148] sm:$0xff]
    %v537 = vld [vmem:[#allocation12 + $0x150] sm:$0xff]
    %v538 = vld [vmem:[#allocation12 + $0x158] sm:$0xff]
    %v539 = vld [vmem:[#allocation12 + $0x160] sm:$0xff]
    %v540 = vld [vmem:[#allocation12 + $0x168] sm:$0xff]
    %v541 = vld [vmem:[#allocation12 + $0x170] sm:$0xff]
    %v542 = vld [vmem:[#allocation12 + $0x178] sm:$0xff]
    %v543 = vld [vmem:[%s7] sm:$0x7]
    %v545 = vlaneseq
    %v546 = vshrl.u32 %v545, 7
    %v547 = vsub.s32 0, %v546
    %v548 = vrot.slane %v543, %v547
    %v549 = vlaneseq
    %v550 = vshrl.u32 %v549, 7
    %v551 = vsub.s32 1, %v550
    %v552 = vrot.slane %v543, %v551
    %v553 = vlaneseq
    %v554 = vshrl.u32 %v553, 7
    %v555 = vsub.s32 2, %v554
    %v556 = vrot.slane %v543, %v555
    %560 = vmatprep.subr.mxu0 %v541
    %561 = vmatpush1.msra.mxu0 %v540
    %562 = vmatprep.subr.mxu0 %v538
    %563 = vmatpush1.msra.mxu0 %v537
    %564 = vmatprep.subr.mxu0 %v535
    %565 = vmatpush1.msra.mxu0 %v534
    %566 = vmatprep.subr.mxu0 %v532
    %567 = vmatpush1.msra.mxu0 %v531
    %568 = vmatprep.subr.mxu0 %v529
    %569 = vmatpush1.msra.mxu0 %v528
    %570 = vmatprep.subr.mxu0 %v526
    %571 = vmatpush1.msra.mxu0 %v525
    %572 = vmatprep.subr.mxu0 %v523
    %573 = vmatpush1.msra.mxu0 %v522
    %574 = vmatprep.subr.mxu0 %v520
    %575 = vmatpush1.msra.mxu0 %v519
    %576 = vmatprep.subr.mxu0 %v517
    %577 = vmatpush1.msra.mxu0 %v516
    %578 = vmatprep.subr.mxu0 %v514
    %579 = vmatpush1.msra.mxu0 %v513
    %580 = vmatprep.subr.mxu0 %v511
    %581 = vmatpush1.msra.mxu0 %v510
    %582 = vmatprep.subr.mxu0 %v508
    %583 = vmatpush1.msra.mxu0 %v507
    %584 = vmatprep.subr.mxu0 %v505
    %585 = vmatpush1.msra.mxu0 %v504
    %586 = vmatprep.subr.mxu0 %v502
    %587 = vmatpush1.msra.mxu0 %v501
    %588 = vmatprep.subr.mxu0 %v499
    %589 = vmatpush1.msra.mxu0 %v498
    %590 = vmatprep.subr.mxu0 %v496
    %591 = vmatpush1.msra.mxu0 %v495
    %592 = vmatprep.subr.mxu0 0.0
    %593 = vmatpush2.msra.mxu0 0.0
    %594 = vmatprep.subr.mxu0 0.0
    %595 = vmatpush2.msra.mxu0 0.0
    %596 = vmatprep.subr.mxu0 0.0
    %597 = vmatpush2.msra.mxu0 0.0
    %598 = vmatprep.subr.mxu0 0.0
    %599 = vmatpush2.msra.mxu0 0.0
    %600 = vmatprep.subr.mxu0 0.0
    %601 = vmatpush2.msra.mxu0 0.0
    %602 = vmatprep.subr.mxu0 0.0
    %603 = vmatpush2.msra.mxu0 0.0
    %604 = vmatprep.subr.mxu0 0.0
    %605 = vmatpush2.msra.mxu0 0.0
    %606 = vmatprep.subr.mxu0 0.0
    %607 = vmatpush2.msra.mxu0 0.0
    %608 = vmatprep.subr.mxu0 0.0
    %609 = vmatpush2.msra.mxu0 0.0
    %610 = vmatprep.subr.mxu0 0.0
    %611 = vmatpush2.msra.mxu0 0.0
    %612 = vmatprep.subr.mxu0 0.0
    %613 = vmatpush2.msra.mxu0 0.0
    %614 = vmatprep.subr.mxu0 0.0
    %615 = vmatpush2.msra.mxu0 0.0
    %616 = vmatprep.subr.mxu0 0.0
    %617 = vmatpush2.msra.mxu0 0.0
    %618 = vmatprep.subr.mxu0 0.0
    %619 = vmatpush2.msra.mxu0 0.0
    %620 = vmatprep.subr.mxu0 0.0
    %621 = vmatpush2.msra.mxu0 0.0
    %622 = vmatprep.subr.mxu0 0.0
    %623 = vmatpush2.msra.mxu0 0.0
    %624 = vmatprep.mubr.f32.mxu0 0.0
    %625 = vmatmul.mubr.f32.gmra.mxu0 %v487
    %v626 = vpop.f32.mrf.mxu0
    %v627 = vadd.f32 %v548, %v626
    %v628 = vpop.f32.mrf.mxu0
    %v629 = vadd.f32 %v552, %v628
    %630 = vmatprep.mubr.f32.mxu0 0.0
    %631 = vmatmul.mubr.f32.gmra.mxu0 %v488
    %v632 = vpop.f32.mrf.mxu0
    %v633 = vadd.f32 %v548, %v632
    %v634 = vpop.f32.mrf.mxu0
    %v635 = vadd.f32 %v552, %v634
    %636 = vmatprep.mubr.f32.mxu0 0.0
    %637 = vmatmul.mubr.f32.gmra.mxu0 %v489
    %v638 = vpop.f32.mrf.mxu0
    %v639 = vadd.f32 %v548, %v638
    %v640 = vpop.f32.mrf.mxu0
    %v641 = vadd.f32 %v552, %v640
    %642 = vmatprep.mubr.f32.mxu0 0.0
    %643 = vmatmul.mubr.f32.gmra.mxu0 %v490
    %v644 = vpop.f32.mrf.mxu0
    %v645 = vadd.f32 %v548, %v644
    %v646 = vpop.f32.mrf.mxu0
    %v647 = vadd.f32 %v552, %v646
    %648 = vmatprep.mubr.f32.mxu0 0.0
    %649 = vmatmul.mubr.f32.gmra.mxu0 %v491
    %v650 = vpop.f32.mrf.mxu0
    %v651 = vadd.f32 %v548, %v650
    %v652 = vpop.f32.mrf.mxu0
    %v653 = vadd.f32 %v552, %v652
    %654 = vmatprep.mubr.f32.mxu0 0.0
    %655 = vmatmul.mubr.f32.gmra.mxu0 %v492
    %v656 = vpop.f32.mrf.mxu0
    %v657 = vadd.f32 %v548, %v656
    %v658 = vpop.f32.mrf.mxu0
    %v659 = vadd.f32 %v552, %v658
    %660 = vmatprep.mubr.f32.mxu0 0.0
    %661 = vmatmul.mubr.f32.gmra.mxu0 %v493
    %v662 = vpop.f32.mrf.mxu0
    %v663 = vadd.f32 %v548, %v662
    %v664 = vpop.f32.mrf.mxu0
    %v665 = vadd.f32 %v552, %v664
    %666 = vmatprep.mubr.f32.mxu0 0.0
    %667 = vmatmul.mubr.f32.gmra.mxu0 %v494
    %v668 = vpop.f32.mrf.mxu0
    %v669 = vadd.f32 %v548, %v668
    %v670 = vpop.f32.mrf.mxu0
    %v671 = vadd.f32 %v552, %v670
    %672 = vdwg.mxu0
    %673 = vmatprep.subr.mxu0 0.0
    %674 = vmatpush1.msra.mxu0 %v542
    %675 = vmatprep.subr.mxu0 0.0
    %676 = vmatpush1.msra.mxu0 %v539
    %677 = vmatprep.subr.mxu0 0.0
    %678 = vmatpush1.msra.mxu0 %v536
    %679 = vmatprep.subr.mxu0 0.0
    %680 = vmatpush1.msra.mxu0 %v533
    %681 = vmatprep.subr.mxu0 0.0
    %682 = vmatpush1.msra.mxu0 %v530
    %683 = vmatprep.subr.mxu0 0.0
    %684 = vmatpush1.msra.mxu0 %v527
    %685 = vmatprep.subr.mxu0 0.0
    %686 = vmatpush1.msra.mxu0 %v524
    %687 = vmatprep.subr.mxu0 0.0
    %688 = vmatpush1.msra.mxu0 %v521
    %689 = vmatprep.subr.mxu0 0.0
    %690 = vmatpush1.msra.mxu0 %v518
    %691 = vmatprep.subr.mxu0 0.0
    %692 = vmatpush1.msra.mxu0 %v515
    %693 = vmatprep.subr.mxu0 0.0
    %694 = vmatpush1.msra.mxu0 %v512
    %695 = vmatprep.subr.mxu0 0.0
    %696 = vmatpush1.msra.mxu0 %v509
    %697 = vmatprep.subr.mxu0 0.0
    %698 = vmatpush1.msra.mxu0 %v506
    %699 = vmatprep.subr.mxu0 0.0
    %700 = vmatpush1.msra.mxu0 %v503
    %701 = vmatprep.subr.mxu0 0.0
    %702 = vmatpush1.msra.mxu0 %v500
    %703 = vmatprep.subr.mxu0 0.0
    %704 = vmatpush1.msra.mxu0 %v497
    %705 = vmatprep.subr.mxu0 0.0
    %706 = vmatpush2.msra.mxu0 0.0
    %707 = vmatprep.subr.mxu0 0.0
    %708 = vmatpush2.msra.mxu0 0.0
    %709 = vmatprep.subr.mxu0 0.0
    %710 = vmatpush2.msra.mxu0 0.0
    %711 = vmatprep.subr.mxu0 0.0
    %712 = vmatpush2.msra.mxu0 0.0
    %713 = vmatprep.subr.mxu0 0.0
    %714 = vmatpush2.msra.mxu0 0.0
    %715 = vmatprep.subr.mxu0 0.0
    %716 = vmatpush2.msra.mxu0 0.0
    %717 = vmatprep.subr.mxu0 0.0
    %718 = vmatpush2.msra.mxu0 0.0
    %719 = vmatprep.subr.mxu0 0.0
    %720 = vmatpush2.msra.mxu0 0.0
    %721 = vmatprep.subr.mxu0 0.0
    %722 = vmatpush2.msra.mxu0 0.0
    %723 = vmatprep.subr.mxu0 0.0
    %724 = vmatpush2.msra.mxu0 0.0
    %725 = vmatprep.subr.mxu0 0.0
    %726 = vmatpush2.msra.mxu0 0.0
    %727 = vmatprep.subr.mxu0 0.0
    %728 = vmatpush2.msra.mxu0 0.0
    %729 = vmatprep.subr.mxu0 0.0
    %730 = vmatpush2.msra.mxu0 0.0
    %731 = vmatprep.subr.mxu0 0.0
    %732 = vmatpush2.msra.mxu0 0.0
    %733 = vmatprep.subr.mxu0 0.0
    %734 = vmatpush2.msra.mxu0 0.0
    %735 = vmatprep.subr.mxu0 0.0
    %736 = vmatpush2.msra.mxu0 0.0
    %737 = vmatprep.mubr.f32.mxu0 0.0
    %738 = vmatmul.mubr.f32.gmra.mxu0 %v487
    %v739 = vpop.f32.mrf.mxu0
    %v740 = vadd.f32 %v556, %v739
    %v741 = vpop.f32.mrf.mxu0
    %742 = vmatprep.mubr.f32.mxu0 0.0
    %743 = vmatmul.mubr.f32.gmra.mxu0 %v488
    %v744 = vpop.f32.mrf.mxu0
    %v745 = vadd.f32 %v556, %v744
    %v746 = vpop.f32.mrf.mxu0
    %747 = vmatprep.mubr.f32.mxu0 0.0
    %748 = vmatmul.mubr.f32.gmra.mxu0 %v489
    %v749 = vpop.f32.mrf.mxu0
    %v750 = vadd.f32 %v556, %v749
    %v751 = vpop.f32.mrf.mxu0
    %752 = vmatprep.mubr.f32.mxu0 0.0
    %753 = vmatmul.mubr.f32.gmra.mxu0 %v490
    %v754 = vpop.f32.mrf.mxu0
    %v755 = vadd.f32 %v556, %v754
    %v756 = vpop.f32.mrf.mxu0
    %757 = vmatprep.mubr.f32.mxu0 0.0
    %758 = vmatmul.mubr.f32.gmra.mxu0 %v491
    %v759 = vpop.f32.mrf.mxu0
    %v760 = vadd.f32 %v556, %v759
    %v761 = vpop.f32.mrf.mxu0
    %762 = vmatprep.mubr.f32.mxu0 0.0
    %763 = vmatmul.mubr.f32.gmra.mxu0 %v492
    %v764 = vpop.f32.mrf.mxu0
    %v765 = vadd.f32 %v556, %v764
    %v766 = vpop.f32.mrf.mxu0
    %767 = vmatprep.mubr.f32.mxu0 0.0
    %768 = vmatmul.mubr.f32.gmra.mxu0 %v493
    %v769 = vpop.f32.mrf.mxu0
    %v770 = vadd.f32 %v556, %v769
    %v771 = vpop.f32.mrf.mxu0
    %772 = vmatprep.mubr.f32.mxu0 0.0
    %773 = vmatmul.mubr.f32.gmra.mxu0 %v494
    %v774 = vpop.f32.mrf.mxu0
    %v775 = vadd.f32 %v556, %v774
    %v776 = vpop.f32.mrf.mxu0
    %777 = vdwg.mxu0
    %778 = vst [vmem:[#allocation3] sm:$0xff] %v627
    %779 = vst [vmem:[#allocation3 + $0x8] sm:$0xff] %v629
    %780 = vst [vmem:[#allocation3 + $0x10] sm:$0xff] %v740
    %781 = vst [vmem:[#allocation3 + $0x18] sm:$0xff] %v633
    %782 = vst [vmem:[#allocation3 + $0x20] sm:$0xff] %v635
    %783 = vst [vmem:[#allocation3 + $0x28] sm:$0xff] %v745
    %784 = vst [vmem:[#allocation3 + $0x30] sm:$0xff] %v639
    %785 = vst [vmem:[#allocation3 + $0x38] sm:$0xff] %v641
    %786 = vst [vmem:[#allocation3 + $0x40] sm:$0xff] %v750
    %787 = vst [vmem:[#allocation3 + $0x48] sm:$0xff] %v645
    %788 = vst [vmem:[#allocation3 + $0x50] sm:$0xff] %v647
    %789 = vst [vmem:[#allocation3 + $0x58] sm:$0xff] %v755
    %790 = vst [vmem:[#allocation3 + $0x60] sm:$0xff] %v651
    %791 = vst [vmem:[#allocation3 + $0x68] sm:$0xff] %v653
    %792 = vst [vmem:[#allocation3 + $0x70] sm:$0xff] %v760
    %793 = vst [vmem:[#allocation3 + $0x78] sm:$0xff] %v657
    %794 = vst [vmem:[#allocation3 + $0x80] sm:$0xff] %v659
    %795 = vst [vmem:[#allocation3 + $0x88] sm:$0xff] %v765
    %796 = vst [vmem:[#allocation3 + $0x90] sm:$0xff] %v663
    %797 = vst [vmem:[#allocation3 + $0x98] sm:$0xff] %v665
    %798 = vst [vmem:[#allocation3 + $0xa0] sm:$0xff] %v770
    %799 = vst [vmem:[#allocation3 + $0xa8] sm:$0xff] %v669
    %800 = vst [vmem:[#allocation3 + $0xb0] sm:$0xff] %v671
    %801 = vst [vmem:[#allocation3 + $0xb8] sm:$0xff] %v775
    %v802 = vld [vmem:[#allocation14] sm:$0xff]
    %v803 = vld [vmem:[#allocation14 + $0x8] sm:$0xff]
    %v804 = vld [vmem:[#allocation14 + $0x10] sm:$0xff]
    %v805 = vld [vmem:[#allocation14 + $0x18] sm:$0xff]
    %v806 = vld [vmem:[#allocation14 + $0x20] sm:$0xff]
    %v807 = vld [vmem:[#allocation14 + $0x28] sm:$0xff]
    %v808 = vld [vmem:[#allocation14 + $0x30] sm:$0xff]
    %v809 = vld [vmem:[#allocation14 + $0x38] sm:$0xff]
    %v810 = vld [vmem:[#allocation14 + $0x40] sm:$0xff]
    %v811 = vld [vmem:[#allocation14 + $0x48] sm:$0xff]
    %v812 = vld [vmem:[#allocation14 + $0x50] sm:$0xff]
    %v813 = vld [vmem:[#allocation14 + $0x58] sm:$0xff]
    %v814 = vld [vmem:[#allocation14 + $0x60] sm:$0xff]
    %v815 = vld [vmem:[#allocation14 + $0x68] sm:$0xff]
    %v816 = vld [vmem:[#allocation14 + $0x70] sm:$0xff]
    %v817 = vld [vmem:[#allocation14 + $0x78] sm:$0xff]
    %v818 = vld [vmem:[#allocation14 + $0x80] sm:$0xff]
    %v819 = vld [vmem:[#allocation14 + $0x88] sm:$0xff]
    %v820 = vld [vmem:[#allocation14 + $0x90] sm:$0xff]
    %v821 = vld [vmem:[#allocation14 + $0x98] sm:$0xff]
    %v822 = vld [vmem:[#allocation14 + $0xa0] sm:$0xff]
    %v823 = vld [vmem:[#allocation14 + $0xa8] sm:$0xff]
    %v824 = vld [vmem:[#allocation14 + $0xb0] sm:$0xff]
    %v825 = vld [vmem:[#allocation14 + $0xb8] sm:$0xff]
    %v826 = vld [vmem:[#allocation14 + $0xc0] sm:$0xff]
    %v827 = vld [vmem:[#allocation14 + $0xc8] sm:$0xff]
    %v828 = vld [vmem:[#allocation14 + $0xd0] sm:$0xff]
    %v829 = vld [vmem:[#allocation14 + $0xd8] sm:$0xff]
    %v830 = vld [vmem:[#allocation14 + $0xe0] sm:$0xff]
    %v831 = vld [vmem:[#allocation14 + $0xe8] sm:$0xff]
    %v832 = vld [vmem:[#allocation14 + $0xf0] sm:$0xff]
    %v833 = vld [vmem:[#allocation14 + $0xf8] sm:$0xff]
    %v834 = vld [vmem:[#allocation14 + $0x100] sm:$0xff]
    %v835 = vld [vmem:[#allocation14 + $0x108] sm:$0xff]
    %v836 = vld [vmem:[#allocation14 + $0x110] sm:$0xff]
    %v837 = vld [vmem:[#allocation14 + $0x118] sm:$0xff]
    %v838 = vld [vmem:[#allocation14 + $0x120] sm:$0xff]
    %v839 = vld [vmem:[#allocation14 + $0x128] sm:$0xff]
    %v840 = vld [vmem:[#allocation14 + $0x130] sm:$0xff]
    %v841 = vld [vmem:[#allocation14 + $0x138] sm:$0xff]
    %v842 = vld [vmem:[#allocation14 + $0x140] sm:$0xff]
    %v843 = vld [vmem:[#allocation14 + $0x148] sm:$0xff]
    %v844 = vld [vmem:[#allocation14 + $0x150] sm:$0xff]
    %v845 = vld [vmem:[#allocation14 + $0x158] sm:$0xff]
    %v846 = vld [vmem:[#allocation14 + $0x160] sm:$0xff]
    %v847 = vld [vmem:[#allocation14 + $0x168] sm:$0xff]
    %v848 = vld [vmem:[#allocation14 + $0x170] sm:$0xff]
    %v849 = vld [vmem:[#allocation14 + $0x178] sm:$0xff]
    %v850 = vld [vmem:[#allocation15] sm:$0xff]
    %v851 = vld [vmem:[#allocation15 + $0x8] sm:$0xff]
    %v852 = vld [vmem:[#allocation15 + $0x10] sm:$0xff]
    %v853 = vld [vmem:[#allocation15 + $0x18] sm:$0xff]
    %v854 = vld [vmem:[#allocation15 + $0x20] sm:$0xff]
    %v855 = vld [vmem:[#allocation15 + $0x28] sm:$0xff]
    %v856 = vld [vmem:[#allocation15 + $0x30] sm:$0xff]
    %v857 = vld [vmem:[#allocation15 + $0x38] sm:$0xff]
    %v858 = vld [vmem:[#allocation15 + $0x40] sm:$0xff]
    %v859 = vld [vmem:[#allocation15 + $0x48] sm:$0xff]
    %v860 = vld [vmem:[#allocation15 + $0x50] sm:$0xff]
    %v861 = vld [vmem:[#allocation15 + $0x58] sm:$0xff]
    %v862 = vld [vmem:[#allocation15 + $0x60] sm:$0xff]
    %v863 = vld [vmem:[#allocation15 + $0x68] sm:$0xff]
    %v864 = vld [vmem:[#allocation15 + $0x70] sm:$0xff]
    %v865 = vld [vmem:[#allocation15 + $0x78] sm:$0xff]
    %v866 = vld [vmem:[#allocation15 + $0x80] sm:$0xff]
    %v867 = vld [vmem:[#allocation15 + $0x88] sm:$0xff]
    %v868 = vld [vmem:[#allocation15 + $0x90] sm:$0xff]
    %v869 = vld [vmem:[#allocation15 + $0x98] sm:$0xff]
    %v870 = vld [vmem:[#allocation15 + $0xa0] sm:$0xff]
    %v871 = vld [vmem:[#allocation15 + $0xa8] sm:$0xff]
    %v872 = vld [vmem:[#allocation15 + $0xb0] sm:$0xff]
    %v873 = vld [vmem:[#allocation15 + $0xb8] sm:$0xff]
    %v874 = vld [vmem:[#allocation15 + $0xc0] sm:$0xff]
    %v875 = vld [vmem:[#allocation15 + $0xc8] sm:$0xff]
    %v876 = vld [vmem:[#allocation15 + $0xd0] sm:$0xff]
    %v877 = vld [vmem:[#allocation15 + $0xd8] sm:$0xff]
    %v878 = vld [vmem:[#allocation15 + $0xe0] sm:$0xff]
    %v879 = vld [vmem:[#allocation15 + $0xe8] sm:$0xff]
    %v880 = vld [vmem:[#allocation15 + $0xf0] sm:$0xff]
    %v881 = vld [vmem:[#allocation15 + $0xf8] sm:$0xff]
    %v882 = vld [vmem:[#allocation15 + $0x100] sm:$0xff]
    %v883 = vld [vmem:[#allocation15 + $0x108] sm:$0xff]
    %v884 = vld [vmem:[#allocation15 + $0x110] sm:$0xff]
    %v885 = vld [vmem:[#allocation15 + $0x118] sm:$0xff]
    %v886 = vld [vmem:[#allocation15 + $0x120] sm:$0xff]
    %v887 = vld [vmem:[#allocation15 + $0x128] sm:$0xff]
    %v888 = vld [vmem:[#allocation15 + $0x130] sm:$0xff]
    %v889 = vld [vmem:[#allocation15 + $0x138] sm:$0xff]
    %v890 = vld [vmem:[#allocation15 + $0x140] sm:$0xff]
    %v891 = vld [vmem:[#allocation15 + $0x148] sm:$0xff]
    %v892 = vld [vmem:[#allocation15 + $0x150] sm:$0xff]
    %v893 = vld [vmem:[#allocation15 + $0x158] sm:$0xff]
    %v894 = vld [vmem:[#allocation15 + $0x160] sm:$0xff]
    %v895 = vld [vmem:[#allocation15 + $0x168] sm:$0xff]
    %v896 = vld [vmem:[#allocation15 + $0x170] sm:$0xff]
    %v897 = vld [vmem:[#allocation15 + $0x178] sm:$0xff]
    %v898 = vld [vmem:[%s8] sm:$0x1]
    %v900 = vlaneseq
    %v901 = vshrl.u32 %v900, 7
    %v902 = vsub.s32 0, %v901
    %v903 = vrot.slane %v898, %v902
    %v905 = vld [vmem:[%s9] sm:$0x1]
    %v907 = vlaneseq
    %v908 = vshrl.u32 %v907, 7
    %v909 = vsub.s32 0, %v908
    %v910 = vrot.slane %v905, %v909
    %s912 = smul.u32 0, 8
    %s913 = ssub.s32 0, 0
    %s914 = smul.u32 %s913, 8
    %v915 = vld [vmem:[#allocation4] sm:$0xff]
    %v916 = vld [vmem:[#allocation5] sm:$0xff]
    %917 = vmatprep.subr.mxu0 %v848
    %918 = vmatpush1.msra.mxu0 %v847
    %919 = vmatprep.subr.mxu0 %v845
    %920 = vmatpush1.msra.mxu0 %v844
    %921 = vmatprep.subr.mxu0 %v842
    %922 = vmatpush1.msra.mxu0 %v841
    %923 = vmatprep.subr.mxu0 %v839
    %924 = vmatpush1.msra.mxu0 %v838
    %925 = vmatprep.subr.mxu0 %v836
    %926 = vmatpush1.msra.mxu0 %v835
    %927 = vmatprep.subr.mxu0 %v833
    %928 = vmatpush1.msra.mxu0 %v832
    %929 = vmatprep.subr.mxu0 %v830
    %930 = vmatpush1.msra.mxu0 %v829
    %931 = vmatprep.subr.mxu0 %v827
    %932 = vmatpush1.msra.mxu0 %v826
    %933 = vmatprep.subr.mxu0 %v824
    %934 = vmatpush1.msra.mxu0 %v823
    %935 = vmatprep.subr.mxu0 %v821
    %936 = vmatpush1.msra.mxu0 %v820
    %937 = vmatprep.subr.mxu0 %v818
    %938 = vmatpush1.msra.mxu0 %v817
    %939 = vmatprep.subr.mxu0 %v815
    %940 = vmatpush1.msra.mxu0 %v814
    %941 = vmatprep.subr.mxu0 %v812
    %942 = vmatpush1.msra.mxu0 %v811
    %943 = vmatprep.subr.mxu0 %v809
    %944 = vmatpush1.msra.mxu0 %v808
    %945 = vmatprep.subr.mxu0 %v806
    %946 = vmatpush1.msra.mxu0 %v805
    %947 = vmatprep.subr.mxu0 %v803
    %948 = vmatpush1.msra.mxu0 %v802
    %949 = vmatprep.subr.mxu0 0.0
    %950 = vmatpush2.msra.mxu0 0.0
    %951 = vmatprep.subr.mxu0 0.0
    %952 = vmatpush2.msra.mxu0 0.0
    %953 = vmatprep.subr.mxu0 0.0
    %954 = vmatpush2.msra.mxu0 0.0
    %955 = vmatprep.subr.mxu0 0.0
    %956 = vmatpush2.msra.mxu0 0.0
    %957 = vmatprep.subr.mxu0 0.0
    %958 = vmatpush2.msra.mxu0 0.0
    %959 = vmatprep.subr.mxu0 0.0
    %960 = vmatpush2.msra.mxu0 0.0
    %961 = vmatprep.subr.mxu0 0.0
    %962 = vmatpush2.msra.mxu0 0.0
    %963 = vmatprep.subr.mxu0 0.0
    %964 = vmatpush2.msra.mxu0 0.0
    %965 = vmatprep.subr.mxu0 0.0
    %966 = vmatpush2.msra.mxu0 0.0
    %967 = vmatprep.subr.mxu0 0.0
    %968 = vmatpush2.msra.mxu0 0.0
    %969 = vmatprep.subr.mxu0 0.0
    %970 = vmatpush2.msra.mxu0 0.0
    %971 = vmatprep.subr.mxu0 0.0
    %972 = vmatpush2.msra.mxu0 0.0
    %973 = vmatprep.subr.mxu0 0.0
    %974 = vmatpush2.msra.mxu0 0.0
    %975 = vmatprep.subr.mxu0 0.0
    %976 = vmatpush2.msra.mxu0 0.0
    %977 = vmatprep.subr.mxu0 0.0
    %978 = vmatpush2.msra.mxu0 0.0
    %979 = vmatprep.subr.mxu0 0.0
    %980 = vmatpush2.msra.mxu0 0.0
    %981 = vmatprep.mubr.f32.mxu0 0.0
    %982 = vmatmul.mubr.f32.gmra.mxu0 %v915
    %v983 = vpop.f32.mrf.mxu0
    %v984 = vadd.f32 0.0, %v983
    %v985 = vpop.f32.mrf.mxu0
    %v986 = vadd.f32 0.0, %v985
    %987 = vdwg.mxu0
    %988 = vmatprep.subr.mxu0 0.0
    %989 = vmatpush1.msra.mxu0 %v849
    %990 = vmatprep.subr.mxu0 0.0
    %991 = vmatpush1.msra.mxu0 %v846
    %992 = vmatprep.subr.mxu0 0.0
    %993 = vmatpush1.msra.mxu0 %v843
    %994 = vmatprep.subr.mxu0 0.0
    %995 = vmatpush1.msra.mxu0 %v840
    %996 = vmatprep.subr.mxu0 0.0
    %997 = vmatpush1.msra.mxu0 %v837
    %998 = vmatprep.subr.mxu0 0.0
    %999 = vmatpush1.msra.mxu0 %v834
    %1000 = vmatprep.subr.mxu0 0.0
    %1001 = vmatpush1.msra.mxu0 %v831
    %1002 = vmatprep.subr.mxu0 0.0
    %1003 = vmatpush1.msra.mxu0 %v828
    %1004 = vmatprep.subr.mxu0 0.0
    %1005 = vmatpush1.msra.mxu0 %v825
    %1006 = vmatprep.subr.mxu0 0.0
    %1007 = vmatpush1.msra.mxu0 %v822
    %1008 = vmatprep.subr.mxu0 0.0
    %1009 = vmatpush1.msra.mxu0 %v819
    %1010 = vmatprep.subr.mxu0 0.0
    %1011 = vmatpush1.msra.mxu0 %v816
    %1012 = vmatprep.subr.mxu0 0.0
    %1013 = vmatpush1.msra.mxu0 %v813
    %1014 = vmatprep.subr.mxu0 0.0
    %1015 = vmatpush1.msra.mxu0 %v810
    %1016 = vmatprep.subr.mxu0 0.0
    %1017 = vmatpush1.msra.mxu0 %v807
    %1018 = vmatprep.subr.mxu0 0.0
    %1019 = vmatpush1.msra.mxu0 %v804
    %1020 = vmatprep.subr.mxu0 0.0
    %1021 = vmatpush2.msra.mxu0 0.0
    %1022 = vmatprep.subr.mxu0 0.0
    %1023 = vmatpush2.msra.mxu0 0.0
    %1024 = vmatprep.subr.mxu0 0.0
    %1025 = vmatpush2.msra.mxu0 0.0
    %1026 = vmatprep.subr.mxu0 0.0
    %1027 = vmatpush2.msra.mxu0 0.0
    %1028 = vmatprep.subr.mxu0 0.0
    %1029 = vmatpush2.msra.mxu0 0.0
    %1030 = vmatprep.subr.mxu0 0.0
    %1031 = vmatpush2.msra.mxu0 0.0
    %1032 = vmatprep.subr.mxu0 0.0
    %1033 = vmatpush2.msra.mxu0 0.0
    %1034 = vmatprep.subr.mxu0 0.0
    %1035 = vmatpush2.msra.mxu0 0.0
    %1036 = vmatprep.subr.mxu0 0.0
    %1037 = vmatpush2.msra.mxu0 0.0
    %1038 = vmatprep.subr.mxu0 0.0
    %1039 = vmatpush2.msra.mxu0 0.0
    %1040 = vmatprep.subr.mxu0 0.0
    %1041 = vmatpush2.msra.mxu0 0.0
    %1042 = vmatprep.subr.mxu0 0.0
    %1043 = vmatpush2.msra.mxu0 0.0
    %1044 = vmatprep.subr.mxu0 0.0
    %1045 = vmatpush2.msra.mxu0 0.0
    %1046 = vmatprep.subr.mxu0 0.0
    %1047 = vmatpush2.msra.mxu0 0.0
    %1048 = vmatprep.subr.mxu0 0.0
    %1049 = vmatpush2.msra.mxu0 0.0
    %1050 = vmatprep.subr.mxu0 0.0
    %1051 = vmatpush2.msra.mxu0 0.0
    %1052 = vmatprep.mubr.f32.mxu0 0.0
    %1053 = vmatmul.mubr.f32.gmra.mxu0 %v915
    %v1054 = vpop.f32.mrf.mxu0
    %v1055 = vadd.f32 0.0, %v1054
    %v1056 = vpop.f32.mrf.mxu0
    %1057 = vdwg.mxu0
    %1058 = vmatprep.subr.mxu0 %v896
    %1059 = vmatpush1.msra.mxu0 %v895
    %1060 = vmatprep.subr.mxu0 %v893
    %1061 = vmatpush1.msra.mxu0 %v892
    %1062 = vmatprep.subr.mxu0 %v890
    %1063 = vmatpush1.msra.mxu0 %v889
    %1064 = vmatprep.subr.mxu0 %v887
    %1065 = vmatpush1.msra.mxu0 %v886
    %1066 = vmatprep.subr.mxu0 %v884
    %1067 = vmatpush1.msra.mxu0 %v883
    %1068 = vmatprep.subr.mxu0 %v881
    %1069 = vmatpush1.msra.mxu0 %v880
    %1070 = vmatprep.subr.mxu0 %v878
    %1071 = vmatpush1.msra.mxu0 %v877
    %1072 = vmatprep.subr.mxu0 %v875
    %1073 = vmatpush1.msra.mxu0 %v874
    %1074 = vmatprep.subr.mxu0 %v872
    %1075 = vmatpush1.msra.mxu0 %v871
    %1076 = vmatprep.subr.mxu0 %v869
    %1077 = vmatpush1.msra.mxu0 %v868
    %1078 = vmatprep.subr.mxu0 %v866
    %1079 = vmatpush1.msra.mxu0 %v865
    %1080 = vmatprep.subr.mxu0 %v863
    %1081 = vmatpush1.msra.mxu0 %v862
    %1082 = vmatprep.subr.mxu0 %v860
    %1083 = vmatpush1.msra.mxu0 %v859
    %1084 = vmatprep.subr.mxu0 %v857
    %1085 = vmatpush1.msra.mxu0 %v856
    %1086 = vmatprep.subr.mxu0 %v854
    %1087 = vmatpush1.msra.mxu0 %v853
    %1088 = vmatprep.subr.mxu0 %v851
    %1089 = vmatpush1.msra.mxu0 %v850
    %1090 = vmatprep.subr.mxu0 0.0
    %1091 = vmatpush2.msra.mxu0 0.0
    %1092 = vmatprep.subr.mxu0 0.0
    %1093 = vmatpush2.msra.mxu0 0.0
    %1094 = vmatprep.subr.mxu0 0.0
    %1095 = vmatpush2.msra.mxu0 0.0
    %1096 = vmatprep.subr.mxu0 0.0
    %1097 = vmatpush2.msra.mxu0 0.0
    %1098 = vmatprep.subr.mxu0 0.0
    %1099 = vmatpush2.msra.mxu0 0.0
    %1100 = vmatprep.subr.mxu0 0.0
    %1101 = vmatpush2.msra.mxu0 0.0
    %1102 = vmatprep.subr.mxu0 0.0
    %1103 = vmatpush2.msra.mxu0 0.0
    %1104 = vmatprep.subr.mxu0 0.0
    %1105 = vmatpush2.msra.mxu0 0.0
    %1106 = vmatprep.subr.mxu0 0.0
    %1107 = vmatpush2.msra.mxu0 0.0
    %1108 = vmatprep.subr.mxu0 0.0
    %1109 = vmatpush2.msra.mxu0 0.0
    %1110 = vmatprep.subr.mxu0 0.0
    %1111 = vmatpush2.msra.mxu0 0.0
    %1112 = vmatprep.subr.mxu0 0.0
    %1113 = vmatpush2.msra.mxu0 0.0
    %1114 = vmatprep.subr.mxu0 0.0
    %1115 = vmatpush2.msra.mxu0 0.0
    %1116 = vmatprep.subr.mxu0 0.0
    %1117 = vmatpush2.msra.mxu0 0.0
    %1118 = vmatprep.subr.mxu0 0.0
    %1119 = vmatpush2.msra.mxu0 0.0
    %1120 = vmatprep.subr.mxu0 0.0
    %1121 = vmatpush2.msra.mxu0 0.0
    %1122 = vmatprep.mubr.f32.mxu0 0.0
    %1123 = vmatmul.mubr.f32.gmra.mxu0 %v916
    %v1124 = vpop.f32.mrf.mxu0
    %v1125 = vadd.f32 0.0, %v1124
    %v1126 = vpop.f32.mrf.mxu0
    %v1127 = vadd.f32 0.0, %v1126
    %1128 = vdwg.mxu0
    %1129 = vmatprep.subr.mxu0 0.0
    %1130 = vmatpush1.msra.mxu0 %v897
    %1131 = vmatprep.subr.mxu0 0.0
    %1132 = vmatpush1.msra.mxu0 %v894
    %1133 = vmatprep.subr.mxu0 0.0
    %1134 = vmatpush1.msra.mxu0 %v891
    %1135 = vmatprep.subr.mxu0 0.0
    %1136 = vmatpush1.msra.mxu0 %v888
    %1137 = vmatprep.subr.mxu0 0.0
    %1138 = vmatpush1.msra.mxu0 %v885
    %1139 = vmatprep.subr.mxu0 0.0
    %1140 = vmatpush1.msra.mxu0 %v882
    %1141 = vmatprep.subr.mxu0 0.0
    %1142 = vmatpush1.msra.mxu0 %v879
    %1143 = vmatprep.subr.mxu0 0.0
    %1144 = vmatpush1.msra.mxu0 %v876
    %1145 = vmatprep.subr.mxu0 0.0
    %1146 = vmatpush1.msra.mxu0 %v873
    %1147 = vmatprep.subr.mxu0 0.0
    %1148 = vmatpush1.msra.mxu0 %v870
    %1149 = vmatprep.subr.mxu0 0.0
    %1150 = vmatpush1.msra.mxu0 %v867
    %1151 = vmatprep.subr.mxu0 0.0
    %1152 = vmatpush1.msra.mxu0 %v864
    %1153 = vmatprep.subr.mxu0 0.0
    %1154 = vmatpush1.msra.mxu0 %v861
    %1155 = vmatprep.subr.mxu0 0.0
    %1156 = vmatpush1.msra.mxu0 %v858
    %1157 = vmatprep.subr.mxu0 0.0
    %1158 = vmatpush1.msra.mxu0 %v855
    %1159 = vmatprep.subr.mxu0 0.0
    %1160 = vmatpush1.msra.mxu0 %v852
    %1161 = vmatprep.subr.mxu0 0.0
    %1162 = vmatpush2.msra.mxu0 0.0
    %1163 = vmatprep.subr.mxu0 0.0
    %1164 = vmatpush2.msra.mxu0 0.0
    %1165 = vmatprep.subr.mxu0 0.0
    %1166 = vmatpush2.msra.mxu0 0.0
    %1167 = vmatprep.subr.mxu0 0.0
    %1168 = vmatpush2.msra.mxu0 0.0
    %1169 = vmatprep.subr.mxu0 0.0
    %1170 = vmatpush2.msra.mxu0 0.0
    %1171 = vmatprep.subr.mxu0 0.0
    %1172 = vmatpush2.msra.mxu0 0.0
    %1173 = vmatprep.subr.mxu0 0.0
    %1174 = vmatpush2.msra.mxu0 0.0
    %1175 = vmatprep.subr.mxu0 0.0
    %1176 = vmatpush2.msra.mxu0 0.0
    %1177 = vmatprep.subr.mxu0 0.0
    %1178 = vmatpush2.msra.mxu0 0.0
    %1179 = vmatprep.subr.mxu0 0.0
    %1180 = vmatpush2.msra.mxu0 0.0
    %1181 = vmatprep.subr.mxu0 0.0
    %1182 = vmatpush2.msra.mxu0 0.0
    %1183 = vmatprep.subr.mxu0 0.0
    %1184 = vmatpush2.msra.mxu0 0.0
    %1185 = vmatprep.subr.mxu0 0.0
    %1186 = vmatpush2.msra.mxu0 0.0
    %1187 = vmatprep.subr.mxu0 0.0
    %1188 = vmatpush2.msra.mxu0 0.0
    %1189 = vmatprep.subr.mxu0 0.0
    %1190 = vmatpush2.msra.mxu0 0.0
    %1191 = vmatprep.subr.mxu0 0.0
    %1192 = vmatpush2.msra.mxu0 0.0
    %1193 = vmatprep.mubr.f32.mxu0 0.0
    %1194 = vmatmul.mubr.f32.gmra.mxu0 %v916
    %v1195 = vpop.f32.mrf.mxu0
    %v1196 = vadd.f32 0.0, %v1195
    %v1197 = vpop.f32.mrf.mxu0
    %1198 = vdwg.mxu0
    %s1199 = smul.u32 0, 3
    %s1200 = smul.addr %s1199, 8
    %s1201 = scalar_lea.vmem [#allocation2], %s1200
    %v1202 = vld [vmem:[%s1201] sm:$0xff]
    %v1203 = vld [vmem:[%s1201 + $0x8] sm:$0xff]
    %v1204 = vld [vmem:[%s1201 + $0x10] sm:$0xff]
    %v1205 = vadd.f32 %v1202, %v984
    %v1206 = vxor.u32 %v1205, 2147483648
    %v1207 = vmul.f32 %v1206, 1.442695
    %v1208 = vpow.pop %v1207
    %v1209 = vadd.f32 %v1208, 1.0
    %v1210 = vrcp.pop %v1209
    %v1211 = vmul.f32 1.0, %v1210
    %v1212 = vadd.f32 %v1203, %v986
    %v1213 = vxor.u32 %v1212, 2147483648
    %v1214 = vmul.f32 %v1213, 1.442695
    %v1215 = vpow.pop %v1214
    %v1216 = vadd.f32 %v1215, 1.0
    %v1217 = vrcp.pop %v1216
    %v1218 = vmul.f32 1.0, %v1217
    %v1219 = vadd.f32 %v1055, %v903
    %v1220 = vmul.f32 %v1211, %v1219
    %v1221 = vadd.f32 %v1204, %v1220
    %v1222 = vtanh.pop %v1221
    %v1223 = vsub.f32 1.0, %v1218
    %v1224 = vmul.f32 %v1223, %v1222
    %v1225 = vmul.f32 %v1218, %v915
    %v1226 = vadd.f32 %v1224, %v1225
    %s1227 = smul.u32 7, 3
    %s1228 = smul.addr %s1227, 8
    %s1229 = scalar_lea.vmem [#allocation3], %s1228
    %v1230 = vld [vmem:[%s1229] sm:$0xff]
    %v1231 = vld [vmem:[%s1229 + $0x8] sm:$0xff]
    %v1232 = vld [vmem:[%s1229 + $0x10] sm:$0xff]
    %v1233 = vadd.f32 %v1230, %v1125
    %v1234 = vxor.u32 %v1233, 2147483648
    %v1235 = vmul.f32 %v1234, 1.442695
    %v1236 = vpow.pop %v1235
    %v1237 = vadd.f32 %v1236, 1.0
    %v1238 = vrcp.pop %v1237
    %v1239 = vmul.f32 1.0, %v1238
    %v1240 = vadd.f32 %v1231, %v1127
    %v1241 = vxor.u32 %v1240, 2147483648
    %v1242 = vmul.f32 %v1241, 1.442695
    %v1243 = vpow.pop %v1242
    %v1244 = vadd.f32 %v1243, 1.0
    %v1245 = vrcp.pop %v1244
    %v1246 = vmul.f32 1.0, %v1245
    %v1247 = vadd.f32 %v1196, %v910
    %v1248 = vmul.f32 %v1239, %v1247
    %v1249 = vadd.f32 %v1232, %v1248
    %v1250 = vtanh.pop %v1249
    %v1251 = vsub.f32 1.0, %v1246
    %v1252 = vmul.f32 %v1251, %v1250
    %v1253 = vmul.f32 %v1246, %v916
    %v1254 = vadd.f32 %v1252, %v1253
    %p1255 = scmp.lt.s32.totalorder %s912, 8
    %s1256 = scalar_select %p1255, 1, 0
    %v1257 = vstv %s1256
    %vm1258 = vcmp.eq.s32.totalorder %v1257, 1
    %v1259 = vsel %vm1258, %v1226, %v915
    %s1260 = sadd.s32 %s914, 7
    %p1261 = scmp.lt.s32.totalorder %s1260, 8
    %s1262 = scalar_select %p1261, 1, 0
    %v1263 = vstv %s1262
    %vm1264 = vcmp.eq.s32.totalorder %v1263, 1
    %v1265 = vsel %vm1264, %v1254, %v916
    %1266 = vst [vmem:[#allocation20] sm:$0xff] %v1259
    %s1267 = scalar_lea.vmem [#allocation21], 56
    %1268 = vst [vmem:[%s1267] sm:$0xff] %v1265
    %1269 = vmatprep.subr.mxu0 %v848
    %1270 = vmatpush1.msra.mxu0 %v847
    %1271 = vmatprep.subr.mxu0 %v845
    %1272 = vmatpush1.msra.mxu0 %v844
    %1273 = vmatprep.subr.mxu0 %v842
    %1274 = vmatpush1.msra.mxu0 %v841
    %1275 = vmatprep.subr.mxu0 %v839
    %1276 = vmatpush1.msra.mxu0 %v838
    %1277 = vmatprep.subr.mxu0 %v836
    %1278 = vmatpush1.msra.mxu0 %v835
    %1279 = vmatprep.subr.mxu0 %v833
    %1280 = vmatpush1.msra.mxu0 %v832
    %1281 = vmatprep.subr.mxu0 %v830
    %1282 = vmatpush1.msra.mxu0 %v829
    %1283 = vmatprep.subr.mxu0 %v827
    %1284 = vmatpush1.msra.mxu0 %v826
    %1285 = vmatprep.subr.mxu0 %v824
    %1286 = vmatpush1.msra.mxu0 %v823
    %1287 = vmatprep.subr.mxu0 %v821
    %1288 = vmatpush1.msra.mxu0 %v820
    %1289 = vmatprep.subr.mxu0 %v818
    %1290 = vmatpush1.msra.mxu0 %v817
    %1291 = vmatprep.subr.mxu0 %v815
    %1292 = vmatpush1.msra.mxu0 %v814
    %1293 = vmatprep.subr.mxu0 %v812
    %1294 = vmatpush1.msra.mxu0 %v811
    %1295 = vmatprep.subr.mxu0 %v809
    %1296 = vmatpush1.msra.mxu0 %v808
    %1297 = vmatprep.subr.mxu0 %v806
    %1298 = vmatpush1.msra.mxu0 %v805
    %1299 = vmatprep.subr.mxu0 %v803
    %1300 = vmatpush1.msra.mxu0 %v802
    %1301 = vmatprep.subr.mxu0 0.0
    %1302 = vmatpush2.msra.mxu0 0.0
    %1303 = vmatprep.subr.mxu0 0.0
    %1304 = vmatpush2.msra.mxu0 0.0
    %1305 = vmatprep.subr.mxu0 0.0
    %1306 = vmatpush2.msra.mxu0 0.0
    %1307 = vmatprep.subr.mxu0 0.0
    %1308 = vmatpush2.msra.mxu0 0.0
    %1309 = vmatprep.subr.mxu0 0.0
    %1310 = vmatpush2.msra.mxu0 0.0
    %1311 = vmatprep.subr.mxu0 0.0
    %1312 = vmatpush2.msra.mxu0 0.0
    %1313 = vmatprep.subr.mxu0 0.0
    %1314 = vmatpush2.msra.mxu0 0.0
    %1315 = vmatprep.subr.mxu0 0.0
    %1316 = vmatpush2.msra.mxu0 0.0
    %1317 = vmatprep.subr.mxu0 0.0
    %1318 = vmatpush2.msra.mxu0 0.0
    %1319 = vmatprep.subr.mxu0 0.0
    %1320 = vmatpush2.msra.mxu0 0.0
    %1321 = vmatprep.subr.mxu0 0.0
    %1322 = vmatpush2.msra.mxu0 0.0
    %1323 = vmatprep.subr.mxu0 0.0
    %1324 = vmatpush2.msra.mxu0 0.0
    %1325 = vmatprep.subr.mxu0 0.0
    %1326 = vmatpush2.msra.mxu0 0.0
    %1327 = vmatprep.subr.mxu0 0.0
    %1328 = vmatpush2.msra.mxu0 0.0
    %1329 = vmatprep.subr.mxu0 0.0
    %1330 = vmatpush2.msra.mxu0 0.0
    %1331 = vmatprep.subr.mxu0 0.0
    %1332 = vmatpush2.msra.mxu0 0.0
    %1333 = vmatprep.mubr.f32.mxu0 0.0
    %1334 = vmatmul.mubr.f32.gmra.mxu0 %v1259
    %v1335 = vpop.f32.mrf.mxu0
    %v1336 = vadd.f32 0.0, %v1335
    %v1337 = vpop.f32.mrf.mxu0
    %v1338 = vadd.f32 0.0, %v1337
    %1339 = vdwg.mxu0
    %1340 = vmatprep.subr.mxu0 0.0
    %1341 = vmatpush1.msra.mxu0 %v849
    %1342 = vmatprep.subr.mxu0 0.0
    %1343 = vmatpush1.msra.mxu0 %v846
    %1344 = vmatprep.subr.mxu0 0.0
    %1345 = vmatpush1.msra.mxu0 %v843
    %1346 = vmatprep.subr.mxu0 0.0
    %1347 = vmatpush1.msra.mxu0 %v840
    %1348 = vmatprep.subr.mxu0 0.0
    %1349 = vmatpush1.msra.mxu0 %v837
    %1350 = vmatprep.subr.mxu0 0.0
    %1351 = vmatpush1.msra.mxu0 %v834
    %1352 = vmatprep.subr.mxu0 0.0
    %1353 = vmatpush1.msra.mxu0 %v831
    %1354 = vmatprep.subr.mxu0 0.0
    %1355 = vmatpush1.msra.mxu0 %v828
    %1356 = vmatprep.subr.mxu0 0.0
    %1357 = vmatpush1.msra.mxu0 %v825
    %1358 = vmatprep.subr.mxu0 0.0
    %1359 = vmatpush1.msra.mxu0 %v822
    %1360 = vmatprep.subr.mxu0 0.0
    %1361 = vmatpush1.msra.mxu0 %v819
    %1362 = vmatprep.subr.mxu0 0.0
    %1363 = vmatpush1.msra.mxu0 %v816
    %1364 = vmatprep.subr.mxu0 0.0
    %1365 = vmatpush1.msra.mxu0 %v813
    %1366 = vmatprep.subr.mxu0 0.0
    %1367 = vmatpush1.msra.mxu0 %v810
    %1368 = vmatprep.subr.mxu0 0.0
    %1369 = vmatpush1.msra.mxu0 %v807
    %1370 = vmatprep.subr.mxu0 0.0
    %1371 = vmatpush1.msra.mxu0 %v804
    %1372 = vmatprep.subr.mxu0 0.0
    %1373 = vmatpush2.msra.mxu0 0.0
    %1374 = vmatprep.subr.mxu0 0.0
    %1375 = vmatpush2.msra.mxu0 0.0
    %1376 = vmatprep.subr.mxu0 0.0
    %1377 = vmatpush2.msra.mxu0 0.0
    %1378 = vmatprep.subr.mxu0 0.0
    %1379 = vmatpush2.msra.mxu0 0.0
    %1380 = vmatprep.subr.mxu0 0.0
    %1381 = vmatpush2.msra.mxu0 0.0
    %1382 = vmatprep.subr.mxu0 0.0
    %1383 = vmatpush2.msra.mxu0 0.0
    %1384 = vmatprep.subr.mxu0 0.0
    %1385 = vmatpush2.msra.mxu0 0.0
    %1386 = vmatprep.subr.mxu0 0.0
    %1387 = vmatpush2.msra.mxu0 0.0
    %1388 = vmatprep.subr.mxu0 0.0
    %1389 = vmatpush2.msra.mxu0 0.0
    %1390 = vmatprep.subr.mxu0 0.0
    %1391 = vmatpush2.msra.mxu0 0.0
    %1392 = vmatprep.subr.mxu0 0.0
    %1393 = vmatpush2.msra.mxu0 0.0
    %1394 = vmatprep.subr.mxu0 0.0
    %1395 = vmatpush2.msra.mxu0 0.0
    %1396 = vmatprep.subr.mxu0 0.0
    %1397 = vmatpush2.msra.mxu0 0.0
    %1398 = vmatprep.subr.mxu0 0.0
    %1399 = vmatpush2.msra.mxu0 0.0
    %1400 = vmatprep.subr.mxu0 0.0
    %1401 = vmatpush2.msra.mxu0 0.0
    %1402 = vmatprep.subr.mxu0 0.0
    %1403 = vmatpush2.msra.mxu0 0.0
    %1404 = vmatprep.mubr.f32.mxu0 0.0
    %1405 = vmatmul.mubr.f32.gmra.mxu0 %v1259
    %v1406 = vpop.f32.mrf.mxu0
    %v1407 = vadd.f32 0.0, %v1406
    %v1408 = vpop.f32.mrf.mxu0
    %1409 = vdwg.mxu0
    %1410 = vmatprep.subr.mxu0 %v896
    %1411 = vmatpush1.msra.mxu0 %v895
    %1412 = vmatprep.subr.mxu0 %v893
    %1413 = vmatpush1.msra.mxu0 %v892
    %1414 = vmatprep.subr.mxu0 %v890
    %1415 = vmatpush1.msra.mxu0 %v889
    %1416 = vmatprep.subr.mxu0 %v887
    %1417 = vmatpush1.msra.mxu0 %v886
    %1418 = vmatprep.subr.mxu0 %v884
    %1419 = vmatpush1.msra.mxu0 %v883
    %1420 = vmatprep.subr.mxu0 %v881
    %1421 = vmatpush1.msra.mxu0 %v880
    %1422 = vmatprep.subr.mxu0 %v878
    %1423 = vmatpush1.msra.mxu0 %v877
    %1424 = vmatprep.subr.mxu0 %v875
    %1425 = vmatpush1.msra.mxu0 %v874
    %1426 = vmatprep.subr.mxu0 %v872
    %1427 = vmatpush1.msra.mxu0 %v871
    %1428 = vmatprep.subr.mxu0 %v869
    %1429 = vmatpush1.msra.mxu0 %v868
    %1430 = vmatprep.subr.mxu0 %v866
    %1431 = vmatpush1.msra.mxu0 %v865
    %1432 = vmatprep.subr.mxu0 %v863
    %1433 = vmatpush1.msra.mxu0 %v862
    %1434 = vmatprep.subr.mxu0 %v860
    %1435 = vmatpush1.msra.mxu0 %v859
    %1436 = vmatprep.subr.mxu0 %v857
    %1437 = vmatpush1.msra.mxu0 %v856
    %1438 = vmatprep.subr.mxu0 %v854
    %1439 = vmatpush1.msra.mxu0 %v853
    %1440 = vmatprep.subr.mxu0 %v851
    %1441 = vmatpush1.msra.mxu0 %v850
    %1442 = vmatprep.subr.mxu0 0.0
    %1443 = vmatpush2.msra.mxu0 0.0
    %1444 = vmatprep.subr.mxu0 0.0
    %1445 = vmatpush2.msra.mxu0 0.0
    %1446 = vmatprep.subr.mxu0 0.0
    %1447 = vmatpush2.msra.mxu0 0.0
    %1448 = vmatprep.subr.mxu0 0.0
    %1449 = vmatpush2.msra.mxu0 0.0
    %1450 = vmatprep.subr.mxu0 0.0
    %1451 = vmatpush2.msra.mxu0 0.0
    %1452 = vmatprep.subr.mxu0 0.0
    %1453 = vmatpush2.msra.mxu0 0.0
    %1454 = vmatprep.subr.mxu0 0.0
    %1455 = vmatpush2.msra.mxu0 0.0
    %1456 = vmatprep.subr.mxu0 0.0
    %1457 = vmatpush2.msra.mxu0 0.0
    %1458 = vmatprep.subr.mxu0 0.0
    %1459 = vmatpush2.msra.mxu0 0.0
    %1460 = vmatprep.subr.mxu0 0.0
    %1461 = vmatpush2.msra.mxu0 0.0
    %1462 = vmatprep.subr.mxu0 0.0
    %1463 = vmatpush2.msra.mxu0 0.0
    %1464 = vmatprep.subr.mxu0 0.0
    %1465 = vmatpush2.msra.mxu0 0.0
    %1466 = vmatprep.subr.mxu0 0.0
    %1467 = vmatpush2.msra.mxu0 0.0
    %1468 = vmatprep.subr.mxu0 0.0
    %1469 = vmatpush2.msra.mxu0 0.0
    %1470 = vmatprep.subr.mxu0 0.0
    %1471 = vmatpush2.msra.mxu0 0.0
    %1472 = vmatprep.subr.mxu0 0.0
    %1473 = vmatpush2.msra.mxu0 0.0
    %1474 = vmatprep.mubr.f32.mxu0 0.0
    %1475 = vmatmul.mubr.f32.gmra.mxu0 %v1265
    %v1476 = vpop.f32.mrf.mxu0
    %v1477 = vadd.f32 0.0, %v1476
    %v1478 = vpop.f32.mrf.mxu0
    %v1479 = vadd.f32 0.0, %v1478
    %1480 = vdwg.mxu0
    %1481 = vmatprep.subr.mxu0 0.0
    %1482 = vmatpush1.msra.mxu0 %v897
    %1483 = vmatprep.subr.mxu0 0.0
    %1484 = vmatpush1.msra.mxu0 %v894
    %1485 = vmatprep.subr.mxu0 0.0
    %1486 = vmatpush1.msra.mxu0 %v891
    %1487 = vmatprep.subr.mxu0 0.0
    %1488 = vmatpush1.msra.mxu0 %v888
    %1489 = vmatprep.subr.mxu0 0.0
    %1490 = vmatpush1.msra.mxu0 %v885
    %1491 = vmatprep.subr.mxu0 0.0
    %1492 = vmatpush1.msra.mxu0 %v882
    %1493 = vmatprep.subr.mxu0 0.0
    %1494 = vmatpush1.msra.mxu0 %v879
    %1495 = vmatprep.subr.mxu0 0.0
    %1496 = vmatpush1.msra.mxu0 %v876
    %1497 = vmatprep.subr.mxu0 0.0
    %1498 = vmatpush1.msra.mxu0 %v873
    %1499 = vmatprep.subr.mxu0 0.0
    %1500 = vmatpush1.msra.mxu0 %v870
    %1501 = vmatprep.subr.mxu0 0.0
    %1502 = vmatpush1.msra.mxu0 %v867
    %1503 = vmatprep.subr.mxu0 0.0
    %1504 = vmatpush1.msra.mxu0 %v864
    %1505 = vmatprep.subr.mxu0 0.0
    %1506 = vmatpush1.msra.mxu0 %v861
    %1507 = vmatprep.subr.mxu0 0.0
    %1508 = vmatpush1.msra.mxu0 %v858
    %1509 = vmatprep.subr.mxu0 0.0
    %1510 = vmatpush1.msra.mxu0 %v855
    %1511 = vmatprep.subr.mxu0 0.0
    %1512 = vmatpush1.msra.mxu0 %v852
    %1513 = vmatprep.subr.mxu0 0.0
    %1514 = vmatpush2.msra.mxu0 0.0
    %1515 = vmatprep.subr.mxu0 0.0
    %1516 = vmatpush2.msra.mxu0 0.0
    %1517 = vmatprep.subr.mxu0 0.0
    %1518 = vmatpush2.msra.mxu0 0.0
    %1519 = vmatprep.subr.mxu0 0.0
    %1520 = vmatpush2.msra.mxu0 0.0
    %1521 = vmatprep.subr.mxu0 0.0
    %1522 = vmatpush2.msra.mxu0 0.0
    %1523 = vmatprep.subr.mxu0 0.0
    %1524 = vmatpush2.msra.mxu0 0.0
    %1525 = vmatprep.subr.mxu0 0.0
    %1526 = vmatpush2.msra.mxu0 0.0
    %1527 = vmatprep.subr.mxu0 0.0
    %1528 = vmatpush2.msra.mxu0 0.0
    %1529 = vmatprep.subr.mxu0 0.0
    %1530 = vmatpush2.msra.mxu0 0.0
    %1531 = vmatprep.subr.mxu0 0.0
    %1532 = vmatpush2.msra.mxu0 0.0
    %1533 = vmatprep.subr.mxu0 0.0
    %1534 = vmatpush2.msra.mxu0 0.0
    %1535 = vmatprep.subr.mxu0 0.0
    %1536 = vmatpush2.msra.mxu0 0.0
    %1537 = vmatprep.subr.mxu0 0.0
    %1538 = vmatpush2.msra.mxu0 0.0
    %1539 = vmatprep.subr.mxu0 0.0
    %1540 = vmatpush2.msra.mxu0 0.0
    %1541 = vmatprep.subr.mxu0 0.0
    %1542 = vmatpush2.msra.mxu0 0.0
    %1543 = vmatprep.subr.mxu0 0.0
    %1544 = vmatpush2.msra.mxu0 0.0
    %1545 = vmatprep.mubr.f32.mxu0 0.0
    %1546 = vmatmul.mubr.f32.gmra.mxu0 %v1265
    %v1547 = vpop.f32.mrf.mxu0
    %v1548 = vadd.f32 0.0, %v1547
    %v1549 = vpop.f32.mrf.mxu0
    %1550 = vdwg.mxu0
    %s1551 = smul.u32 1, 3
    %s1552 = smul.addr %s1551, 8
    %s1553 = scalar_lea.vmem [#allocation2], %s1552
    %v1554 = vld [vmem:[%s1553] sm:$0xff]
    %v1555 = vld [vmem:[%s1553 + $0x8] sm:$0xff]
    %v1556 = vld [vmem:[%s1553 + $0x10] sm:$0xff]
    %v1557 = vadd.f32 %v1554, %v1336
    %v1558 = vxor.u32 %v1557, 2147483648
    %v1559 = vmul.f32 %v1558, 1.442695
    %v1560 = vpow.pop %v1559
    %v1561 = vadd.f32 %v1560, 1.0
    %v1562 = vrcp.pop %v1561
    %v1563 = vmul.f32 1.0, %v1562
    %v1564 = vadd.f32 %v1555, %v1338
    %v1565 = vxor.u32 %v1564, 2147483648
    %v1566 = vmul.f32 %v1565, 1.442695
    %v1567 = vpow.pop %v1566
    %v1568 = vadd.f32 %v1567, 1.0
    %v1569 = vrcp.pop %v1568
    %v1570 = vmul.f32 1.0, %v1569
    %v1571 = vadd.f32 %v1407, %v903
    %v1572 = vmul.f32 %v1563, %v1571
    %v1573 = vadd.f32 %v1556, %v1572
    %v1574 = vtanh.pop %v1573
    %v1575 = vsub.f32 1.0, %v1570
    %v1576 = vmul.f32 %v1575, %v1574
    %v1577 = vmul.f32 %v1570, %v1259
    %v1578 = vadd.f32 %v1576, %v1577
    %s1579 = smul.u32 6, 3
    %s1580 = smul.addr %s1579, 8
    %s1581 = scalar_lea.vmem [#allocation3], %s1580
    %v1582 = vld [vmem:[%s1581] sm:$0xff]
    %v1583 = vld [vmem:[%s1581 + $0x8] sm:$0xff]
    %v1584 = vld [vmem:[%s1581 + $0x10] sm:$0xff]
    %v1585 = vadd.f32 %v1582, %v1477
    %v1586 = vxor.u32 %v1585, 2147483648
    %v1587 = vmul.f32 %v1586, 1.442695
    %v1588 = vpow.pop %v1587
    %v1589 = vadd.f32 %v1588, 1.0
    %v1590 = vrcp.pop %v1589
    %v1591 = vmul.f32 1.0, %v1590
    %v1592 = vadd.f32 %v1583, %v1479
    %v1593 = vxor.u32 %v1592, 2147483648
    %v1594 = vmul.f32 %v1593, 1.442695
    %v1595 = vpow.pop %v1594
    %v1596 = vadd.f32 %v1595, 1.0
    %v1597 = vrcp.pop %v1596
    %v1598 = vmul.f32 1.0, %v1597
    %v1599 = vadd.f32 %v1548, %v910
    %v1600 = vmul.f32 %v1591, %v1599
    %v1601 = vadd.f32 %v1584, %v1600
    %v1602 = vtanh.pop %v1601
    %v1603 = vsub.f32 1.0, %v1598
    %v1604 = vmul.f32 %v1603, %v1602
    %v1605 = vmul.f32 %v1598, %v1265
    %v1606 = vadd.f32 %v1604, %v1605
    %s1607 = sadd.s32 %s912, 1
    %p1608 = scmp.lt.s32.totalorder %s1607, 8
    %s1609 = scalar_select %p1608, 1, 0
    %v1610 = vstv %s1609
    %vm1611 = vcmp.eq.s32.totalorder %v1610, 1
    %v1612 = vsel %vm1611, %v1578, %v1259
    %s1613 = sadd.s32 %s914, 6
    %p1614 = scmp.lt.s32.totalorder %s1613, 8
    %s1615 = scalar_select %p1614, 1, 0
    %v1616 = vstv %s1615
    %vm1617 = vcmp.eq.s32.totalorder %v1616, 1
    %v1618 = vsel %vm1617, %v1606, %v1265
    %s1619 = scalar_lea.vmem [#allocation20], 8
    %1620 = vst [vmem:[%s1619] sm:$0xff] %v1612
    %s1621 = scalar_lea.vmem [#allocation21], 48
    %1622 = vst [vmem:[%s1621] sm:$0xff] %v1618
    %1623 = vmatprep.subr.mxu0 %v848
    %1624 = vmatpush1.msra.mxu0 %v847
    %1625 = vmatprep.subr.mxu0 %v845
    %1626 = vmatpush1.msra.mxu0 %v844
    %1627 = vmatprep.subr.mxu0 %v842
    %1628 = vmatpush1.msra.mxu0 %v841
    %1629 = vmatprep.subr.mxu0 %v839
    %1630 = vmatpush1.msra.mxu0 %v838
    %1631 = vmatprep.subr.mxu0 %v836
    %1632 = vmatpush1.msra.mxu0 %v835
    %1633 = vmatprep.subr.mxu0 %v833
    %1634 = vmatpush1.msra.mxu0 %v832
    %1635 = vmatprep.subr.mxu0 %v830
    %1636 = vmatpush1.msra.mxu0 %v829
    %1637 = vmatprep.subr.mxu0 %v827
    %1638 = vmatpush1.msra.mxu0 %v826
    %1639 = vmatprep.subr.mxu0 %v824
    %1640 = vmatpush1.msra.mxu0 %v823
    %1641 = vmatprep.subr.mxu0 %v821
    %1642 = vmatpush1.msra.mxu0 %v820
    %1643 = vmatprep.subr.mxu0 %v818
    %1644 = vmatpush1.msra.mxu0 %v817
    %1645 = vmatprep.subr.mxu0 %v815
    %1646 = vmatpush1.msra.mxu0 %v814
    %1647 = vmatprep.subr.mxu0 %v812
    %1648 = vmatpush1.msra.mxu0 %v811
    %1649 = vmatprep.subr.mxu0 %v809
    %1650 = vmatpush1.msra.mxu0 %v808
    %1651 = vmatprep.subr.mxu0 %v806
    %1652 = vmatpush1.msra.mxu0 %v805
    %1653 = vmatprep.subr.mxu0 %v803
    %1654 = vmatpush1.msra.mxu0 %v802
    %1655 = vmatprep.subr.mxu0 0.0
    %1656 = vmatpush2.msra.mxu0 0.0
    %1657 = vmatprep.subr.mxu0 0.0
    %1658 = vmatpush2.msra.mxu0 0.0
    %1659 = vmatprep.subr.mxu0 0.0
    %1660 = vmatpush2.msra.mxu0 0.0
    %1661 = vmatprep.subr.mxu0 0.0
    %1662 = vmatpush2.msra.mxu0 0.0
    %1663 = vmatprep.subr.mxu0 0.0
    %1664 = vmatpush2.msra.mxu0 0.0
    %1665 = vmatprep.subr.mxu0 0.0
    %1666 = vmatpush2.msra.mxu0 0.0
    %1667 = vmatprep.subr.mxu0 0.0
    %1668 = vmatpush2.msra.mxu0 0.0
    %1669 = vmatprep.subr.mxu0 0.0
    %1670 = vmatpush2.msra.mxu0 0.0
    %1671 = vmatprep.subr.mxu0 0.0
    %1672 = vmatpush2.msra.mxu0 0.0
    %1673 = vmatprep.subr.mxu0 0.0
    %1674 = vmatpush2.msra.mxu0 0.0
    %1675 = vmatprep.subr.mxu0 0.0
    %1676 = vmatpush2.msra.mxu0 0.0
    %1677 = vmatprep.subr.mxu0 0.0
    %1678 = vmatpush2.msra.mxu0 0.0
    %1679 = vmatprep.subr.mxu0 0.0
    %1680 = vmatpush2.msra.mxu0 0.0
    %1681 = vmatprep.subr.mxu0 0.0
    %1682 = vmatpush2.msra.mxu0 0.0
    %1683 = vmatprep.subr.mxu0 0.0
    %1684 = vmatpush2.msra.mxu0 0.0
    %1685 = vmatprep.subr.mxu0 0.0
    %1686 = vmatpush2.msra.mxu0 0.0
    %1687 = vmatprep.mubr.f32.mxu0 0.0
    %1688 = vmatmul.mubr.f32.gmra.mxu0 %v1612
    %v1689 = vpop.f32.mrf.mxu0
    %v1690 = vadd.f32 0.0, %v1689
    %v1691 = vpop.f32.mrf.mxu0
    %v1692 = vadd.f32 0.0, %v1691
    %1693 = vdwg.mxu0
    %1694 = vmatprep.subr.mxu0 0.0
    %1695 = vmatpush1.msra.mxu0 %v849
    %1696 = vmatprep.subr.mxu0 0.0
    %1697 = vmatpush1.msra.mxu0 %v846
    %1698 = vmatprep.subr.mxu0 0.0
    %1699 = vmatpush1.msra.mxu0 %v843
    %1700 = vmatprep.subr.mxu0 0.0
    %1701 = vmatpush1.msra.mxu0 %v840
    %1702 = vmatprep.subr.mxu0 0.0
    %1703 = vmatpush1.msra.mxu0 %v837
    %1704 = vmatprep.subr.mxu0 0.0
    %1705 = vmatpush1.msra.mxu0 %v834
    %1706 = vmatprep.subr.mxu0 0.0
    %1707 = vmatpush1.msra.mxu0 %v831
    %1708 = vmatprep.subr.mxu0 0.0
    %1709 = vmatpush1.msra.mxu0 %v828
    %1710 = vmatprep.subr.mxu0 0.0
    %1711 = vmatpush1.msra.mxu0 %v825
    %1712 = vmatprep.subr.mxu0 0.0
    %1713 = vmatpush1.msra.mxu0 %v822
    %1714 = vmatprep.subr.mxu0 0.0
    %1715 = vmatpush1.msra.mxu0 %v819
    %1716 = vmatprep.subr.mxu0 0.0
    %1717 = vmatpush1.msra.mxu0 %v816
    %1718 = vmatprep.subr.mxu0 0.0
    %1719 = vmatpush1.msra.mxu0 %v813
    %1720 = vmatprep.subr.mxu0 0.0
    %1721 = vmatpush1.msra.mxu0 %v810
    %1722 = vmatprep.subr.mxu0 0.0
    %1723 = vmatpush1.msra.mxu0 %v807
    %1724 = vmatprep.subr.mxu0 0.0
    %1725 = vmatpush1.msra.mxu0 %v804
    %1726 = vmatprep.subr.mxu0 0.0
    %1727 = vmatpush2.msra.mxu0 0.0
    %1728 = vmatprep.subr.mxu0 0.0
    %1729 = vmatpush2.msra.mxu0 0.0
    %1730 = vmatprep.subr.mxu0 0.0
    %1731 = vmatpush2.msra.mxu0 0.0
    %1732 = vmatprep.subr.mxu0 0.0
    %1733 = vmatpush2.msra.mxu0 0.0
    %1734 = vmatprep.subr.mxu0 0.0
    %1735 = vmatpush2.msra.mxu0 0.0
    %1736 = vmatprep.subr.mxu0 0.0
    %1737 = vmatpush2.msra.mxu0 0.0
    %1738 = vmatprep.subr.mxu0 0.0
    %1739 = vmatpush2.msra.mxu0 0.0
    %1740 = vmatprep.subr.mxu0 0.0
    %1741 = vmatpush2.msra.mxu0 0.0
    %1742 = vmatprep.subr.mxu0 0.0
    %1743 = vmatpush2.msra.mxu0 0.0
    %1744 = vmatprep.subr.mxu0 0.0
    %1745 = vmatpush2.msra.mxu0 0.0
    %1746 = vmatprep.subr.mxu0 0.0
    %1747 = vmatpush2.msra.mxu0 0.0
    %1748 = vmatprep.subr.mxu0 0.0
    %1749 = vmatpush2.msra.mxu0 0.0
    %1750 = vmatprep.subr.mxu0 0.0
    %1751 = vmatpush2.msra.mxu0 0.0
    %1752 = vmatprep.subr.mxu0 0.0
    %1753 = vmatpush2.msra.mxu0 0.0
    %1754 = vmatprep.subr.mxu0 0.0
    %1755 = vmatpush2.msra.mxu0 0.0
    %1756 = vmatprep.subr.mxu0 0.0
    %1757 = vmatpush2.msra.mxu0 0.0
    %1758 = vmatprep.mubr.f32.mxu0 0.0
    %1759 = vmatmul.mubr.f32.gmra.mxu0 %v1612
    %v1760 = vpop.f32.mrf.mxu0
    %v1761 = vadd.f32 0.0, %v1760
    %v1762 = vpop.f32.mrf.mxu0
    %1763 = vdwg.mxu0
    %1764 = vmatprep.subr.mxu0 %v896
    %1765 = vmatpush1.msra.mxu0 %v895
    %1766 = vmatprep.subr.mxu0 %v893
    %1767 = vmatpush1.msra.mxu0 %v892
    %1768 = vmatprep.subr.mxu0 %v890
    %1769 = vmatpush1.msra.mxu0 %v889
    %1770 = vmatprep.subr.mxu0 %v887
    %1771 = vmatpush1.msra.mxu0 %v886
    %1772 = vmatprep.subr.mxu0 %v884
    %1773 = vmatpush1.msra.mxu0 %v883
    %1774 = vmatprep.subr.mxu0 %v881
    %1775 = vmatpush1.msra.mxu0 %v880
    %1776 = vmatprep.subr.mxu0 %v878
    %1777 = vmatpush1.msra.mxu0 %v877
    %1778 = vmatprep.subr.mxu0 %v875
    %1779 = vmatpush1.msra.mxu0 %v874
    %1780 = vmatprep.subr.mxu0 %v872
    %1781 = vmatpush1.msra.mxu0 %v871
    %1782 = vmatprep.subr.mxu0 %v869
    %1783 = vmatpush1.msra.mxu0 %v868
    %1784 = vmatprep.subr.mxu0 %v866
    %1785 = vmatpush1.msra.mxu0 %v865
    %1786 = vmatprep.subr.mxu0 %v863
    %1787 = vmatpush1.msra.mxu0 %v862
    %1788 = vmatprep.subr.mxu0 %v860
    %1789 = vmatpush1.msra.mxu0 %v859
    %1790 = vmatprep.subr.mxu0 %v857
    %1791 = vmatpush1.msra.mxu0 %v856
    %1792 = vmatprep.subr.mxu0 %v854
    %1793 = vmatpush1.msra.mxu0 %v853
    %1794 = vmatprep.subr.mxu0 %v851
    %1795 = vmatpush1.msra.mxu0 %v850
    %1796 = vmatprep.subr.mxu0 0.0
    %1797 = vmatpush2.msra.mxu0 0.0
    %1798 = vmatprep.subr.mxu0 0.0
    %1799 = vmatpush2.msra.mxu0 0.0
    %1800 = vmatprep.subr.mxu0 0.0
    %1801 = vmatpush2.msra.mxu0 0.0
    %1802 = vmatprep.subr.mxu0 0.0
    %1803 = vmatpush2.msra.mxu0 0.0
    %1804 = vmatprep.subr.mxu0 0.0
    %1805 = vmatpush2.msra.mxu0 0.0
    %1806 = vmatprep.subr.mxu0 0.0
    %1807 = vmatpush2.msra.mxu0 0.0
    %1808 = vmatprep.subr.mxu0 0.0
    %1809 = vmatpush2.msra.mxu0 0.0
    %1810 = vmatprep.subr.mxu0 0.0
    %1811 = vmatpush2.msra.mxu0 0.0
    %1812 = vmatprep.subr.mxu0 0.0
    %1813 = vmatpush2.msra.mxu0 0.0
    %1814 = vmatprep.subr.mxu0 0.0
    %1815 = vmatpush2.msra.mxu0 0.0
    %1816 = vmatprep.subr.mxu0 0.0
    %1817 = vmatpush2.msra.mxu0 0.0
    %1818 = vmatprep.subr.mxu0 0.0
    %1819 = vmatpush2.msra.mxu0 0.0
    %1820 = vmatprep.subr.mxu0 0.0
    %1821 = vmatpush2.msra.mxu0 0.0
    %1822 = vmatprep.subr.mxu0 0.0
    %1823 = vmatpush2.msra.mxu0 0.0
    %1824 = vmatprep.subr.mxu0 0.0
    %1825 = vmatpush2.msra.mxu0 0.0
    %1826 = vmatprep.subr.mxu0 0.0
    %1827 = vmatpush2.msra.mxu0 0.0
    %1828 = vmatprep.mubr.f32.mxu0 0.0
    %1829 = vmatmul.mubr.f32.gmra.mxu0 %v1618
    %v1830 = vpop.f32.mrf.mxu0
    %v1831 = vadd.f32 0.0, %v1830
    %v1832 = vpop.f32.mrf.mxu0
    %v1833 = vadd.f32 0.0, %v1832
    %1834 = vdwg.mxu0
    %1835 = vmatprep.subr.mxu0 0.0
    %1836 = vmatpush1.msra.mxu0 %v897
    %1837 = vmatprep.subr.mxu0 0.0
    %1838 = vmatpush1.msra.mxu0 %v894
    %1839 = vmatprep.subr.mxu0 0.0
    %1840 = vmatpush1.msra.mxu0 %v891
    %1841 = vmatprep.subr.mxu0 0.0
    %1842 = vmatpush1.msra.mxu0 %v888
    %1843 = vmatprep.subr.mxu0 0.0
    %1844 = vmatpush1.msra.mxu0 %v885
    %1845 = vmatprep.subr.mxu0 0.0
    %1846 = vmatpush1.msra.mxu0 %v882
    %1847 = vmatprep.subr.mxu0 0.0
    %1848 = vmatpush1.msra.mxu0 %v879
    %1849 = vmatprep.subr.mxu0 0.0
    %1850 = vmatpush1.msra.mxu0 %v876
    %1851 = vmatprep.subr.mxu0 0.0
    %1852 = vmatpush1.msra.mxu0 %v873
    %1853 = vmatprep.subr.mxu0 0.0
    %1854 = vmatpush1.msra.mxu0 %v870
    %1855 = vmatprep.subr.mxu0 0.0
    %1856 = vmatpush1.msra.mxu0 %v867
    %1857 = vmatprep.subr.mxu0 0.0
    %1858 = vmatpush1.msra.mxu0 %v864
    %1859 = vmatprep.subr.mxu0 0.0
    %1860 = vmatpush1.msra.mxu0 %v861
    %1861 = vmatprep.subr.mxu0 0.0
    %1862 = vmatpush1.msra.mxu0 %v858
    %1863 = vmatprep.subr.mxu0 0.0
    %1864 = vmatpush1.msra.mxu0 %v855
    %1865 = vmatprep.subr.mxu0 0.0
    %1866 = vmatpush1.msra.mxu0 %v852
    %1867 = vmatprep.subr.mxu0 0.0
    %1868 = vmatpush2.msra.mxu0 0.0
    %1869 = vmatprep.subr.mxu0 0.0
    %1870 = vmatpush2.msra.mxu0 0.0
    %1871 = vmatprep.subr.mxu0 0.0
    %1872 = vmatpush2.msra.mxu0 0.0
    %1873 = vmatprep.subr.mxu0 0.0
    %1874 = vmatpush2.msra.mxu0 0.0
    %1875 = vmatprep.subr.mxu0 0.0
    %1876 = vmatpush2.msra.mxu0 0.0
    %1877 = vmatprep.subr.mxu0 0.0
    %1878 = vmatpush2.msra.mxu0 0.0
    %1879 = vmatprep.subr.mxu0 0.0
    %1880 = vmatpush2.msra.mxu0 0.0
    %1881 = vmatprep.subr.mxu0 0.0
    %1882 = vmatpush2.msra.mxu0 0.0
    %1883 = vmatprep.subr.mxu0 0.0
    %1884 = vmatpush2.msra.mxu0 0.0
    %1885 = vmatprep.subr.mxu0 0.0
    %1886 = vmatpush2.msra.mxu0 0.0
    %1887 = vmatprep.subr.mxu0 0.0
    %1888 = vmatpush2.msra.mxu0 0.0
    %1889 = vmatprep.subr.mxu0 0.0
    %1890 = vmatpush2.msra.mxu0 0.0
    %1891 = vmatprep.subr.mxu0 0.0
    %1892 = vmatpush2.msra.mxu0 0.0
    %1893 = vmatprep.subr.mxu0 0.0
    %1894 = vmatpush2.msra.mxu0 0.0
    %1895 = vmatprep.subr.mxu0 0.0
    %1896 = vmatpush2.msra.mxu0 0.0
    %1897 = vmatprep.subr.mxu0 0.0
    %1898 = vmatpush2.msra.mxu0 0.0
    %1899 = vmatprep.mubr.f32.mxu0 0.0
    %1900 = vmatmul.mubr.f32.gmra.mxu0 %v1618
    %v1901 = vpop.f32.mrf.mxu0
    %v1902 = vadd.f32 0.0, %v1901
    %v1903 = vpop.f32.mrf.mxu0
    %1904 = vdwg.mxu0
    %s1905 = smul.u32 2, 3
    %s1906 = smul.addr %s1905, 8
    %s1907 = scalar_lea.vmem [#allocation2], %s1906
    %v1908 = vld [vmem:[%s1907] sm:$0xff]
    %v1909 = vld [vmem:[%s1907 + $0x8] sm:$0xff]
    %v1910 = vld [vmem:[%s1907 + $0x10] sm:$0xff]
    %v1911 = vadd.f32 %v1908, %v1690
    %v1912 = vxor.u32 %v1911, 2147483648
    %v1913 = vmul.f32 %v1912, 1.442695
    %v1914 = vpow.pop %v1913
    %v1915 = vadd.f32 %v1914, 1.0
    %v1916 = vrcp.pop %v1915
    %v1917 = vmul.f32 1.0, %v1916
    %v1918 = vadd.f32 %v1909, %v1692
    %v1919 = vxor.u32 %v1918, 2147483648
    %v1920 = vmul.f32 %v1919, 1.442695
    %v1921 = vpow.pop %v1920
    %v1922 = vadd.f32 %v1921, 1.0
    %v1923 = vrcp.pop %v1922
    %v1924 = vmul.f32 1.0, %v1923
    %v1925 = vadd.f32 %v1761, %v903
    %v1926 = vmul.f32 %v1917, %v1925
    %v1927 = vadd.f32 %v1910, %v1926
    %v1928 = vtanh.pop %v1927
    %v1929 = vsub.f32 1.0, %v1924
    %v1930 = vmul.f32 %v1929, %v1928
    %v1931 = vmul.f32 %v1924, %v1612
    %v1932 = vadd.f32 %v1930, %v1931
    %s1933 = smul.u32 5, 3
    %s1934 = smul.addr %s1933, 8
    %s1935 = scalar_lea.vmem [#allocation3], %s1934
    %v1936 = vld [vmem:[%s1935] sm:$0xff]
    %v1937 = vld [vmem:[%s1935 + $0x8] sm:$0xff]
    %v1938 = vld [vmem:[%s1935 + $0x10] sm:$0xff]
    %v1939 = vadd.f32 %v1936, %v1831
    %v1940 = vxor.u32 %v1939, 2147483648
    %v1941 = vmul.f32 %v1940, 1.442695
    %v1942 = vpow.pop %v1941
    %v1943 = vadd.f32 %v1942, 1.0
    %v1944 = vrcp.pop %v1943
    %v1945 = vmul.f32 1.0, %v1944
    %v1946 = vadd.f32 %v1937, %v1833
    %v1947 = vxor.u32 %v1946, 2147483648
    %v1948 = vmul.f32 %v1947, 1.442695
    %v1949 = vpow.pop %v1948
    %v1950 = vadd.f32 %v1949, 1.0
    %v1951 = vrcp.pop %v1950
    %v1952 = vmul.f32 1.0, %v1951
    %v1953 = vadd.f32 %v1902, %v910
    %v1954 = vmul.f32 %v1945, %v1953
    %v1955 = vadd.f32 %v1938, %v1954
    %v1956 = vtanh.pop %v1955
    %v1957 = vsub.f32 1.0, %v1952
    %v1958 = vmul.f32 %v1957, %v1956
    %v1959 = vmul.f32 %v1952, %v1618
    %v1960 = vadd.f32 %v1958, %v1959
    %s1961 = sadd.s32 %s912, 2
    %p1962 = scmp.lt.s32.totalorder %s1961, 8
    %s1963 = scalar_select %p1962, 1, 0
    %v1964 = vstv %s1963
    %vm1965 = vcmp.eq.s32.totalorder %v1964, 1
    %v1966 = vsel %vm1965, %v1932, %v1612
    %s1967 = sadd.s32 %s914, 5
    %p1968 = scmp.lt.s32.totalorder %s1967, 8
    %s1969 = scalar_select %p1968, 1, 0
    %v1970 = vstv %s1969
    %vm1971 = vcmp.eq.s32.totalorder %v1970, 1
    %v1972 = vsel %vm1971, %v1960, %v1618
    %s1973 = scalar_lea.vmem [#allocation20], 16
    %1974 = vst [vmem:[%s1973] sm:$0xff] %v1966
    %s1975 = scalar_lea.vmem [#allocation21], 40
    %1976 = vst [vmem:[%s1975] sm:$0xff] %v1972
    %1977 = vmatprep.subr.mxu0 %v848
    %1978 = vmatpush1.msra.mxu0 %v847
    %1979 = vmatprep.subr.mxu0 %v845
    %1980 = vmatpush1.msra.mxu0 %v844
    %1981 = vmatprep.subr.mxu0 %v842
    %1982 = vmatpush1.msra.mxu0 %v841
    %1983 = vmatprep.subr.mxu0 %v839
    %1984 = vmatpush1.msra.mxu0 %v838
    %1985 = vmatprep.subr.mxu0 %v836
    %1986 = vmatpush1.msra.mxu0 %v835
    %1987 = vmatprep.subr.mxu0 %v833
    %1988 = vmatpush1.msra.mxu0 %v832
    %1989 = vmatprep.subr.mxu0 %v830
    %1990 = vmatpush1.msra.mxu0 %v829
    %1991 = vmatprep.subr.mxu0 %v827
    %1992 = vmatpush1.msra.mxu0 %v826
    %1993 = vmatprep.subr.mxu0 %v824
    %1994 = vmatpush1.msra.mxu0 %v823
    %1995 = vmatprep.subr.mxu0 %v821
    %1996 = vmatpush1.msra.mxu0 %v820
    %1997 = vmatprep.subr.mxu0 %v818
    %1998 = vmatpush1.msra.mxu0 %v817
    %1999 = vmatprep.subr.mxu0 %v815
    %2000 = vmatpush1.msra.mxu0 %v814
    %2001 = vmatprep.subr.mxu0 %v812
    %2002 = vmatpush1.msra.mxu0 %v811
    %2003 = vmatprep.subr.mxu0 %v809
    %2004 = vmatpush1.msra.mxu0 %v808
    %2005 = vmatprep.subr.mxu0 %v806
    %2006 = vmatpush1.msra.mxu0 %v805
    %2007 = vmatprep.subr.mxu0 %v803
    %2008 = vmatpush1.msra.mxu0 %v802
    %2009 = vmatprep.subr.mxu0 0.0
    %2010 = vmatpush2.msra.mxu0 0.0
    %2011 = vmatprep.subr.mxu0 0.0
    %2012 = vmatpush2.msra.mxu0 0.0
    %2013 = vmatprep.subr.mxu0 0.0
    %2014 = vmatpush2.msra.mxu0 0.0
    %2015 = vmatprep.subr.mxu0 0.0
    %2016 = vmatpush2.msra.mxu0 0.0
    %2017 = vmatprep.subr.mxu0 0.0
    %2018 = vmatpush2.msra.mxu0 0.0
    %2019 = vmatprep.subr.mxu0 0.0
    %2020 = vmatpush2.msra.mxu0 0.0
    %2021 = vmatprep.subr.mxu0 0.0
    %2022 = vmatpush2.msra.mxu0 0.0
    %2023 = vmatprep.subr.mxu0 0.0
    %2024 = vmatpush2.msra.mxu0 0.0
    %2025 = vmatprep.subr.mxu0 0.0
    %2026 = vmatpush2.msra.mxu0 0.0
    %2027 = vmatprep.subr.mxu0 0.0
    %2028 = vmatpush2.msra.mxu0 0.0
    %2029 = vmatprep.subr.mxu0 0.0
    %2030 = vmatpush2.msra.mxu0 0.0
    %2031 = vmatprep.subr.mxu0 0.0
    %2032 = vmatpush2.msra.mxu0 0.0
    %2033 = vmatprep.subr.mxu0 0.0
    %2034 = vmatpush2.msra.mxu0 0.0
    %2035 = vmatprep.subr.mxu0 0.0
    %2036 = vmatpush2.msra.mxu0 0.0
    %2037 = vmatprep.subr.mxu0 0.0
    %2038 = vmatpush2.msra.mxu0 0.0
    %2039 = vmatprep.subr.mxu0 0.0
    %2040 = vmatpush2.msra.mxu0 0.0
    %2041 = vmatprep.mubr.f32.mxu0 0.0
    %2042 = vmatmul.mubr.f32.gmra.mxu0 %v1966
    %v2043 = vpop.f32.mrf.mxu0
    %v2044 = vadd.f32 0.0, %v2043
    %v2045 = vpop.f32.mrf.mxu0
    %v2046 = vadd.f32 0.0, %v2045
    %2047 = vdwg.mxu0
    %2048 = vmatprep.subr.mxu0 0.0
    %2049 = vmatpush1.msra.mxu0 %v849
    %2050 = vmatprep.subr.mxu0 0.0
    %2051 = vmatpush1.msra.mxu0 %v846
    %2052 = vmatprep.subr.mxu0 0.0
    %2053 = vmatpush1.msra.mxu0 %v843
    %2054 = vmatprep.subr.mxu0 0.0
    %2055 = vmatpush1.msra.mxu0 %v840
    %2056 = vmatprep.subr.mxu0 0.0
    %2057 = vmatpush1.msra.mxu0 %v837
    %2058 = vmatprep.subr.mxu0 0.0
    %2059 = vmatpush1.msra.mxu0 %v834
    %2060 = vmatprep.subr.mxu0 0.0
    %2061 = vmatpush1.msra.mxu0 %v831
    %2062 = vmatprep.subr.mxu0 0.0
    %2063 = vmatpush1.msra.mxu0 %v828
    %2064 = vmatprep.subr.mxu0 0.0
    %2065 = vmatpush1.msra.mxu0 %v825
    %2066 = vmatprep.subr.mxu0 0.0
    %2067 = vmatpush1.msra.mxu0 %v822
    %2068 = vmatprep.subr.mxu0 0.0
    %2069 = vmatpush1.msra.mxu0 %v819
    %2070 = vmatprep.subr.mxu0 0.0
    %2071 = vmatpush1.msra.mxu0 %v816
    %2072 = vmatprep.subr.mxu0 0.0
    %2073 = vmatpush1.msra.mxu0 %v813
    %2074 = vmatprep.subr.mxu0 0.0
    %2075 = vmatpush1.msra.mxu0 %v810
    %2076 = vmatprep.subr.mxu0 0.0
    %2077 = vmatpush1.msra.mxu0 %v807
    %2078 = vmatprep.subr.mxu0 0.0
    %2079 = vmatpush1.msra.mxu0 %v804
    %2080 = vmatprep.subr.mxu0 0.0
    %2081 = vmatpush2.msra.mxu0 0.0
    %2082 = vmatprep.subr.mxu0 0.0
    %2083 = vmatpush2.msra.mxu0 0.0
    %2084 = vmatprep.subr.mxu0 0.0
    %2085 = vmatpush2.msra.mxu0 0.0
    %2086 = vmatprep.subr.mxu0 0.0
    %2087 = vmatpush2.msra.mxu0 0.0
    %2088 = vmatprep.subr.mxu0 0.0
    %2089 = vmatpush2.msra.mxu0 0.0
    %2090 = vmatprep.subr.mxu0 0.0
    %2091 = vmatpush2.msra.mxu0 0.0
    %2092 = vmatprep.subr.mxu0 0.0
    %2093 = vmatpush2.msra.mxu0 0.0
    %2094 = vmatprep.subr.mxu0 0.0
    %2095 = vmatpush2.msra.mxu0 0.0
    %2096 = vmatprep.subr.mxu0 0.0
    %2097 = vmatpush2.msra.mxu0 0.0
    %2098 = vmatprep.subr.mxu0 0.0
    %2099 = vmatpush2.msra.mxu0 0.0
    %2100 = vmatprep.subr.mxu0 0.0
    %2101 = vmatpush2.msra.mxu0 0.0
    %2102 = vmatprep.subr.mxu0 0.0
    %2103 = vmatpush2.msra.mxu0 0.0
    %2104 = vmatprep.subr.mxu0 0.0
    %2105 = vmatpush2.msra.mxu0 0.0
    %2106 = vmatprep.subr.mxu0 0.0
    %2107 = vmatpush2.msra.mxu0 0.0
    %2108 = vmatprep.subr.mxu0 0.0
    %2109 = vmatpush2.msra.mxu0 0.0
    %2110 = vmatprep.subr.mxu0 0.0
    %2111 = vmatpush2.msra.mxu0 0.0
    %2112 = vmatprep.mubr.f32.mxu0 0.0
    %2113 = vmatmul.mubr.f32.gmra.mxu0 %v1966
    %v2114 = vpop.f32.mrf.mxu0
    %v2115 = vadd.f32 0.0, %v2114
    %v2116 = vpop.f32.mrf.mxu0
    %2117 = vdwg.mxu0
    %2118 = vmatprep.subr.mxu0 %v896
    %2119 = vmatpush1.msra.mxu0 %v895
    %2120 = vmatprep.subr.mxu0 %v893
    %2121 = vmatpush1.msra.mxu0 %v892
    %2122 = vmatprep.subr.mxu0 %v890
    %2123 = vmatpush1.msra.mxu0 %v889
    %2124 = vmatprep.subr.mxu0 %v887
    %2125 = vmatpush1.msra.mxu0 %v886
    %2126 = vmatprep.subr.mxu0 %v884
    %2127 = vmatpush1.msra.mxu0 %v883
    %2128 = vmatprep.subr.mxu0 %v881
    %2129 = vmatpush1.msra.mxu0 %v880
    %2130 = vmatprep.subr.mxu0 %v878
    %2131 = vmatpush1.msra.mxu0 %v877
    %2132 = vmatprep.subr.mxu0 %v875
    %2133 = vmatpush1.msra.mxu0 %v874
    %2134 = vmatprep.subr.mxu0 %v872
    %2135 = vmatpush1.msra.mxu0 %v871
    %2136 = vmatprep.subr.mxu0 %v869
    %2137 = vmatpush1.msra.mxu0 %v868
    %2138 = vmatprep.subr.mxu0 %v866
    %2139 = vmatpush1.msra.mxu0 %v865
    %2140 = vmatprep.subr.mxu0 %v863
    %2141 = vmatpush1.msra.mxu0 %v862
    %2142 = vmatprep.subr.mxu0 %v860
    %2143 = vmatpush1.msra.mxu0 %v859
    %2144 = vmatprep.subr.mxu0 %v857
    %2145 = vmatpush1.msra.mxu0 %v856
    %2146 = vmatprep.subr.mxu0 %v854
    %2147 = vmatpush1.msra.mxu0 %v853
    %2148 = vmatprep.subr.mxu0 %v851
    %2149 = vmatpush1.msra.mxu0 %v850
    %2150 = vmatprep.subr.mxu0 0.0
    %2151 = vmatpush2.msra.mxu0 0.0
    %2152 = vmatprep.subr.mxu0 0.0
    %2153 = vmatpush2.msra.mxu0 0.0
    %2154 = vmatprep.subr.mxu0 0.0
    %2155 = vmatpush2.msra.mxu0 0.0
    %2156 = vmatprep.subr.mxu0 0.0
    %2157 = vmatpush2.msra.mxu0 0.0
    %2158 = vmatprep.subr.mxu0 0.0
    %2159 = vmatpush2.msra.mxu0 0.0
    %2160 = vmatprep.subr.mxu0 0.0
    %2161 = vmatpush2.msra.mxu0 0.0
    %2162 = vmatprep.subr.mxu0 0.0
    %2163 = vmatpush2.msra.mxu0 0.0
    %2164 = vmatprep.subr.mxu0 0.0
    %2165 = vmatpush2.msra.mxu0 0.0
    %2166 = vmatprep.subr.mxu0 0.0
    %2167 = vmatpush2.msra.mxu0 0.0
    %2168 = vmatprep.subr.mxu0 0.0
    %2169 = vmatpush2.msra.mxu0 0.0
    %2170 = vmatprep.subr.mxu0 0.0
    %2171 = vmatpush2.msra.mxu0 0.0
    %2172 = vmatprep.subr.mxu0 0.0
    %2173 = vmatpush2.msra.mxu0 0.0
    %2174 = vmatprep.subr.mxu0 0.0
    %2175 = vmatpush2.msra.mxu0 0.0
    %2176 = vmatprep.subr.mxu0 0.0
    %2177 = vmatpush2.msra.mxu0 0.0
    %2178 = vmatprep.subr.mxu0 0.0
    %2179 = vmatpush2.msra.mxu0 0.0
    %2180 = vmatprep.subr.mxu0 0.0
    %2181 = vmatpush2.msra.mxu0 0.0
    %2182 = vmatprep.mubr.f32.mxu0 0.0
    %2183 = vmatmul.mubr.f32.gmra.mxu0 %v1972
    %v2184 = vpop.f32.mrf.mxu0
    %v2185 = vadd.f32 0.0, %v2184
    %v2186 = vpop.f32.mrf.mxu0
    %v2187 = vadd.f32 0.0, %v2186
    %2188 = vdwg.mxu0
    %2189 = vmatprep.subr.mxu0 0.0
    %2190 = vmatpush1.msra.mxu0 %v897
    %2191 = vmatprep.subr.mxu0 0.0
    %2192 = vmatpush1.msra.mxu0 %v894
    %2193 = vmatprep.subr.mxu0 0.0
    %2194 = vmatpush1.msra.mxu0 %v891
    %2195 = vmatprep.subr.mxu0 0.0
    %2196 = vmatpush1.msra.mxu0 %v888
    %2197 = vmatprep.subr.mxu0 0.0
    %2198 = vmatpush1.msra.mxu0 %v885
    %2199 = vmatprep.subr.mxu0 0.0
    %2200 = vmatpush1.msra.mxu0 %v882
    %2201 = vmatprep.subr.mxu0 0.0
    %2202 = vmatpush1.msra.mxu0 %v879
    %2203 = vmatprep.subr.mxu0 0.0
    %2204 = vmatpush1.msra.mxu0 %v876
    %2205 = vmatprep.subr.mxu0 0.0
    %2206 = vmatpush1.msra.mxu0 %v873
    %2207 = vmatprep.subr.mxu0 0.0
    %2208 = vmatpush1.msra.mxu0 %v870
    %2209 = vmatprep.subr.mxu0 0.0
    %2210 = vmatpush1.msra.mxu0 %v867
    %2211 = vmatprep.subr.mxu0 0.0
    %2212 = vmatpush1.msra.mxu0 %v864
    %2213 = vmatprep.subr.mxu0 0.0
    %2214 = vmatpush1.msra.mxu0 %v861
    %2215 = vmatprep.subr.mxu0 0.0
    %2216 = vmatpush1.msra.mxu0 %v858
    %2217 = vmatprep.subr.mxu0 0.0
    %2218 = vmatpush1.msra.mxu0 %v855
    %2219 = vmatprep.subr.mxu0 0.0
    %2220 = vmatpush1.msra.mxu0 %v852
    %2221 = vmatprep.subr.mxu0 0.0
    %2222 = vmatpush2.msra.mxu0 0.0
    %2223 = vmatprep.subr.mxu0 0.0
    %2224 = vmatpush2.msra.mxu0 0.0
    %2225 = vmatprep.subr.mxu0 0.0
    %2226 = vmatpush2.msra.mxu0 0.0
    %2227 = vmatprep.subr.mxu0 0.0
    %2228 = vmatpush2.msra.mxu0 0.0
    %2229 = vmatprep.subr.mxu0 0.0
    %2230 = vmatpush2.msra.mxu0 0.0
    %2231 = vmatprep.subr.mxu0 0.0
    %2232 = vmatpush2.msra.mxu0 0.0
    %2233 = vmatprep.subr.mxu0 0.0
    %2234 = vmatpush2.msra.mxu0 0.0
    %2235 = vmatprep.subr.mxu0 0.0
    %2236 = vmatpush2.msra.mxu0 0.0
    %2237 = vmatprep.subr.mxu0 0.0
    %2238 = vmatpush2.msra.mxu0 0.0
    %2239 = vmatprep.subr.mxu0 0.0
    %2240 = vmatpush2.msra.mxu0 0.0
    %2241 = vmatprep.subr.mxu0 0.0
    %2242 = vmatpush2.msra.mxu0 0.0
    %2243 = vmatprep.subr.mxu0 0.0
    %2244 = vmatpush2.msra.mxu0 0.0
    %2245 = vmatprep.subr.mxu0 0.0
    %2246 = vmatpush2.msra.mxu0 0.0
    %2247 = vmatprep.subr.mxu0 0.0
    %2248 = vmatpush2.msra.mxu0 0.0
    %2249 = vmatprep.subr.mxu0 0.0
    %2250 = vmatpush2.msra.mxu0 0.0
    %2251 = vmatprep.subr.mxu0 0.0
    %2252 = vmatpush2.msra.mxu0 0.0
    %2253 = vmatprep.mubr.f32.mxu0 0.0
    %2254 = vmatmul.mubr.f32.gmra.mxu0 %v1972
    %v2255 = vpop.f32.mrf.mxu0
    %v2256 = vadd.f32 0.0, %v2255
    %v2257 = vpop.f32.mrf.mxu0
    %2258 = vdwg.mxu0
    %s2259 = smul.u32 3, 3
    %s2260 = smul.addr %s2259, 8
    %s2261 = scalar_lea.vmem [#allocation2], %s2260
    %v2262 = vld [vmem:[%s2261] sm:$0xff]
    %v2263 = vld [vmem:[%s2261 + $0x8] sm:$0xff]
    %v2264 = vld [vmem:[%s2261 + $0x10] sm:$0xff]
    %v2265 = vadd.f32 %v2262, %v2044
    %v2266 = vxor.u32 %v2265, 2147483648
    %v2267 = vmul.f32 %v2266, 1.442695
    %v2268 = vpow.pop %v2267
    %v2269 = vadd.f32 %v2268, 1.0
    %v2270 = vrcp.pop %v2269
    %v2271 = vmul.f32 1.0, %v2270
    %v2272 = vadd.f32 %v2263, %v2046
    %v2273 = vxor.u32 %v2272, 2147483648
    %v2274 = vmul.f32 %v2273, 1.442695
    %v2275 = vpow.pop %v2274
    %v2276 = vadd.f32 %v2275, 1.0
    %v2277 = vrcp.pop %v2276
    %v2278 = vmul.f32 1.0, %v2277
    %v2279 = vadd.f32 %v2115, %v903
    %v2280 = vmul.f32 %v2271, %v2279
    %v2281 = vadd.f32 %v2264, %v2280
    %v2282 = vtanh.pop %v2281
    %v2283 = vsub.f32 1.0, %v2278
    %v2284 = vmul.f32 %v2283, %v2282
    %v2285 = vmul.f32 %v2278, %v1966
    %v2286 = vadd.f32 %v2284, %v2285
    %s2287 = smul.u32 4, 3
    %s2288 = smul.addr %s2287, 8
    %s2289 = scalar_lea.vmem [#allocation3], %s2288
    %v2290 = vld [vmem:[%s2289] sm:$0xff]
    %v2291 = vld [vmem:[%s2289 + $0x8] sm:$0xff]
    %v2292 = vld [vmem:[%s2289 + $0x10] sm:$0xff]
    %v2293 = vadd.f32 %v2290, %v2185
    %v2294 = vxor.u32 %v2293, 2147483648
    %v2295 = vmul.f32 %v2294, 1.442695
    %v2296 = vpow.pop %v2295
    %v2297 = vadd.f32 %v2296, 1.0
    %v2298 = vrcp.pop %v2297
    %v2299 = vmul.f32 1.0, %v2298
    %v2300 = vadd.f32 %v2291, %v2187
    %v2301 = vxor.u32 %v2300, 2147483648
    %v2302 = vmul.f32 %v2301, 1.442695
    %v2303 = vpow.pop %v2302
    %v2304 = vadd.f32 %v2303, 1.0
    %v2305 = vrcp.pop %v2304
    %v2306 = vmul.f32 1.0, %v2305
    %v2307 = vadd.f32 %v2256, %v910
    %v2308 = vmul.f32 %v2299, %v2307
    %v2309 = vadd.f32 %v2292, %v2308
    %v2310 = vtanh.pop %v2309
    %v2311 = vsub.f32 1.0, %v2306
    %v2312 = vmul.f32 %v2311, %v2310
    %v2313 = vmul.f32 %v2306, %v1972
    %v2314 = vadd.f32 %v2312, %v2313
    %s2315 = sadd.s32 %s912, 3
    %p2316 = scmp.lt.s32.totalorder %s2315, 8
    %s2317 = scalar_select %p2316, 1, 0
    %v2318 = vstv %s2317
    %vm2319 = vcmp.eq.s32.totalorder %v2318, 1
    %v2320 = vsel %vm2319, %v2286, %v1966
    %s2321 = sadd.s32 %s914, 4
    %p2322 = scmp.lt.s32.totalorder %s2321, 8
    %s2323 = scalar_select %p2322, 1, 0
    %v2324 = vstv %s2323
    %vm2325 = vcmp.eq.s32.totalorder %v2324, 1
    %v2326 = vsel %vm2325, %v2314, %v1972
    %s2327 = scalar_lea.vmem [#allocation20], 24
    %2328 = vst [vmem:[%s2327] sm:$0xff] %v2320
    %s2329 = scalar_lea.vmem [#allocation21], 32
    %2330 = vst [vmem:[%s2329] sm:$0xff] %v2326
    %2331 = vmatprep.subr.mxu0 %v848
    %2332 = vmatpush1.msra.mxu0 %v847
    %2333 = vmatprep.subr.mxu0 %v845
    %2334 = vmatpush1.msra.mxu0 %v844
    %2335 = vmatprep.subr.mxu0 %v842
    %2336 = vmatpush1.msra.mxu0 %v841
    %2337 = vmatprep.subr.mxu0 %v839
    %2338 = vmatpush1.msra.mxu0 %v838
    %2339 = vmatprep.subr.mxu0 %v836
    %2340 = vmatpush1.msra.mxu0 %v835
    %2341 = vmatprep.subr.mxu0 %v833
    %2342 = vmatpush1.msra.mxu0 %v832
    %2343 = vmatprep.subr.mxu0 %v830
    %2344 = vmatpush1.msra.mxu0 %v829
    %2345 = vmatprep.subr.mxu0 %v827
    %2346 = vmatpush1.msra.mxu0 %v826
    %2347 = vmatprep.subr.mxu0 %v824
    %2348 = vmatpush1.msra.mxu0 %v823
    %2349 = vmatprep.subr.mxu0 %v821
    %2350 = vmatpush1.msra.mxu0 %v820
    %2351 = vmatprep.subr.mxu0 %v818
    %2352 = vmatpush1.msra.mxu0 %v817
    %2353 = vmatprep.subr.mxu0 %v815
    %2354 = vmatpush1.msra.mxu0 %v814
    %2355 = vmatprep.subr.mxu0 %v812
    %2356 = vmatpush1.msra.mxu0 %v811
    %2357 = vmatprep.subr.mxu0 %v809
    %2358 = vmatpush1.msra.mxu0 %v808
    %2359 = vmatprep.subr.mxu0 %v806
    %2360 = vmatpush1.msra.mxu0 %v805
    %2361 = vmatprep.subr.mxu0 %v803
    %2362 = vmatpush1.msra.mxu0 %v802
    %2363 = vmatprep.subr.mxu0 0.0
    %2364 = vmatpush2.msra.mxu0 0.0
    %2365 = vmatprep.subr.mxu0 0.0
    %2366 = vmatpush2.msra.mxu0 0.0
    %2367 = vmatprep.subr.mxu0 0.0
    %2368 = vmatpush2.msra.mxu0 0.0
    %2369 = vmatprep.subr.mxu0 0.0
    %2370 = vmatpush2.msra.mxu0 0.0
    %2371 = vmatprep.subr.mxu0 0.0
    %2372 = vmatpush2.msra.mxu0 0.0
    %2373 = vmatprep.subr.mxu0 0.0
    %2374 = vmatpush2.msra.mxu0 0.0
    %2375 = vmatprep.subr.mxu0 0.0
    %2376 = vmatpush2.msra.mxu0 0.0
    %2377 = vmatprep.subr.mxu0 0.0
    %2378 = vmatpush2.msra.mxu0 0.0
    %2379 = vmatprep.subr.mxu0 0.0
    %2380 = vmatpush2.msra.mxu0 0.0
    %2381 = vmatprep.subr.mxu0 0.0
    %2382 = vmatpush2.msra.mxu0 0.0
    %2383 = vmatprep.subr.mxu0 0.0
    %2384 = vmatpush2.msra.mxu0 0.0
    %2385 = vmatprep.subr.mxu0 0.0
    %2386 = vmatpush2.msra.mxu0 0.0
    %2387 = vmatprep.subr.mxu0 0.0
    %2388 = vmatpush2.msra.mxu0 0.0
    %2389 = vmatprep.subr.mxu0 0.0
    %2390 = vmatpush2.msra.mxu0 0.0
    %2391 = vmatprep.subr.mxu0 0.0
    %2392 = vmatpush2.msra.mxu0 0.0
    %2393 = vmatprep.subr.mxu0 0.0
    %2394 = vmatpush2.msra.mxu0 0.0
    %2395 = vmatprep.mubr.f32.mxu0 0.0
    %2396 = vmatmul.mubr.f32.gmra.mxu0 %v2320
    %v2397 = vpop.f32.mrf.mxu0
    %v2398 = vadd.f32 0.0, %v2397
    %v2399 = vpop.f32.mrf.mxu0
    %v2400 = vadd.f32 0.0, %v2399
    %2401 = vdwg.mxu0
    %2402 = vmatprep.subr.mxu0 0.0
    %2403 = vmatpush1.msra.mxu0 %v849
    %2404 = vmatprep.subr.mxu0 0.0
    %2405 = vmatpush1.msra.mxu0 %v846
    %2406 = vmatprep.subr.mxu0 0.0
    %2407 = vmatpush1.msra.mxu0 %v843
    %2408 = vmatprep.subr.mxu0 0.0
    %2409 = vmatpush1.msra.mxu0 %v840
    %2410 = vmatprep.subr.mxu0 0.0
    %2411 = vmatpush1.msra.mxu0 %v837
    %2412 = vmatprep.subr.mxu0 0.0
    %2413 = vmatpush1.msra.mxu0 %v834
    %2414 = vmatprep.subr.mxu0 0.0
    %2415 = vmatpush1.msra.mxu0 %v831
    %2416 = vmatprep.subr.mxu0 0.0
    %2417 = vmatpush1.msra.mxu0 %v828
    %2418 = vmatprep.subr.mxu0 0.0
    %2419 = vmatpush1.msra.mxu0 %v825
    %2420 = vmatprep.subr.mxu0 0.0
    %2421 = vmatpush1.msra.mxu0 %v822
    %2422 = vmatprep.subr.mxu0 0.0
    %2423 = vmatpush1.msra.mxu0 %v819
    %2424 = vmatprep.subr.mxu0 0.0
    %2425 = vmatpush1.msra.mxu0 %v816
    %2426 = vmatprep.subr.mxu0 0.0
    %2427 = vmatpush1.msra.mxu0 %v813
    %2428 = vmatprep.subr.mxu0 0.0
    %2429 = vmatpush1.msra.mxu0 %v810
    %2430 = vmatprep.subr.mxu0 0.0
    %2431 = vmatpush1.msra.mxu0 %v807
    %2432 = vmatprep.subr.mxu0 0.0
    %2433 = vmatpush1.msra.mxu0 %v804
    %2434 = vmatprep.subr.mxu0 0.0
    %2435 = vmatpush2.msra.mxu0 0.0
    %2436 = vmatprep.subr.mxu0 0.0
    %2437 = vmatpush2.msra.mxu0 0.0
    %2438 = vmatprep.subr.mxu0 0.0
    %2439 = vmatpush2.msra.mxu0 0.0
    %2440 = vmatprep.subr.mxu0 0.0
    %2441 = vmatpush2.msra.mxu0 0.0
    %2442 = vmatprep.subr.mxu0 0.0
    %2443 = vmatpush2.msra.mxu0 0.0
    %2444 = vmatprep.subr.mxu0 0.0
    %2445 = vmatpush2.msra.mxu0 0.0
    %2446 = vmatprep.subr.mxu0 0.0
    %2447 = vmatpush2.msra.mxu0 0.0
    %2448 = vmatprep.subr.mxu0 0.0
    %2449 = vmatpush2.msra.mxu0 0.0
    %2450 = vmatprep.subr.mxu0 0.0
    %2451 = vmatpush2.msra.mxu0 0.0
    %2452 = vmatprep.subr.mxu0 0.0
    %2453 = vmatpush2.msra.mxu0 0.0
    %2454 = vmatprep.subr.mxu0 0.0
    %2455 = vmatpush2.msra.mxu0 0.0
    %2456 = vmatprep.subr.mxu0 0.0
    %2457 = vmatpush2.msra.mxu0 0.0
    %2458 = vmatprep.subr.mxu0 0.0
    %2459 = vmatpush2.msra.mxu0 0.0
    %2460 = vmatprep.subr.mxu0 0.0
    %2461 = vmatpush2.msra.mxu0 0.0
    %2462 = vmatprep.subr.mxu0 0.0
    %2463 = vmatpush2.msra.mxu0 0.0
    %2464 = vmatprep.subr.mxu0 0.0
    %2465 = vmatpush2.msra.mxu0 0.0
    %2466 = vmatprep.mubr.f32.mxu0 0.0
    %2467 = vmatmul.mubr.f32.gmra.mxu0 %v2320
    %v2468 = vpop.f32.mrf.mxu0
    %v2469 = vadd.f32 0.0, %v2468
    %v2470 = vpop.f32.mrf.mxu0
    %2471 = vdwg.mxu0
    %2472 = vmatprep.subr.mxu0 %v896
    %2473 = vmatpush1.msra.mxu0 %v895
    %2474 = vmatprep.subr.mxu0 %v893
    %2475 = vmatpush1.msra.mxu0 %v892
    %2476 = vmatprep.subr.mxu0 %v890
    %2477 = vmatpush1.msra.mxu0 %v889
    %2478 = vmatprep.subr.mxu0 %v887
    %2479 = vmatpush1.msra.mxu0 %v886
    %2480 = vmatprep.subr.mxu0 %v884
    %2481 = vmatpush1.msra.mxu0 %v883
    %2482 = vmatprep.subr.mxu0 %v881
    %2483 = vmatpush1.msra.mxu0 %v880
    %2484 = vmatprep.subr.mxu0 %v878
    %2485 = vmatpush1.msra.mxu0 %v877
    %2486 = vmatprep.subr.mxu0 %v875
    %2487 = vmatpush1.msra.mxu0 %v874
    %2488 = vmatprep.subr.mxu0 %v872
    %2489 = vmatpush1.msra.mxu0 %v871
    %2490 = vmatprep.subr.mxu0 %v869
    %2491 = vmatpush1.msra.mxu0 %v868
    %2492 = vmatprep.subr.mxu0 %v866
    %2493 = vmatpush1.msra.mxu0 %v865
    %2494 = vmatprep.subr.mxu0 %v863
    %2495 = vmatpush1.msra.mxu0 %v862
    %2496 = vmatprep.subr.mxu0 %v860
    %2497 = vmatpush1.msra.mxu0 %v859
    %2498 = vmatprep.subr.mxu0 %v857
    %2499 = vmatpush1.msra.mxu0 %v856
    %2500 = vmatprep.subr.mxu0 %v854
    %2501 = vmatpush1.msra.mxu0 %v853
    %2502 = vmatprep.subr.mxu0 %v851
    %2503 = vmatpush1.msra.mxu0 %v850
    %2504 = vmatprep.subr.mxu0 0.0
    %2505 = vmatpush2.msra.mxu0 0.0
    %2506 = vmatprep.subr.mxu0 0.0
    %2507 = vmatpush2.msra.mxu0 0.0
    %2508 = vmatprep.subr.mxu0 0.0
    %2509 = vmatpush2.msra.mxu0 0.0
    %2510 = vmatprep.subr.mxu0 0.0
    %2511 = vmatpush2.msra.mxu0 0.0
    %2512 = vmatprep.subr.mxu0 0.0
    %2513 = vmatpush2.msra.mxu0 0.0
    %2514 = vmatprep.subr.mxu0 0.0
    %2515 = vmatpush2.msra.mxu0 0.0
    %2516 = vmatprep.subr.mxu0 0.0
    %2517 = vmatpush2.msra.mxu0 0.0
    %2518 = vmatprep.subr.mxu0 0.0
    %2519 = vmatpush2.msra.mxu0 0.0
    %2520 = vmatprep.subr.mxu0 0.0
    %2521 = vmatpush2.msra.mxu0 0.0
    %2522 = vmatprep.subr.mxu0 0.0
    %2523 = vmatpush2.msra.mxu0 0.0
    %2524 = vmatprep.subr.mxu0 0.0
    %2525 = vmatpush2.msra.mxu0 0.0
    %2526 = vmatprep.subr.mxu0 0.0
    %2527 = vmatpush2.msra.mxu0 0.0
    %2528 = vmatprep.subr.mxu0 0.0
    %2529 = vmatpush2.msra.mxu0 0.0
    %2530 = vmatprep.subr.mxu0 0.0
    %2531 = vmatpush2.msra.mxu0 0.0
    %2532 = vmatprep.subr.mxu0 0.0
    %2533 = vmatpush2.msra.mxu0 0.0
    %2534 = vmatprep.subr.mxu0 0.0
    %2535 = vmatpush2.msra.mxu0 0.0
    %2536 = vmatprep.mubr.f32.mxu0 0.0
    %2537 = vmatmul.mubr.f32.gmra.mxu0 %v2326
    %v2538 = vpop.f32.mrf.mxu0
    %v2539 = vadd.f32 0.0, %v2538
    %v2540 = vpop.f32.mrf.mxu0
    %v2541 = vadd.f32 0.0, %v2540
    %2542 = vdwg.mxu0
    %2543 = vmatprep.subr.mxu0 0.0
    %2544 = vmatpush1.msra.mxu0 %v897
    %2545 = vmatprep.subr.mxu0 0.0
    %2546 = vmatpush1.msra.mxu0 %v894
    %2547 = vmatprep.subr.mxu0 0.0
    %2548 = vmatpush1.msra.mxu0 %v891
    %2549 = vmatprep.subr.mxu0 0.0
    %2550 = vmatpush1.msra.mxu0 %v888
    %2551 = vmatprep.subr.mxu0 0.0
    %2552 = vmatpush1.msra.mxu0 %v885
    %2553 = vmatprep.subr.mxu0 0.0
    %2554 = vmatpush1.msra.mxu0 %v882
    %2555 = vmatprep.subr.mxu0 0.0
    %2556 = vmatpush1.msra.mxu0 %v879
    %2557 = vmatprep.subr.mxu0 0.0
    %2558 = vmatpush1.msra.mxu0 %v876
    %2559 = vmatprep.subr.mxu0 0.0
    %2560 = vmatpush1.msra.mxu0 %v873
    %2561 = vmatprep.subr.mxu0 0.0
    %2562 = vmatpush1.msra.mxu0 %v870
    %2563 = vmatprep.subr.mxu0 0.0
    %2564 = vmatpush1.msra.mxu0 %v867
    %2565 = vmatprep.subr.mxu0 0.0
    %2566 = vmatpush1.msra.mxu0 %v864
    %2567 = vmatprep.subr.mxu0 0.0
    %2568 = vmatpush1.msra.mxu0 %v861
    %2569 = vmatprep.subr.mxu0 0.0
    %2570 = vmatpush1.msra.mxu0 %v858
    %2571 = vmatprep.subr.mxu0 0.0
    %2572 = vmatpush1.msra.mxu0 %v855
    %2573 = vmatprep.subr.mxu0 0.0
    %2574 = vmatpush1.msra.mxu0 %v852
    %2575 = vmatprep.subr.mxu0 0.0
    %2576 = vmatpush2.msra.mxu0 0.0
    %2577 = vmatprep.subr.mxu0 0.0
    %2578 = vmatpush2.msra.mxu0 0.0
    %2579 = vmatprep.subr.mxu0 0.0
    %2580 = vmatpush2.msra.mxu0 0.0
    %2581 = vmatprep.subr.mxu0 0.0
    %2582 = vmatpush2.msra.mxu0 0.0
    %2583 = vmatprep.subr.mxu0 0.0
    %2584 = vmatpush2.msra.mxu0 0.0
    %2585 = vmatprep.subr.mxu0 0.0
    %2586 = vmatpush2.msra.mxu0 0.0
    %2587 = vmatprep.subr.mxu0 0.0
    %2588 = vmatpush2.msra.mxu0 0.0
    %2589 = vmatprep.subr.mxu0 0.0
    %2590 = vmatpush2.msra.mxu0 0.0
    %2591 = vmatprep.subr.mxu0 0.0
    %2592 = vmatpush2.msra.mxu0 0.0
    %2593 = vmatprep.subr.mxu0 0.0
    %2594 = vmatpush2.msra.mxu0 0.0
    %2595 = vmatprep.subr.mxu0 0.0
    %2596 = vmatpush2.msra.mxu0 0.0
    %2597 = vmatprep.subr.mxu0 0.0
    %2598 = vmatpush2.msra.mxu0 0.0
    %2599 = vmatprep.subr.mxu0 0.0
    %2600 = vmatpush2.msra.mxu0 0.0
    %2601 = vmatprep.subr.mxu0 0.0
    %2602 = vmatpush2.msra.mxu0 0.0
    %2603 = vmatprep.subr.mxu0 0.0
    %2604 = vmatpush2.msra.mxu0 0.0
    %2605 = vmatprep.subr.mxu0 0.0
    %2606 = vmatpush2.msra.mxu0 0.0
    %2607 = vmatprep.mubr.f32.mxu0 0.0
    %2608 = vmatmul.mubr.f32.gmra.mxu0 %v2326
    %v2609 = vpop.f32.mrf.mxu0
    %v2610 = vadd.f32 0.0, %v2609
    %v2611 = vpop.f32.mrf.mxu0
    %2612 = vdwg.mxu0
    %s2613 = smul.addr %s2287, 8
    %s2614 = scalar_lea.vmem [#allocation2], %s2613
    %v2615 = vld [vmem:[%s2614] sm:$0xff]
    %v2616 = vld [vmem:[%s2614 + $0x8] sm:$0xff]
    %v2617 = vld [vmem:[%s2614 + $0x10] sm:$0xff]
    %v2618 = vadd.f32 %v2615, %v2398
    %v2619 = vxor.u32 %v2618, 2147483648
    %v2620 = vmul.f32 %v2619, 1.442695
    %v2621 = vpow.pop %v2620
    %v2622 = vadd.f32 %v2621, 1.0
    %v2623 = vrcp.pop %v2622
    %v2624 = vmul.f32 1.0, %v2623
    %v2625 = vadd.f32 %v2616, %v2400
    %v2626 = vxor.u32 %v2625, 2147483648
    %v2627 = vmul.f32 %v2626, 1.442695
    %v2628 = vpow.pop %v2627
    %v2629 = vadd.f32 %v2628, 1.0
    %v2630 = vrcp.pop %v2629
    %v2631 = vmul.f32 1.0, %v2630
    %v2632 = vadd.f32 %v2469, %v903
    %v2633 = vmul.f32 %v2624, %v2632
    %v2634 = vadd.f32 %v2617, %v2633
    %v2635 = vtanh.pop %v2634
    %v2636 = vsub.f32 1.0, %v2631
    %v2637 = vmul.f32 %v2636, %v2635
    %v2638 = vmul.f32 %v2631, %v2320
    %v2639 = vadd.f32 %v2637, %v2638
    %s2640 = smul.addr %s2259, 8
    %s2641 = scalar_lea.vmem [#allocation3], %s2640
    %v2642 = vld [vmem:[%s2641] sm:$0xff]
    %v2643 = vld [vmem:[%s2641 + $0x8] sm:$0xff]
    %v2644 = vld [vmem:[%s2641 + $0x10] sm:$0xff]
    %v2645 = vadd.f32 %v2642, %v2539
    %v2646 = vxor.u32 %v2645, 2147483648
    %v2647 = vmul.f32 %v2646, 1.442695
    %v2648 = vpow.pop %v2647
    %v2649 = vadd.f32 %v2648, 1.0
    %v2650 = vrcp.pop %v2649
    %v2651 = vmul.f32 1.0, %v2650
    %v2652 = vadd.f32 %v2643, %v2541
    %v2653 = vxor.u32 %v2652, 2147483648
    %v2654 = vmul.f32 %v2653, 1.442695
    %v2655 = vpow.pop %v2654
    %v2656 = vadd.f32 %v2655, 1.0
    %v2657 = vrcp.pop %v2656
    %v2658 = vmul.f32 1.0, %v2657
    %v2659 = vadd.f32 %v2610, %v910
    %v2660 = vmul.f32 %v2651, %v2659
    %v2661 = vadd.f32 %v2644, %v2660
    %v2662 = vtanh.pop %v2661
    %v2663 = vsub.f32 1.0, %v2658
    %v2664 = vmul.f32 %v2663, %v2662
    %v2665 = vmul.f32 %v2658, %v2326
    %v2666 = vadd.f32 %v2664, %v2665
    %s2667 = sadd.s32 %s912, 4
    %p2668 = scmp.lt.s32.totalorder %s2667, 8
    %s2669 = scalar_select %p2668, 1, 0
    %v2670 = vstv %s2669
    %vm2671 = vcmp.eq.s32.totalorder %v2670, 1
    %v2672 = vsel %vm2671, %v2639, %v2320
    %s2673 = sadd.s32 %s914, 3
    %p2674 = scmp.lt.s32.totalorder %s2673, 8
    %s2675 = scalar_select %p2674, 1, 0
    %v2676 = vstv %s2675
    %vm2677 = vcmp.eq.s32.totalorder %v2676, 1
    %v2678 = vsel %vm2677, %v2666, %v2326
    %s2679 = scalar_lea.vmem [#allocation20], 32
    %2680 = vst [vmem:[%s2679] sm:$0xff] %v2672
    %s2681 = scalar_lea.vmem [#allocation21], 24
    %2682 = vst [vmem:[%s2681] sm:$0xff] %v2678
    %2683 = vmatprep.subr.mxu0 %v848
    %2684 = vmatpush1.msra.mxu0 %v847
    %2685 = vmatprep.subr.mxu0 %v845
    %2686 = vmatpush1.msra.mxu0 %v844
    %2687 = vmatprep.subr.mxu0 %v842
    %2688 = vmatpush1.msra.mxu0 %v841
    %2689 = vmatprep.subr.mxu0 %v839
    %2690 = vmatpush1.msra.mxu0 %v838
    %2691 = vmatprep.subr.mxu0 %v836
    %2692 = vmatpush1.msra.mxu0 %v835
    %2693 = vmatprep.subr.mxu0 %v833
    %2694 = vmatpush1.msra.mxu0 %v832
    %2695 = vmatprep.subr.mxu0 %v830
    %2696 = vmatpush1.msra.mxu0 %v829
    %2697 = vmatprep.subr.mxu0 %v827
    %2698 = vmatpush1.msra.mxu0 %v826
    %2699 = vmatprep.subr.mxu0 %v824
    %2700 = vmatpush1.msra.mxu0 %v823
    %2701 = vmatprep.subr.mxu0 %v821
    %2702 = vmatpush1.msra.mxu0 %v820
    %2703 = vmatprep.subr.mxu0 %v818
    %2704 = vmatpush1.msra.mxu0 %v817
    %2705 = vmatprep.subr.mxu0 %v815
    %2706 = vmatpush1.msra.mxu0 %v814
    %2707 = vmatprep.subr.mxu0 %v812
    %2708 = vmatpush1.msra.mxu0 %v811
    %2709 = vmatprep.subr.mxu0 %v809
    %2710 = vmatpush1.msra.mxu0 %v808
    %2711 = vmatprep.subr.mxu0 %v806
    %2712 = vmatpush1.msra.mxu0 %v805
    %2713 = vmatprep.subr.mxu0 %v803
    %2714 = vmatpush1.msra.mxu0 %v802
    %2715 = vmatprep.subr.mxu0 0.0
    %2716 = vmatpush2.msra.mxu0 0.0
    %2717 = vmatprep.subr.mxu0 0.0
    %2718 = vmatpush2.msra.mxu0 0.0
    %2719 = vmatprep.subr.mxu0 0.0
    %2720 = vmatpush2.msra.mxu0 0.0
    %2721 = vmatprep.subr.mxu0 0.0
    %2722 = vmatpush2.msra.mxu0 0.0
    %2723 = vmatprep.subr.mxu0 0.0
    %2724 = vmatpush2.msra.mxu0 0.0
    %2725 = vmatprep.subr.mxu0 0.0
    %2726 = vmatpush2.msra.mxu0 0.0
    %2727 = vmatprep.subr.mxu0 0.0
    %2728 = vmatpush2.msra.mxu0 0.0
    %2729 = vmatprep.subr.mxu0 0.0
    %2730 = vmatpush2.msra.mxu0 0.0
    %2731 = vmatprep.subr.mxu0 0.0
    %2732 = vmatpush2.msra.mxu0 0.0
    %2733 = vmatprep.subr.mxu0 0.0
    %2734 = vmatpush2.msra.mxu0 0.0
    %2735 = vmatprep.subr.mxu0 0.0
    %2736 = vmatpush2.msra.mxu0 0.0
    %2737 = vmatprep.subr.mxu0 0.0
    %2738 = vmatpush2.msra.mxu0 0.0
    %2739 = vmatprep.subr.mxu0 0.0
    %2740 = vmatpush2.msra.mxu0 0.0
    %2741 = vmatprep.subr.mxu0 0.0
    %2742 = vmatpush2.msra.mxu0 0.0
    %2743 = vmatprep.subr.mxu0 0.0
    %2744 = vmatpush2.msra.mxu0 0.0
    %2745 = vmatprep.subr.mxu0 0.0
    %2746 = vmatpush2.msra.mxu0 0.0
    %2747 = vmatprep.mubr.f32.mxu0 0.0
    %2748 = vmatmul.mubr.f32.gmra.mxu0 %v2672
    %v2749 = vpop.f32.mrf.mxu0
    %v2750 = vadd.f32 0.0, %v2749
    %v2751 = vpop.f32.mrf.mxu0
    %v2752 = vadd.f32 0.0, %v2751
    %2753 = vdwg.mxu0
    %2754 = vmatprep.subr.mxu0 0.0
    %2755 = vmatpush1.msra.mxu0 %v849
    %2756 = vmatprep.subr.mxu0 0.0
    %2757 = vmatpush1.msra.mxu0 %v846
    %2758 = vmatprep.subr.mxu0 0.0
    %2759 = vmatpush1.msra.mxu0 %v843
    %2760 = vmatprep.subr.mxu0 0.0
    %2761 = vmatpush1.msra.mxu0 %v840
    %2762 = vmatprep.subr.mxu0 0.0
    %2763 = vmatpush1.msra.mxu0 %v837
    %2764 = vmatprep.subr.mxu0 0.0
    %2765 = vmatpush1.msra.mxu0 %v834
    %2766 = vmatprep.subr.mxu0 0.0
    %2767 = vmatpush1.msra.mxu0 %v831
    %2768 = vmatprep.subr.mxu0 0.0
    %2769 = vmatpush1.msra.mxu0 %v828
    %2770 = vmatprep.subr.mxu0 0.0
    %2771 = vmatpush1.msra.mxu0 %v825
    %2772 = vmatprep.subr.mxu0 0.0
    %2773 = vmatpush1.msra.mxu0 %v822
    %2774 = vmatprep.subr.mxu0 0.0
    %2775 = vmatpush1.msra.mxu0 %v819
    %2776 = vmatprep.subr.mxu0 0.0
    %2777 = vmatpush1.msra.mxu0 %v816
    %2778 = vmatprep.subr.mxu0 0.0
    %2779 = vmatpush1.msra.mxu0 %v813
    %2780 = vmatprep.subr.mxu0 0.0
    %2781 = vmatpush1.msra.mxu0 %v810
    %2782 = vmatprep.subr.mxu0 0.0
    %2783 = vmatpush1.msra.mxu0 %v807
    %2784 = vmatprep.subr.mxu0 0.0
    %2785 = vmatpush1.msra.mxu0 %v804
    %2786 = vmatprep.subr.mxu0 0.0
    %2787 = vmatpush2.msra.mxu0 0.0
    %2788 = vmatprep.subr.mxu0 0.0
    %2789 = vmatpush2.msra.mxu0 0.0
    %2790 = vmatprep.subr.mxu0 0.0
    %2791 = vmatpush2.msra.mxu0 0.0
    %2792 = vmatprep.subr.mxu0 0.0
    %2793 = vmatpush2.msra.mxu0 0.0
    %2794 = vmatprep.subr.mxu0 0.0
    %2795 = vmatpush2.msra.mxu0 0.0
    %2796 = vmatprep.subr.mxu0 0.0
    %2797 = vmatpush2.msra.mxu0 0.0
    %2798 = vmatprep.subr.mxu0 0.0
    %2799 = vmatpush2.msra.mxu0 0.0
    %2800 = vmatprep.subr.mxu0 0.0
    %2801 = vmatpush2.msra.mxu0 0.0
    %2802 = vmatprep.subr.mxu0 0.0
    %2803 = vmatpush2.msra.mxu0 0.0
    %2804 = vmatprep.subr.mxu0 0.0
    %2805 = vmatpush2.msra.mxu0 0.0
    %2806 = vmatprep.subr.mxu0 0.0
    %2807 = vmatpush2.msra.mxu0 0.0
    %2808 = vmatprep.subr.mxu0 0.0
    %2809 = vmatpush2.msra.mxu0 0.0
    %2810 = vmatprep.subr.mxu0 0.0
    %2811 = vmatpush2.msra.mxu0 0.0
    %2812 = vmatprep.subr.mxu0 0.0
    %2813 = vmatpush2.msra.mxu0 0.0
    %2814 = vmatprep.subr.mxu0 0.0
    %2815 = vmatpush2.msra.mxu0 0.0
    %2816 = vmatprep.subr.mxu0 0.0
    %2817 = vmatpush2.msra.mxu0 0.0
    %2818 = vmatprep.mubr.f32.mxu0 0.0
    %2819 = vmatmul.mubr.f32.gmra.mxu0 %v2672
    %v2820 = vpop.f32.mrf.mxu0
    %v2821 = vadd.f32 0.0, %v2820
    %v2822 = vpop.f32.mrf.mxu0
    %2823 = vdwg.mxu0
    %2824 = vmatprep.subr.mxu0 %v896
    %2825 = vmatpush1.msra.mxu0 %v895
    %2826 = vmatprep.subr.mxu0 %v893
    %2827 = vmatpush1.msra.mxu0 %v892
    %2828 = vmatprep.subr.mxu0 %v890
    %2829 = vmatpush1.msra.mxu0 %v889
    %2830 = vmatprep.subr.mxu0 %v887
    %2831 = vmatpush1.msra.mxu0 %v886
    %2832 = vmatprep.subr.mxu0 %v884
    %2833 = vmatpush1.msra.mxu0 %v883
    %2834 = vmatprep.subr.mxu0 %v881
    %2835 = vmatpush1.msra.mxu0 %v880
    %2836 = vmatprep.subr.mxu0 %v878
    %2837 = vmatpush1.msra.mxu0 %v877
    %2838 = vmatprep.subr.mxu0 %v875
    %2839 = vmatpush1.msra.mxu0 %v874
    %2840 = vmatprep.subr.mxu0 %v872
    %2841 = vmatpush1.msra.mxu0 %v871
    %2842 = vmatprep.subr.mxu0 %v869
    %2843 = vmatpush1.msra.mxu0 %v868
    %2844 = vmatprep.subr.mxu0 %v866
    %2845 = vmatpush1.msra.mxu0 %v865
    %2846 = vmatprep.subr.mxu0 %v863
    %2847 = vmatpush1.msra.mxu0 %v862
    %2848 = vmatprep.subr.mxu0 %v860
    %2849 = vmatpush1.msra.mxu0 %v859
    %2850 = vmatprep.subr.mxu0 %v857
    %2851 = vmatpush1.msra.mxu0 %v856
    %2852 = vmatprep.subr.mxu0 %v854
    %2853 = vmatpush1.msra.mxu0 %v853
    %2854 = vmatprep.subr.mxu0 %v851
    %2855 = vmatpush1.msra.mxu0 %v850
    %2856 = vmatprep.subr.mxu0 0.0
    %2857 = vmatpush2.msra.mxu0 0.0
    %2858 = vmatprep.subr.mxu0 0.0
    %2859 = vmatpush2.msra.mxu0 0.0
    %2860 = vmatprep.subr.mxu0 0.0
    %2861 = vmatpush2.msra.mxu0 0.0
    %2862 = vmatprep.subr.mxu0 0.0
    %2863 = vmatpush2.msra.mxu0 0.0
    %2864 = vmatprep.subr.mxu0 0.0
    %2865 = vmatpush2.msra.mxu0 0.0
    %2866 = vmatprep.subr.mxu0 0.0
    %2867 = vmatpush2.msra.mxu0 0.0
    %2868 = vmatprep.subr.mxu0 0.0
    %2869 = vmatpush2.msra.mxu0 0.0
    %2870 = vmatprep.subr.mxu0 0.0
    %2871 = vmatpush2.msra.mxu0 0.0
    %2872 = vmatprep.subr.mxu0 0.0
    %2873 = vmatpush2.msra.mxu0 0.0
    %2874 = vmatprep.subr.mxu0 0.0
    %2875 = vmatpush2.msra.mxu0 0.0
    %2876 = vmatprep.subr.mxu0 0.0
    %2877 = vmatpush2.msra.mxu0 0.0
    %2878 = vmatprep.subr.mxu0 0.0
    %2879 = vmatpush2.msra.mxu0 0.0
    %2880 = vmatprep.subr.mxu0 0.0
    %2881 = vmatpush2.msra.mxu0 0.0
    %2882 = vmatprep.subr.mxu0 0.0
    %2883 = vmatpush2.msra.mxu0 0.0
    %2884 = vmatprep.subr.mxu0 0.0
    %2885 = vmatpush2.msra.mxu0 0.0
    %2886 = vmatprep.subr.mxu0 0.0
    %2887 = vmatpush2.msra.mxu0 0.0
    %2888 = vmatprep.mubr.f32.mxu0 0.0
    %2889 = vmatmul.mubr.f32.gmra.mxu0 %v2678
    %v2890 = vpop.f32.mrf.mxu0
    %v2891 = vadd.f32 0.0, %v2890
    %v2892 = vpop.f32.mrf.mxu0
    %v2893 = vadd.f32 0.0, %v2892
    %2894 = vdwg.mxu0
    %2895 = vmatprep.subr.mxu0 0.0
    %2896 = vmatpush1.msra.mxu0 %v897
    %2897 = vmatprep.subr.mxu0 0.0
    %2898 = vmatpush1.msra.mxu0 %v894
    %2899 = vmatprep.subr.mxu0 0.0
    %2900 = vmatpush1.msra.mxu0 %v891
    %2901 = vmatprep.subr.mxu0 0.0
    %2902 = vmatpush1.msra.mxu0 %v888
    %2903 = vmatprep.subr.mxu0 0.0
    %2904 = vmatpush1.msra.mxu0 %v885
    %2905 = vmatprep.subr.mxu0 0.0
    %2906 = vmatpush1.msra.mxu0 %v882
    %2907 = vmatprep.subr.mxu0 0.0
    %2908 = vmatpush1.msra.mxu0 %v879
    %2909 = vmatprep.subr.mxu0 0.0
    %2910 = vmatpush1.msra.mxu0 %v876
    %2911 = vmatprep.subr.mxu0 0.0
    %2912 = vmatpush1.msra.mxu0 %v873
    %2913 = vmatprep.subr.mxu0 0.0
    %2914 = vmatpush1.msra.mxu0 %v870
    %2915 = vmatprep.subr.mxu0 0.0
    %2916 = vmatpush1.msra.mxu0 %v867
    %2917 = vmatprep.subr.mxu0 0.0
    %2918 = vmatpush1.msra.mxu0 %v864
    %2919 = vmatprep.subr.mxu0 0.0
    %2920 = vmatpush1.msra.mxu0 %v861
    %2921 = vmatprep.subr.mxu0 0.0
    %2922 = vmatpush1.msra.mxu0 %v858
    %2923 = vmatprep.subr.mxu0 0.0
    %2924 = vmatpush1.msra.mxu0 %v855
    %2925 = vmatprep.subr.mxu0 0.0
    %2926 = vmatpush1.msra.mxu0 %v852
    %2927 = vmatprep.subr.mxu0 0.0
    %2928 = vmatpush2.msra.mxu0 0.0
    %2929 = vmatprep.subr.mxu0 0.0
    %2930 = vmatpush2.msra.mxu0 0.0
    %2931 = vmatprep.subr.mxu0 0.0
    %2932 = vmatpush2.msra.mxu0 0.0
    %2933 = vmatprep.subr.mxu0 0.0
    %2934 = vmatpush2.msra.mxu0 0.0
    %2935 = vmatprep.subr.mxu0 0.0
    %2936 = vmatpush2.msra.mxu0 0.0
    %2937 = vmatprep.subr.mxu0 0.0
    %2938 = vmatpush2.msra.mxu0 0.0
    %2939 = vmatprep.subr.mxu0 0.0
    %2940 = vmatpush2.msra.mxu0 0.0
    %2941 = vmatprep.subr.mxu0 0.0
    %2942 = vmatpush2.msra.mxu0 0.0
    %2943 = vmatprep.subr.mxu0 0.0
    %2944 = vmatpush2.msra.mxu0 0.0
    %2945 = vmatprep.subr.mxu0 0.0
    %2946 = vmatpush2.msra.mxu0 0.0
    %2947 = vmatprep.subr.mxu0 0.0
    %2948 = vmatpush2.msra.mxu0 0.0
    %2949 = vmatprep.subr.mxu0 0.0
    %2950 = vmatpush2.msra.mxu0 0.0
    %2951 = vmatprep.subr.mxu0 0.0
    %2952 = vmatpush2.msra.mxu0 0.0
    %2953 = vmatprep.subr.mxu0 0.0
    %2954 = vmatpush2.msra.mxu0 0.0
    %2955 = vmatprep.subr.mxu0 0.0
    %2956 = vmatpush2.msra.mxu0 0.0
    %2957 = vmatprep.subr.mxu0 0.0
    %2958 = vmatpush2.msra.mxu0 0.0
    %2959 = vmatprep.mubr.f32.mxu0 0.0
    %2960 = vmatmul.mubr.f32.gmra.mxu0 %v2678
    %v2961 = vpop.f32.mrf.mxu0
    %v2962 = vadd.f32 0.0, %v2961
    %v2963 = vpop.f32.mrf.mxu0
    %2964 = vdwg.mxu0
    %s2965 = smul.addr %s1933, 8
    %s2966 = scalar_lea.vmem [#allocation2], %s2965
    %v2967 = vld [vmem:[%s2966] sm:$0xff]
    %v2968 = vld [vmem:[%s2966 + $0x8] sm:$0xff]
    %v2969 = vld [vmem:[%s2966 + $0x10] sm:$0xff]
    %v2970 = vadd.f32 %v2967, %v2750
    %v2971 = vxor.u32 %v2970, 2147483648
    %v2972 = vmul.f32 %v2971, 1.442695
    %v2973 = vpow.pop %v2972
    %v2974 = vadd.f32 %v2973, 1.0
    %v2975 = vrcp.pop %v2974
    %v2976 = vmul.f32 1.0, %v2975
    %v2977 = vadd.f32 %v2968, %v2752
    %v2978 = vxor.u32 %v2977, 2147483648
    %v2979 = vmul.f32 %v2978, 1.442695
    %v2980 = vpow.pop %v2979
    %v2981 = vadd.f32 %v2980, 1.0
    %v2982 = vrcp.pop %v2981
    %v2983 = vmul.f32 1.0, %v2982
    %v2984 = vadd.f32 %v2821, %v903
    %v2985 = vmul.f32 %v2976, %v2984
    %v2986 = vadd.f32 %v2969, %v2985
    %v2987 = vtanh.pop %v2986
    %v2988 = vsub.f32 1.0, %v2983
    %v2989 = vmul.f32 %v2988, %v2987
    %v2990 = vmul.f32 %v2983, %v2672
    %v2991 = vadd.f32 %v2989, %v2990
    %s2992 = smul.addr %s1905, 8
    %s2993 = scalar_lea.vmem [#allocation3], %s2992
    %v2994 = vld [vmem:[%s2993] sm:$0xff]
    %v2995 = vld [vmem:[%s2993 + $0x8] sm:$0xff]
    %v2996 = vld [vmem:[%s2993 + $0x10] sm:$0xff]
    %v2997 = vadd.f32 %v2994, %v2891
    %v2998 = vxor.u32 %v2997, 2147483648
    %v2999 = vmul.f32 %v2998, 1.442695
    %v3000 = vpow.pop %v2999
    %v3001 = vadd.f32 %v3000, 1.0
    %v3002 = vrcp.pop %v3001
    %v3003 = vmul.f32 1.0, %v3002
    %v3004 = vadd.f32 %v2995, %v2893
    %v3005 = vxor.u32 %v3004, 2147483648
    %v3006 = vmul.f32 %v3005, 1.442695
    %v3007 = vpow.pop %v3006
    %v3008 = vadd.f32 %v3007, 1.0
    %v3009 = vrcp.pop %v3008
    %v3010 = vmul.f32 1.0, %v3009
    %v3011 = vadd.f32 %v2962, %v910
    %v3012 = vmul.f32 %v3003, %v3011
    %v3013 = vadd.f32 %v2996, %v3012
    %v3014 = vtanh.pop %v3013
    %v3015 = vsub.f32 1.0, %v3010
    %v3016 = vmul.f32 %v3015, %v3014
    %v3017 = vmul.f32 %v3010, %v2678
    %v3018 = vadd.f32 %v3016, %v3017
    %s3019 = sadd.s32 %s912, 5
    %p3020 = scmp.lt.s32.totalorder %s3019, 8
    %s3021 = scalar_select %p3020, 1, 0
    %v3022 = vstv %s3021
    %vm3023 = vcmp.eq.s32.totalorder %v3022, 1
    %v3024 = vsel %vm3023, %v2991, %v2672
    %s3025 = sadd.s32 %s914, 2
    %p3026 = scmp.lt.s32.totalorder %s3025, 8
    %s3027 = scalar_select %p3026, 1, 0
    %v3028 = vstv %s3027
    %vm3029 = vcmp.eq.s32.totalorder %v3028, 1
    %v3030 = vsel %vm3029, %v3018, %v2678
    %s3031 = scalar_lea.vmem [#allocation20], 40
    %3032 = vst [vmem:[%s3031] sm:$0xff] %v3024
    %s3033 = scalar_lea.vmem [#allocation21], 16
    %3034 = vst [vmem:[%s3033] sm:$0xff] %v3030
    %3035 = vmatprep.subr.mxu0 %v848
    %3036 = vmatpush1.msra.mxu0 %v847
    %3037 = vmatprep.subr.mxu0 %v845
    %3038 = vmatpush1.msra.mxu0 %v844
    %3039 = vmatprep.subr.mxu0 %v842
    %3040 = vmatpush1.msra.mxu0 %v841
    %3041 = vmatprep.subr.mxu0 %v839
    %3042 = vmatpush1.msra.mxu0 %v838
    %3043 = vmatprep.subr.mxu0 %v836
    %3044 = vmatpush1.msra.mxu0 %v835
    %3045 = vmatprep.subr.mxu0 %v833
    %3046 = vmatpush1.msra.mxu0 %v832
    %3047 = vmatprep.subr.mxu0 %v830
    %3048 = vmatpush1.msra.mxu0 %v829
    %3049 = vmatprep.subr.mxu0 %v827
    %3050 = vmatpush1.msra.mxu0 %v826
    %3051 = vmatprep.subr.mxu0 %v824
    %3052 = vmatpush1.msra.mxu0 %v823
    %3053 = vmatprep.subr.mxu0 %v821
    %3054 = vmatpush1.msra.mxu0 %v820
    %3055 = vmatprep.subr.mxu0 %v818
    %3056 = vmatpush1.msra.mxu0 %v817
    %3057 = vmatprep.subr.mxu0 %v815
    %3058 = vmatpush1.msra.mxu0 %v814
    %3059 = vmatprep.subr.mxu0 %v812
    %3060 = vmatpush1.msra.mxu0 %v811
    %3061 = vmatprep.subr.mxu0 %v809
    %3062 = vmatpush1.msra.mxu0 %v808
    %3063 = vmatprep.subr.mxu0 %v806
    %3064 = vmatpush1.msra.mxu0 %v805
    %3065 = vmatprep.subr.mxu0 %v803
    %3066 = vmatpush1.msra.mxu0 %v802
    %3067 = vmatprep.subr.mxu0 0.0
    %3068 = vmatpush2.msra.mxu0 0.0
    %3069 = vmatprep.subr.mxu0 0.0
    %3070 = vmatpush2.msra.mxu0 0.0
    %3071 = vmatprep.subr.mxu0 0.0
    %3072 = vmatpush2.msra.mxu0 0.0
    %3073 = vmatprep.subr.mxu0 0.0
    %3074 = vmatpush2.msra.mxu0 0.0
    %3075 = vmatprep.subr.mxu0 0.0
    %3076 = vmatpush2.msra.mxu0 0.0
    %3077 = vmatprep.subr.mxu0 0.0
    %3078 = vmatpush2.msra.mxu0 0.0
    %3079 = vmatprep.subr.mxu0 0.0
    %3080 = vmatpush2.msra.mxu0 0.0
    %3081 = vmatprep.subr.mxu0 0.0
    %3082 = vmatpush2.msra.mxu0 0.0
    %3083 = vmatprep.subr.mxu0 0.0
    %3084 = vmatpush2.msra.mxu0 0.0
    %3085 = vmatprep.subr.mxu0 0.0
    %3086 = vmatpush2.msra.mxu0 0.0
    %3087 = vmatprep.subr.mxu0 0.0
    %3088 = vmatpush2.msra.mxu0 0.0
    %3089 = vmatprep.subr.mxu0 0.0
    %3090 = vmatpush2.msra.mxu0 0.0
    %3091 = vmatprep.subr.mxu0 0.0
    %3092 = vmatpush2.msra.mxu0 0.0
    %3093 = vmatprep.subr.mxu0 0.0
    %3094 = vmatpush2.msra.mxu0 0.0
    %3095 = vmatprep.subr.mxu0 0.0
    %3096 = vmatpush2.msra.mxu0 0.0
    %3097 = vmatprep.subr.mxu0 0.0
    %3098 = vmatpush2.msra.mxu0 0.0
    %3099 = vmatprep.mubr.f32.mxu0 0.0
    %3100 = vmatmul.mubr.f32.gmra.mxu0 %v3024
    %v3101 = vpop.f32.mrf.mxu0
    %v3102 = vadd.f32 0.0, %v3101
    %v3103 = vpop.f32.mrf.mxu0
    %v3104 = vadd.f32 0.0, %v3103
    %3105 = vdwg.mxu0
    %3106 = vmatprep.subr.mxu0 0.0
    %3107 = vmatpush1.msra.mxu0 %v849
    %3108 = vmatprep.subr.mxu0 0.0
    %3109 = vmatpush1.msra.mxu0 %v846
    %3110 = vmatprep.subr.mxu0 0.0
    %3111 = vmatpush1.msra.mxu0 %v843
    %3112 = vmatprep.subr.mxu0 0.0
    %3113 = vmatpush1.msra.mxu0 %v840
    %3114 = vmatprep.subr.mxu0 0.0
    %3115 = vmatpush1.msra.mxu0 %v837
    %3116 = vmatprep.subr.mxu0 0.0
    %3117 = vmatpush1.msra.mxu0 %v834
    %3118 = vmatprep.subr.mxu0 0.0
    %3119 = vmatpush1.msra.mxu0 %v831
    %3120 = vmatprep.subr.mxu0 0.0
    %3121 = vmatpush1.msra.mxu0 %v828
    %3122 = vmatprep.subr.mxu0 0.0
    %3123 = vmatpush1.msra.mxu0 %v825
    %3124 = vmatprep.subr.mxu0 0.0
    %3125 = vmatpush1.msra.mxu0 %v822
    %3126 = vmatprep.subr.mxu0 0.0
    %3127 = vmatpush1.msra.mxu0 %v819
    %3128 = vmatprep.subr.mxu0 0.0
    %3129 = vmatpush1.msra.mxu0 %v816
    %3130 = vmatprep.subr.mxu0 0.0
    %3131 = vmatpush1.msra.mxu0 %v813
    %3132 = vmatprep.subr.mxu0 0.0
    %3133 = vmatpush1.msra.mxu0 %v810
    %3134 = vmatprep.subr.mxu0 0.0
    %3135 = vmatpush1.msra.mxu0 %v807
    %3136 = vmatprep.subr.mxu0 0.0
    %3137 = vmatpush1.msra.mxu0 %v804
    %3138 = vmatprep.subr.mxu0 0.0
    %3139 = vmatpush2.msra.mxu0 0.0
    %3140 = vmatprep.subr.mxu0 0.0
    %3141 = vmatpush2.msra.mxu0 0.0
    %3142 = vmatprep.subr.mxu0 0.0
    %3143 = vmatpush2.msra.mxu0 0.0
    %3144 = vmatprep.subr.mxu0 0.0
    %3145 = vmatpush2.msra.mxu0 0.0
    %3146 = vmatprep.subr.mxu0 0.0
    %3147 = vmatpush2.msra.mxu0 0.0
    %3148 = vmatprep.subr.mxu0 0.0
    %3149 = vmatpush2.msra.mxu0 0.0
    %3150 = vmatprep.subr.mxu0 0.0
    %3151 = vmatpush2.msra.mxu0 0.0
    %3152 = vmatprep.subr.mxu0 0.0
    %3153 = vmatpush2.msra.mxu0 0.0
    %3154 = vmatprep.subr.mxu0 0.0
    %3155 = vmatpush2.msra.mxu0 0.0
    %3156 = vmatprep.subr.mxu0 0.0
    %3157 = vmatpush2.msra.mxu0 0.0
    %3158 = vmatprep.subr.mxu0 0.0
    %3159 = vmatpush2.msra.mxu0 0.0
    %3160 = vmatprep.subr.mxu0 0.0
    %3161 = vmatpush2.msra.mxu0 0.0
    %3162 = vmatprep.subr.mxu0 0.0
    %3163 = vmatpush2.msra.mxu0 0.0
    %3164 = vmatprep.subr.mxu0 0.0
    %3165 = vmatpush2.msra.mxu0 0.0
    %3166 = vmatprep.subr.mxu0 0.0
    %3167 = vmatpush2.msra.mxu0 0.0
    %3168 = vmatprep.subr.mxu0 0.0
    %3169 = vmatpush2.msra.mxu0 0.0
    %3170 = vmatprep.mubr.f32.mxu0 0.0
    %3171 = vmatmul.mubr.f32.gmra.mxu0 %v3024
    %v3172 = vpop.f32.mrf.mxu0
    %v3173 = vadd.f32 0.0, %v3172
    %v3174 = vpop.f32.mrf.mxu0
    %3175 = vdwg.mxu0
    %3176 = vmatprep.subr.mxu0 %v896
    %3177 = vmatpush1.msra.mxu0 %v895
    %3178 = vmatprep.subr.mxu0 %v893
    %3179 = vmatpush1.msra.mxu0 %v892
    %3180 = vmatprep.subr.mxu0 %v890
    %3181 = vmatpush1.msra.mxu0 %v889
    %3182 = vmatprep.subr.mxu0 %v887
    %3183 = vmatpush1.msra.mxu0 %v886
    %3184 = vmatprep.subr.mxu0 %v884
    %3185 = vmatpush1.msra.mxu0 %v883
    %3186 = vmatprep.subr.mxu0 %v881
    %3187 = vmatpush1.msra.mxu0 %v880
    %3188 = vmatprep.subr.mxu0 %v878
    %3189 = vmatpush1.msra.mxu0 %v877
    %3190 = vmatprep.subr.mxu0 %v875
    %3191 = vmatpush1.msra.mxu0 %v874
    %3192 = vmatprep.subr.mxu0 %v872
    %3193 = vmatpush1.msra.mxu0 %v871
    %3194 = vmatprep.subr.mxu0 %v869
    %3195 = vmatpush1.msra.mxu0 %v868
    %3196 = vmatprep.subr.mxu0 %v866
    %3197 = vmatpush1.msra.mxu0 %v865
    %3198 = vmatprep.subr.mxu0 %v863
    %3199 = vmatpush1.msra.mxu0 %v862
    %3200 = vmatprep.subr.mxu0 %v860
    %3201 = vmatpush1.msra.mxu0 %v859
    %3202 = vmatprep.subr.mxu0 %v857
    %3203 = vmatpush1.msra.mxu0 %v856
    %3204 = vmatprep.subr.mxu0 %v854
    %3205 = vmatpush1.msra.mxu0 %v853
    %3206 = vmatprep.subr.mxu0 %v851
    %3207 = vmatpush1.msra.mxu0 %v850
    %3208 = vmatprep.subr.mxu0 0.0
    %3209 = vmatpush2.msra.mxu0 0.0
    %3210 = vmatprep.subr.mxu0 0.0
    %3211 = vmatpush2.msra.mxu0 0.0
    %3212 = vmatprep.subr.mxu0 0.0
    %3213 = vmatpush2.msra.mxu0 0.0
    %3214 = vmatprep.subr.mxu0 0.0
    %3215 = vmatpush2.msra.mxu0 0.0
    %3216 = vmatprep.subr.mxu0 0.0
    %3217 = vmatpush2.msra.mxu0 0.0
    %3218 = vmatprep.subr.mxu0 0.0
    %3219 = vmatpush2.msra.mxu0 0.0
    %3220 = vmatprep.subr.mxu0 0.0
    %3221 = vmatpush2.msra.mxu0 0.0
    %3222 = vmatprep.subr.mxu0 0.0
    %3223 = vmatpush2.msra.mxu0 0.0
    %3224 = vmatprep.subr.mxu0 0.0
    %3225 = vmatpush2.msra.mxu0 0.0
    %3226 = vmatprep.subr.mxu0 0.0
    %3227 = vmatpush2.msra.mxu0 0.0
    %3228 = vmatprep.subr.mxu0 0.0
    %3229 = vmatpush2.msra.mxu0 0.0
    %3230 = vmatprep.subr.mxu0 0.0
    %3231 = vmatpush2.msra.mxu0 0.0
    %3232 = vmatprep.subr.mxu0 0.0
    %3233 = vmatpush2.msra.mxu0 0.0
    %3234 = vmatprep.subr.mxu0 0.0
    %3235 = vmatpush2.msra.mxu0 0.0
    %3236 = vmatprep.subr.mxu0 0.0
    %3237 = vmatpush2.msra.mxu0 0.0
    %3238 = vmatprep.subr.mxu0 0.0
    %3239 = vmatpush2.msra.mxu0 0.0
    %3240 = vmatprep.mubr.f32.mxu0 0.0
    %3241 = vmatmul.mubr.f32.gmra.mxu0 %v3030
    %v3242 = vpop.f32.mrf.mxu0
    %v3243 = vadd.f32 0.0, %v3242
    %v3244 = vpop.f32.mrf.mxu0
    %v3245 = vadd.f32 0.0, %v3244
    %3246 = vdwg.mxu0
    %3247 = vmatprep.subr.mxu0 0.0
    %3248 = vmatpush1.msra.mxu0 %v897
    %3249 = vmatprep.subr.mxu0 0.0
    %3250 = vmatpush1.msra.mxu0 %v894
    %3251 = vmatprep.subr.mxu0 0.0
    %3252 = vmatpush1.msra.mxu0 %v891
    %3253 = vmatprep.subr.mxu0 0.0
    %3254 = vmatpush1.msra.mxu0 %v888
    %3255 = vmatprep.subr.mxu0 0.0
    %3256 = vmatpush1.msra.mxu0 %v885
    %3257 = vmatprep.subr.mxu0 0.0
    %3258 = vmatpush1.msra.mxu0 %v882
    %3259 = vmatprep.subr.mxu0 0.0
    %3260 = vmatpush1.msra.mxu0 %v879
    %3261 = vmatprep.subr.mxu0 0.0
    %3262 = vmatpush1.msra.mxu0 %v876
    %3263 = vmatprep.subr.mxu0 0.0
    %3264 = vmatpush1.msra.mxu0 %v873
    %3265 = vmatprep.subr.mxu0 0.0
    %3266 = vmatpush1.msra.mxu0 %v870
    %3267 = vmatprep.subr.mxu0 0.0
    %3268 = vmatpush1.msra.mxu0 %v867
    %3269 = vmatprep.subr.mxu0 0.0
    %3270 = vmatpush1.msra.mxu0 %v864
    %3271 = vmatprep.subr.mxu0 0.0
    %3272 = vmatpush1.msra.mxu0 %v861
    %3273 = vmatprep.subr.mxu0 0.0
    %3274 = vmatpush1.msra.mxu0 %v858
    %3275 = vmatprep.subr.mxu0 0.0
    %3276 = vmatpush1.msra.mxu0 %v855
    %3277 = vmatprep.subr.mxu0 0.0
    %3278 = vmatpush1.msra.mxu0 %v852
    %3279 = vmatprep.subr.mxu0 0.0
    %3280 = vmatpush2.msra.mxu0 0.0
    %3281 = vmatprep.subr.mxu0 0.0
    %3282 = vmatpush2.msra.mxu0 0.0
    %3283 = vmatprep.subr.mxu0 0.0
    %3284 = vmatpush2.msra.mxu0 0.0
    %3285 = vmatprep.subr.mxu0 0.0
    %3286 = vmatpush2.msra.mxu0 0.0
    %3287 = vmatprep.subr.mxu0 0.0
    %3288 = vmatpush2.msra.mxu0 0.0
    %3289 = vmatprep.subr.mxu0 0.0
    %3290 = vmatpush2.msra.mxu0 0.0
    %3291 = vmatprep.subr.mxu0 0.0
    %3292 = vmatpush2.msra.mxu0 0.0
    %3293 = vmatprep.subr.mxu0 0.0
    %3294 = vmatpush2.msra.mxu0 0.0
    %3295 = vmatprep.subr.mxu0 0.0
    %3296 = vmatpush2.msra.mxu0 0.0
    %3297 = vmatprep.subr.mxu0 0.0
    %3298 = vmatpush2.msra.mxu0 0.0
    %3299 = vmatprep.subr.mxu0 0.0
    %3300 = vmatpush2.msra.mxu0 0.0
    %3301 = vmatprep.subr.mxu0 0.0
    %3302 = vmatpush2.msra.mxu0 0.0
    %3303 = vmatprep.subr.mxu0 0.0
    %3304 = vmatpush2.msra.mxu0 0.0
    %3305 = vmatprep.subr.mxu0 0.0
    %3306 = vmatpush2.msra.mxu0 0.0
    %3307 = vmatprep.subr.mxu0 0.0
    %3308 = vmatpush2.msra.mxu0 0.0
    %3309 = vmatprep.subr.mxu0 0.0
    %3310 = vmatpush2.msra.mxu0 0.0
    %3311 = vmatprep.mubr.f32.mxu0 0.0
    %3312 = vmatmul.mubr.f32.gmra.mxu0 %v3030
    %v3313 = vpop.f32.mrf.mxu0
    %v3314 = vadd.f32 0.0, %v3313
    %v3315 = vpop.f32.mrf.mxu0
    %3316 = vdwg.mxu0
    %s3317 = smul.addr %s1579, 8
    %s3318 = scalar_lea.vmem [#allocation2], %s3317
    %v3319 = vld [vmem:[%s3318] sm:$0xff]
    %v3320 = vld [vmem:[%s3318 + $0x8] sm:$0xff]
    %v3321 = vld [vmem:[%s3318 + $0x10] sm:$0xff]
    %v3322 = vadd.f32 %v3319, %v3102
    %v3323 = vxor.u32 %v3322, 2147483648
    %v3324 = vmul.f32 %v3323, 1.442695
    %v3325 = vpow.pop %v3324
    %v3326 = vadd.f32 %v3325, 1.0
    %v3327 = vrcp.pop %v3326
    %v3328 = vmul.f32 1.0, %v3327
    %v3329 = vadd.f32 %v3320, %v3104
    %v3330 = vxor.u32 %v3329, 2147483648
    %v3331 = vmul.f32 %v3330, 1.442695
    %v3332 = vpow.pop %v3331
    %v3333 = vadd.f32 %v3332, 1.0
    %v3334 = vrcp.pop %v3333
    %v3335 = vmul.f32 1.0, %v3334
    %v3336 = vadd.f32 %v3173, %v903
    %v3337 = vmul.f32 %v3328, %v3336
    %v3338 = vadd.f32 %v3321, %v3337
    %v3339 = vtanh.pop %v3338
    %v3340 = vsub.f32 1.0, %v3335
    %v3341 = vmul.f32 %v3340, %v3339
    %v3342 = vmul.f32 %v3335, %v3024
    %v3343 = vadd.f32 %v3341, %v3342
    %s3344 = smul.addr %s1551, 8
    %s3345 = scalar_lea.vmem [#allocation3], %s3344
    %v3346 = vld [vmem:[%s3345] sm:$0xff]
    %v3347 = vld [vmem:[%s3345 + $0x8] sm:$0xff]
    %v3348 = vld [vmem:[%s3345 + $0x10] sm:$0xff]
    %v3349 = vadd.f32 %v3346, %v3243
    %v3350 = vxor.u32 %v3349, 2147483648
    %v3351 = vmul.f32 %v3350, 1.442695
    %v3352 = vpow.pop %v3351
    %v3353 = vadd.f32 %v3352, 1.0
    %v3354 = vrcp.pop %v3353
    %v3355 = vmul.f32 1.0, %v3354
    %v3356 = vadd.f32 %v3347, %v3245
    %v3357 = vxor.u32 %v3356, 2147483648
    %v3358 = vmul.f32 %v3357, 1.442695
    %v3359 = vpow.pop %v3358
    %v3360 = vadd.f32 %v3359, 1.0
    %v3361 = vrcp.pop %v3360
    %v3362 = vmul.f32 1.0, %v3361
    %v3363 = vadd.f32 %v3314, %v910
    %v3364 = vmul.f32 %v3355, %v3363
    %v3365 = vadd.f32 %v3348, %v3364
    %v3366 = vtanh.pop %v3365
    %v3367 = vsub.f32 1.0, %v3362
    %v3368 = vmul.f32 %v3367, %v3366
    %v3369 = vmul.f32 %v3362, %v3030
    %v3370 = vadd.f32 %v3368, %v3369
    %s3371 = sadd.s32 %s912, 6
    %p3372 = scmp.lt.s32.totalorder %s3371, 8
    %s3373 = scalar_select %p3372, 1, 0
    %v3374 = vstv %s3373
    %vm3375 = vcmp.eq.s32.totalorder %v3374, 1
    %v3376 = vsel %vm3375, %v3343, %v3024
    %s3377 = sadd.s32 %s914, 1
    %p3378 = scmp.lt.s32.totalorder %s3377, 8
    %s3379 = scalar_select %p3378, 1, 0
    %v3380 = vstv %s3379
    %vm3381 = vcmp.eq.s32.totalorder %v3380, 1
    %v3382 = vsel %vm3381, %v3370, %v3030
    %s3383 = scalar_lea.vmem [#allocation20], 48
    %3384 = vst [vmem:[%s3383] sm:$0xff] %v3376
    %s3385 = scalar_lea.vmem [#allocation21], 8
    %3386 = vst [vmem:[%s3385] sm:$0xff] %v3382
    %3387 = vmatprep.subr.mxu0 %v848
    %3388 = vmatpush1.msra.mxu0 %v847
    %3389 = vmatprep.subr.mxu0 %v845
    %3390 = vmatpush1.msra.mxu0 %v844
    %3391 = vmatprep.subr.mxu0 %v842
    %3392 = vmatpush1.msra.mxu0 %v841
    %3393 = vmatprep.subr.mxu0 %v839
    %3394 = vmatpush1.msra.mxu0 %v838
    %3395 = vmatprep.subr.mxu0 %v836
    %3396 = vmatpush1.msra.mxu0 %v835
    %3397 = vmatprep.subr.mxu0 %v833
    %3398 = vmatpush1.msra.mxu0 %v832
    %3399 = vmatprep.subr.mxu0 %v830
    %3400 = vmatpush1.msra.mxu0 %v829
    %3401 = vmatprep.subr.mxu0 %v827
    %3402 = vmatpush1.msra.mxu0 %v826
    %3403 = vmatprep.subr.mxu0 %v824
    %3404 = vmatpush1.msra.mxu0 %v823
    %3405 = vmatprep.subr.mxu0 %v821
    %3406 = vmatpush1.msra.mxu0 %v820
    %3407 = vmatprep.subr.mxu0 %v818
    %3408 = vmatpush1.msra.mxu0 %v817
    %3409 = vmatprep.subr.mxu0 %v815
    %3410 = vmatpush1.msra.mxu0 %v814
    %3411 = vmatprep.subr.mxu0 %v812
    %3412 = vmatpush1.msra.mxu0 %v811
    %3413 = vmatprep.subr.mxu0 %v809
    %3414 = vmatpush1.msra.mxu0 %v808
    %3415 = vmatprep.subr.mxu0 %v806
    %3416 = vmatpush1.msra.mxu0 %v805
    %3417 = vmatprep.subr.mxu0 %v803
    %3418 = vmatpush1.msra.mxu0 %v802
    %3419 = vmatprep.subr.mxu0 0.0
    %3420 = vmatpush2.msra.mxu0 0.0
    %3421 = vmatprep.subr.mxu0 0.0
    %3422 = vmatpush2.msra.mxu0 0.0
    %3423 = vmatprep.subr.mxu0 0.0
    %3424 = vmatpush2.msra.mxu0 0.0
    %3425 = vmatprep.subr.mxu0 0.0
    %3426 = vmatpush2.msra.mxu0 0.0
    %3427 = vmatprep.subr.mxu0 0.0
    %3428 = vmatpush2.msra.mxu0 0.0
    %3429 = vmatprep.subr.mxu0 0.0
    %3430 = vmatpush2.msra.mxu0 0.0
    %3431 = vmatprep.subr.mxu0 0.0
    %3432 = vmatpush2.msra.mxu0 0.0
    %3433 = vmatprep.subr.mxu0 0.0
    %3434 = vmatpush2.msra.mxu0 0.0
    %3435 = vmatprep.subr.mxu0 0.0
    %3436 = vmatpush2.msra.mxu0 0.0
    %3437 = vmatprep.subr.mxu0 0.0
    %3438 = vmatpush2.msra.mxu0 0.0
    %3439 = vmatprep.subr.mxu0 0.0
    %3440 = vmatpush2.msra.mxu0 0.0
    %3441 = vmatprep.subr.mxu0 0.0
    %3442 = vmatpush2.msra.mxu0 0.0
    %3443 = vmatprep.subr.mxu0 0.0
    %3444 = vmatpush2.msra.mxu0 0.0
    %3445 = vmatprep.subr.mxu0 0.0
    %3446 = vmatpush2.msra.mxu0 0.0
    %3447 = vmatprep.subr.mxu0 0.0
    %3448 = vmatpush2.msra.mxu0 0.0
    %3449 = vmatprep.subr.mxu0 0.0
    %3450 = vmatpush2.msra.mxu0 0.0
    %3451 = vmatprep.mubr.f32.mxu0 0.0
    %3452 = vmatmul.mubr.f32.gmra.mxu0 %v3376
    %v3453 = vpop.f32.mrf.mxu0
    %v3454 = vadd.f32 0.0, %v3453
    %v3455 = vpop.f32.mrf.mxu0
    %v3456 = vadd.f32 0.0, %v3455
    %3457 = vdwg.mxu0
    %3458 = vmatprep.subr.mxu0 0.0
    %3459 = vmatpush1.msra.mxu0 %v849
    %3460 = vmatprep.subr.mxu0 0.0
    %3461 = vmatpush1.msra.mxu0 %v846
    %3462 = vmatprep.subr.mxu0 0.0
    %3463 = vmatpush1.msra.mxu0 %v843
    %3464 = vmatprep.subr.mxu0 0.0
    %3465 = vmatpush1.msra.mxu0 %v840
    %3466 = vmatprep.subr.mxu0 0.0
    %3467 = vmatpush1.msra.mxu0 %v837
    %3468 = vmatprep.subr.mxu0 0.0
    %3469 = vmatpush1.msra.mxu0 %v834
    %3470 = vmatprep.subr.mxu0 0.0
    %3471 = vmatpush1.msra.mxu0 %v831
    %3472 = vmatprep.subr.mxu0 0.0
    %3473 = vmatpush1.msra.mxu0 %v828
    %3474 = vmatprep.subr.mxu0 0.0
    %3475 = vmatpush1.msra.mxu0 %v825
    %3476 = vmatprep.subr.mxu0 0.0
    %3477 = vmatpush1.msra.mxu0 %v822
    %3478 = vmatprep.subr.mxu0 0.0
    %3479 = vmatpush1.msra.mxu0 %v819
    %3480 = vmatprep.subr.mxu0 0.0
    %3481 = vmatpush1.msra.mxu0 %v816
    %3482 = vmatprep.subr.mxu0 0.0
    %3483 = vmatpush1.msra.mxu0 %v813
    %3484 = vmatprep.subr.mxu0 0.0
    %3485 = vmatpush1.msra.mxu0 %v810
    %3486 = vmatprep.subr.mxu0 0.0
    %3487 = vmatpush1.msra.mxu0 %v807
    %3488 = vmatprep.subr.mxu0 0.0
    %3489 = vmatpush1.msra.mxu0 %v804
    %3490 = vmatprep.subr.mxu0 0.0
    %3491 = vmatpush2.msra.mxu0 0.0
    %3492 = vmatprep.subr.mxu0 0.0
    %3493 = vmatpush2.msra.mxu0 0.0
    %3494 = vmatprep.subr.mxu0 0.0
    %3495 = vmatpush2.msra.mxu0 0.0
    %3496 = vmatprep.subr.mxu0 0.0
    %3497 = vmatpush2.msra.mxu0 0.0
    %3498 = vmatprep.subr.mxu0 0.0
    %3499 = vmatpush2.msra.mxu0 0.0
    %3500 = vmatprep.subr.mxu0 0.0
    %3501 = vmatpush2.msra.mxu0 0.0
    %3502 = vmatprep.subr.mxu0 0.0
    %3503 = vmatpush2.msra.mxu0 0.0
    %3504 = vmatprep.subr.mxu0 0.0
    %3505 = vmatpush2.msra.mxu0 0.0
    %3506 = vmatprep.subr.mxu0 0.0
    %3507 = vmatpush2.msra.mxu0 0.0
    %3508 = vmatprep.subr.mxu0 0.0
    %3509 = vmatpush2.msra.mxu0 0.0
    %3510 = vmatprep.subr.mxu0 0.0
    %3511 = vmatpush2.msra.mxu0 0.0
    %3512 = vmatprep.subr.mxu0 0.0
    %3513 = vmatpush2.msra.mxu0 0.0
    %3514 = vmatprep.subr.mxu0 0.0
    %3515 = vmatpush2.msra.mxu0 0.0
    %3516 = vmatprep.subr.mxu0 0.0
    %3517 = vmatpush2.msra.mxu0 0.0
    %3518 = vmatprep.subr.mxu0 0.0
    %3519 = vmatpush2.msra.mxu0 0.0
    %3520 = vmatprep.subr.mxu0 0.0
    %3521 = vmatpush2.msra.mxu0 0.0
    %3522 = vmatprep.mubr.f32.mxu0 0.0
    %3523 = vmatmul.mubr.f32.gmra.mxu0 %v3376
    %v3524 = vpop.f32.mrf.mxu0
    %v3525 = vadd.f32 0.0, %v3524
    %v3526 = vpop.f32.mrf.mxu0
    %3527 = vdwg.mxu0
    %3528 = vmatprep.subr.mxu0 %v896
    %3529 = vmatpush1.msra.mxu0 %v895
    %3530 = vmatprep.subr.mxu0 %v893
    %3531 = vmatpush1.msra.mxu0 %v892
    %3532 = vmatprep.subr.mxu0 %v890
    %3533 = vmatpush1.msra.mxu0 %v889
    %3534 = vmatprep.subr.mxu0 %v887
    %3535 = vmatpush1.msra.mxu0 %v886
    %3536 = vmatprep.subr.mxu0 %v884
    %3537 = vmatpush1.msra.mxu0 %v883
    %3538 = vmatprep.subr.mxu0 %v881
    %3539 = vmatpush1.msra.mxu0 %v880
    %3540 = vmatprep.subr.mxu0 %v878
    %3541 = vmatpush1.msra.mxu0 %v877
    %3542 = vmatprep.subr.mxu0 %v875
    %3543 = vmatpush1.msra.mxu0 %v874
    %3544 = vmatprep.subr.mxu0 %v872
    %3545 = vmatpush1.msra.mxu0 %v871
    %3546 = vmatprep.subr.mxu0 %v869
    %3547 = vmatpush1.msra.mxu0 %v868
    %3548 = vmatprep.subr.mxu0 %v866
    %3549 = vmatpush1.msra.mxu0 %v865
    %3550 = vmatprep.subr.mxu0 %v863
    %3551 = vmatpush1.msra.mxu0 %v862
    %3552 = vmatprep.subr.mxu0 %v860
    %3553 = vmatpush1.msra.mxu0 %v859
    %3554 = vmatprep.subr.mxu0 %v857
    %3555 = vmatpush1.msra.mxu0 %v856
    %3556 = vmatprep.subr.mxu0 %v854
    %3557 = vmatpush1.msra.mxu0 %v853
    %3558 = vmatprep.subr.mxu0 %v851
    %3559 = vmatpush1.msra.mxu0 %v850
    %3560 = vmatprep.subr.mxu0 0.0
    %3561 = vmatpush2.msra.mxu0 0.0
    %3562 = vmatprep.subr.mxu0 0.0
    %3563 = vmatpush2.msra.mxu0 0.0
    %3564 = vmatprep.subr.mxu0 0.0
    %3565 = vmatpush2.msra.mxu0 0.0
    %3566 = vmatprep.subr.mxu0 0.0
    %3567 = vmatpush2.msra.mxu0 0.0
    %3568 = vmatprep.subr.mxu0 0.0
    %3569 = vmatpush2.msra.mxu0 0.0
    %3570 = vmatprep.subr.mxu0 0.0
    %3571 = vmatpush2.msra.mxu0 0.0
    %3572 = vmatprep.subr.mxu0 0.0
    %3573 = vmatpush2.msra.mxu0 0.0
    %3574 = vmatprep.subr.mxu0 0.0
    %3575 = vmatpush2.msra.mxu0 0.0
    %3576 = vmatprep.subr.mxu0 0.0
    %3577 = vmatpush2.msra.mxu0 0.0
    %3578 = vmatprep.subr.mxu0 0.0
    %3579 = vmatpush2.msra.mxu0 0.0
    %3580 = vmatprep.subr.mxu0 0.0
    %3581 = vmatpush2.msra.mxu0 0.0
    %3582 = vmatprep.subr.mxu0 0.0
    %3583 = vmatpush2.msra.mxu0 0.0
    %3584 = vmatprep.subr.mxu0 0.0
    %3585 = vmatpush2.msra.mxu0 0.0
    %3586 = vmatprep.subr.mxu0 0.0
    %3587 = vmatpush2.msra.mxu0 0.0
    %3588 = vmatprep.subr.mxu0 0.0
    %3589 = vmatpush2.msra.mxu0 0.0
    %3590 = vmatprep.subr.mxu0 0.0
    %3591 = vmatpush2.msra.mxu0 0.0
    %3592 = vmatprep.mubr.f32.mxu0 0.0
    %3593 = vmatmul.mubr.f32.gmra.mxu0 %v3382
    %v3594 = vpop.f32.mrf.mxu0
    %v3595 = vadd.f32 0.0, %v3594
    %v3596 = vpop.f32.mrf.mxu0
    %v3597 = vadd.f32 0.0, %v3596
    %3598 = vdwg.mxu0
    %3599 = vmatprep.subr.mxu0 0.0
    %3600 = vmatpush1.msra.mxu0 %v897
    %3601 = vmatprep.subr.mxu0 0.0
    %3602 = vmatpush1.msra.mxu0 %v894
    %3603 = vmatprep.subr.mxu0 0.0
    %3604 = vmatpush1.msra.mxu0 %v891
    %3605 = vmatprep.subr.mxu0 0.0
    %3606 = vmatpush1.msra.mxu0 %v888
    %3607 = vmatprep.subr.mxu0 0.0
    %3608 = vmatpush1.msra.mxu0 %v885
    %3609 = vmatprep.subr.mxu0 0.0
    %3610 = vmatpush1.msra.mxu0 %v882
    %3611 = vmatprep.subr.mxu0 0.0
    %3612 = vmatpush1.msra.mxu0 %v879
    %3613 = vmatprep.subr.mxu0 0.0
    %3614 = vmatpush1.msra.mxu0 %v876
    %3615 = vmatprep.subr.mxu0 0.0
    %3616 = vmatpush1.msra.mxu0 %v873
    %3617 = vmatprep.subr.mxu0 0.0
    %3618 = vmatpush1.msra.mxu0 %v870
    %3619 = vmatprep.subr.mxu0 0.0
    %3620 = vmatpush1.msra.mxu0 %v867
    %3621 = vmatprep.subr.mxu0 0.0
    %3622 = vmatpush1.msra.mxu0 %v864
    %3623 = vmatprep.subr.mxu0 0.0
    %3624 = vmatpush1.msra.mxu0 %v861
    %3625 = vmatprep.subr.mxu0 0.0
    %3626 = vmatpush1.msra.mxu0 %v858
    %3627 = vmatprep.subr.mxu0 0.0
    %3628 = vmatpush1.msra.mxu0 %v855
    %3629 = vmatprep.subr.mxu0 0.0
    %3630 = vmatpush1.msra.mxu0 %v852
    %3631 = vmatprep.subr.mxu0 0.0
    %3632 = vmatpush2.msra.mxu0 0.0
    %3633 = vmatprep.subr.mxu0 0.0
    %3634 = vmatpush2.msra.mxu0 0.0
    %3635 = vmatprep.subr.mxu0 0.0
    %3636 = vmatpush2.msra.mxu0 0.0
    %3637 = vmatprep.subr.mxu0 0.0
    %3638 = vmatpush2.msra.mxu0 0.0
    %3639 = vmatprep.subr.mxu0 0.0
    %3640 = vmatpush2.msra.mxu0 0.0
    %3641 = vmatprep.subr.mxu0 0.0
    %3642 = vmatpush2.msra.mxu0 0.0
    %3643 = vmatprep.subr.mxu0 0.0
    %3644 = vmatpush2.msra.mxu0 0.0
    %3645 = vmatprep.subr.mxu0 0.0
    %3646 = vmatpush2.msra.mxu0 0.0
    %3647 = vmatprep.subr.mxu0 0.0
    %3648 = vmatpush2.msra.mxu0 0.0
    %3649 = vmatprep.subr.mxu0 0.0
    %3650 = vmatpush2.msra.mxu0 0.0
    %3651 = vmatprep.subr.mxu0 0.0
    %3652 = vmatpush2.msra.mxu0 0.0
    %3653 = vmatprep.subr.mxu0 0.0
    %3654 = vmatpush2.msra.mxu0 0.0
    %3655 = vmatprep.subr.mxu0 0.0
    %3656 = vmatpush2.msra.mxu0 0.0
    %3657 = vmatprep.subr.mxu0 0.0
    %3658 = vmatpush2.msra.mxu0 0.0
    %3659 = vmatprep.subr.mxu0 0.0
    %3660 = vmatpush2.msra.mxu0 0.0
    %3661 = vmatprep.subr.mxu0 0.0
    %3662 = vmatpush2.msra.mxu0 0.0
    %3663 = vmatprep.mubr.f32.mxu0 0.0
    %3664 = vmatmul.mubr.f32.gmra.mxu0 %v3382
    %v3665 = vpop.f32.mrf.mxu0
    %v3666 = vadd.f32 0.0, %v3665
    %v3667 = vpop.f32.mrf.mxu0
    %3668 = vdwg.mxu0
    %s3669 = smul.addr %s1227, 8
    %s3670 = scalar_lea.vmem [#allocation2], %s3669
    %v3671 = vld [vmem:[%s3670] sm:$0xff]
    %v3672 = vld [vmem:[%s3670 + $0x8] sm:$0xff]
    %v3673 = vld [vmem:[%s3670 + $0x10] sm:$0xff]
    %v3674 = vadd.f32 %v3671, %v3454
    %v3675 = vxor.u32 %v3674, 2147483648
    %v3676 = vmul.f32 %v3675, 1.442695
    %v3677 = vpow.pop %v3676
    %v3678 = vadd.f32 %v3677, 1.0
    %v3679 = vrcp.pop %v3678
    %v3680 = vmul.f32 1.0, %v3679
    %v3681 = vadd.f32 %v3672, %v3456
    %v3682 = vxor.u32 %v3681, 2147483648
    %v3683 = vmul.f32 %v3682, 1.442695
    %v3684 = vpow.pop %v3683
    %v3685 = vadd.f32 %v3684, 1.0
    %v3686 = vrcp.pop %v3685
    %v3687 = vmul.f32 1.0, %v3686
    %v3688 = vadd.f32 %v3525, %v903
    %v3689 = vmul.f32 %v3680, %v3688
    %v3690 = vadd.f32 %v3673, %v3689
    %v3691 = vtanh.pop %v3690
    %v3692 = vsub.f32 1.0, %v3687
    %v3693 = vmul.f32 %v3692, %v3691
    %v3694 = vmul.f32 %v3687, %v3376
    %v3695 = vadd.f32 %v3693, %v3694
    %s3696 = smul.addr %s1199, 8
    %s3697 = scalar_lea.vmem [#allocation3], %s3696
    %v3698 = vld [vmem:[%s3697] sm:$0xff]
    %v3699 = vld [vmem:[%s3697 + $0x8] sm:$0xff]
    %v3700 = vld [vmem:[%s3697 + $0x10] sm:$0xff]
    %v3701 = vadd.f32 %v3698, %v3595
    %v3702 = vxor.u32 %v3701, 2147483648
    %v3703 = vmul.f32 %v3702, 1.442695
    %v3704 = vpow.pop %v3703
    %v3705 = vadd.f32 %v3704, 1.0
    %v3706 = vrcp.pop %v3705
    %v3707 = vmul.f32 1.0, %v3706
    %v3708 = vadd.f32 %v3699, %v3597
    %v3709 = vxor.u32 %v3708, 2147483648
    %v3710 = vmul.f32 %v3709, 1.442695
    %v3711 = vpow.pop %v3710
    %v3712 = vadd.f32 %v3711, 1.0
    %v3713 = vrcp.pop %v3712
    %v3714 = vmul.f32 1.0, %v3713
    %v3715 = vadd.f32 %v3666, %v910
    %v3716 = vmul.f32 %v3707, %v3715
    %v3717 = vadd.f32 %v3700, %v3716
    %v3718 = vtanh.pop %v3717
    %v3719 = vsub.f32 1.0, %v3714
    %v3720 = vmul.f32 %v3719, %v3718
    %v3721 = vmul.f32 %v3714, %v3382
    %v3722 = vadd.f32 %v3720, %v3721
    %s3723 = sadd.s32 %s912, 7
    %p3724 = scmp.lt.s32.totalorder %s3723, 8
    %s3725 = scalar_select %p3724, 1, 0
    %v3726 = vstv %s3725
    %vm3727 = vcmp.eq.s32.totalorder %v3726, 1
    %v3728 = vsel %vm3727, %v3695, %v3376
    %p3729 = scmp.lt.s32.totalorder %s914, 8
    %s3730 = scalar_select %p3729, 1, 0
    %v3731 = vstv %s3730
    %vm3732 = vcmp.eq.s32.totalorder %v3731, 1
    %v3733 = vsel %vm3732, %v3722, %v3382
    %s3734 = scalar_lea.vmem [#allocation20], 56
    %3735 = vst [vmem:[%s3734] sm:$0xff] %v3728
    %3736 = vst [vmem:[#allocation21] sm:$0xff] %v3733
    %3737 = vst [vmem:[#allocation4] sm:$0xff] %v3728
    %3738 = vst [vmem:[#allocation5] sm:$0xff] %v3733
    // Predicated region
    $region90: #{tpu_custom_call.1} parent=1 // pred_check
      %p3739 = pneg %p166
    $region91: #{tpu_custom_call.1} parent=1 // pred_check_branch
      %3741 = sbr.rel (%p3739) target = $region93
    $region92: #{tpu_custom_call.1} parent=1 // pred_region
      %v3742 = vld [vmem:[#allocation17] sm:$0xff]
      %v3743 = vld [vmem:[#allocation17 + $0x8] sm:$0xff]
      %v3744 = vld [vmem:[#allocation17 + $0x10] sm:$0xff]
      %v3745 = vld [vmem:[#allocation17 + $0x18] sm:$0xff]
      %v3746 = vld [vmem:[#allocation17 + $0x20] sm:$0xff]
      %v3747 = vld [vmem:[#allocation17 + $0x28] sm:$0xff]
      %v3748 = vld [vmem:[#allocation17 + $0x30] sm:$0xff]
      %v3749 = vld [vmem:[#allocation17 + $0x38] sm:$0xff]
      %v3750 = vld [vmem:[#allocation17 + $0x40] sm:$0xff]
      %v3751 = vld [vmem:[#allocation17 + $0x48] sm:$0xff]
      %v3752 = vld [vmem:[#allocation17 + $0x50] sm:$0xff]
      %v3753 = vld [vmem:[#allocation17 + $0x58] sm:$0xff]
      %v3754 = vld [vmem:[#allocation17 + $0x60] sm:$0xff]
      %v3755 = vld [vmem:[#allocation17 + $0x68] sm:$0xff]
      %v3756 = vld [vmem:[#allocation17 + $0x70] sm:$0xff]
      %v3757 = vld [vmem:[#allocation17 + $0x78] sm:$0xff]
      %v3758 = vld [vmem:[#allocation18] sm:$0xff]
      %v3759 = vld [vmem:[#allocation18 + $0x8] sm:$0xff]
      %v3760 = vld [vmem:[#allocation18 + $0x10] sm:$0xff]
      %v3761 = vld [vmem:[#allocation18 + $0x18] sm:$0xff]
      %v3762 = vld [vmem:[#allocation18 + $0x20] sm:$0xff]
      %v3763 = vld [vmem:[#allocation18 + $0x28] sm:$0xff]
      %v3764 = vld [vmem:[#allocation18 + $0x30] sm:$0xff]
      %v3765 = vld [vmem:[#allocation18 + $0x38] sm:$0xff]
      %v3766 = vld [vmem:[#allocation18 + $0x40] sm:$0xff]
      %v3767 = vld [vmem:[#allocation18 + $0x48] sm:$0xff]
      %v3768 = vld [vmem:[#allocation18 + $0x50] sm:$0xff]
      %v3769 = vld [vmem:[#allocation18 + $0x58] sm:$0xff]
      %v3770 = vld [vmem:[#allocation18 + $0x60] sm:$0xff]
      %v3771 = vld [vmem:[#allocation18 + $0x68] sm:$0xff]
      %v3772 = vld [vmem:[#allocation18 + $0x70] sm:$0xff]
      %v3773 = vld [vmem:[#allocation18 + $0x78] sm:$0xff]
      %3774 = vmatprep.subr.mxu0 0.0
      %3775 = vmatpush1.msra.mxu0 %v3773
      %3776 = vmatprep.subr.mxu0 0.0
      %3777 = vmatpush1.msra.mxu0 %v3772
      %3778 = vmatprep.subr.mxu0 0.0
      %3779 = vmatpush1.msra.mxu0 %v3771
      %3780 = vmatprep.subr.mxu0 0.0
      %3781 = vmatpush1.msra.mxu0 %v3770
      %3782 = vmatprep.subr.mxu0 0.0
      %3783 = vmatpush1.msra.mxu0 %v3769
      %3784 = vmatprep.subr.mxu0 0.0
      %3785 = vmatpush1.msra.mxu0 %v3768
      %3786 = vmatprep.subr.mxu0 0.0
      %3787 = vmatpush1.msra.mxu0 %v3767
      %3788 = vmatprep.subr.mxu0 0.0
      %3789 = vmatpush1.msra.mxu0 %v3766
      %3790 = vmatprep.subr.mxu0 0.0
      %3791 = vmatpush1.msra.mxu0 %v3765
      %3792 = vmatprep.subr.mxu0 0.0
      %3793 = vmatpush1.msra.mxu0 %v3764
      %3794 = vmatprep.subr.mxu0 0.0
      %3795 = vmatpush1.msra.mxu0 %v3763
      %3796 = vmatprep.subr.mxu0 0.0
      %3797 = vmatpush1.msra.mxu0 %v3762
      %3798 = vmatprep.subr.mxu0 0.0
      %3799 = vmatpush1.msra.mxu0 %v3761
      %3800 = vmatprep.subr.mxu0 0.0
      %3801 = vmatpush1.msra.mxu0 %v3760
      %3802 = vmatprep.subr.mxu0 0.0
      %3803 = vmatpush1.msra.mxu0 %v3759
      %3804 = vmatprep.subr.mxu0 0.0
      %3805 = vmatpush1.msra.mxu0 %v3758
      %3806 = vmatprep.subr.mxu0 0.0
      %3807 = vmatpush2.msra.mxu0 0.0
      %3808 = vmatprep.subr.mxu0 0.0
      %3809 = vmatpush2.msra.mxu0 0.0
      %3810 = vmatprep.subr.mxu0 0.0
      %3811 = vmatpush2.msra.mxu0 0.0
      %3812 = vmatprep.subr.mxu0 0.0
      %3813 = vmatpush2.msra.mxu0 0.0
      %3814 = vmatprep.subr.mxu0 0.0
      %3815 = vmatpush2.msra.mxu0 0.0
      %3816 = vmatprep.subr.mxu0 0.0
      %3817 = vmatpush2.msra.mxu0 0.0
      %3818 = vmatprep.subr.mxu0 0.0
      %3819 = vmatpush2.msra.mxu0 0.0
      %3820 = vmatprep.subr.mxu0 0.0
      %3821 = vmatpush2.msra.mxu0 0.0
      %3822 = vmatprep.subr.mxu0 0.0
      %3823 = vmatpush2.msra.mxu0 0.0
      %3824 = vmatprep.subr.mxu0 0.0
      %3825 = vmatpush2.msra.mxu0 0.0
      %3826 = vmatprep.subr.mxu0 0.0
      %3827 = vmatpush2.msra.mxu0 0.0
      %3828 = vmatprep.subr.mxu0 0.0
      %3829 = vmatpush2.msra.mxu0 0.0
      %3830 = vmatprep.subr.mxu0 0.0
      %3831 = vmatpush2.msra.mxu0 0.0
      %3832 = vmatprep.subr.mxu0 0.0
      %3833 = vmatpush2.msra.mxu0 0.0
      %3834 = vmatprep.subr.mxu0 0.0
      %3835 = vmatpush2.msra.mxu0 0.0
      %3836 = vmatprep.subr.mxu0 0.0
      %3837 = vmatpush2.msra.mxu0 0.0
      %3838 = vmatprep.mubr.f32.mxu0 0.0
      %3839 = vmatmul.mubr.f32.gmra.mxu0 %v3733
      %v3840 = vpop.f32.mrf.mxu0
      %v3841 = vadd.f32 0.0, %v3840
      %v3842 = vpop.f32.mrf.mxu0
      %3843 = vdwg.mxu0
      %3844 = vmatprep.subr.mxu0 0.0
      %3845 = vmatpush1.msra.mxu0 %v3757
      %3846 = vmatprep.subr.mxu0 0.0
      %3847 = vmatpush1.msra.mxu0 %v3756
      %3848 = vmatprep.subr.mxu0 0.0
      %3849 = vmatpush1.msra.mxu0 %v3755
      %3850 = vmatprep.subr.mxu0 0.0
      %3851 = vmatpush1.msra.mxu0 %v3754
      %3852 = vmatprep.subr.mxu0 0.0
      %3853 = vmatpush1.msra.mxu0 %v3753
      %3854 = vmatprep.subr.mxu0 0.0
      %3855 = vmatpush1.msra.mxu0 %v3752
      %3856 = vmatprep.subr.mxu0 0.0
      %3857 = vmatpush1.msra.mxu0 %v3751
      %3858 = vmatprep.subr.mxu0 0.0
      %3859 = vmatpush1.msra.mxu0 %v3750
      %3860 = vmatprep.subr.mxu0 0.0
      %3861 = vmatpush1.msra.mxu0 %v3749
      %3862 = vmatprep.subr.mxu0 0.0
      %3863 = vmatpush1.msra.mxu0 %v3748
      %3864 = vmatprep.subr.mxu0 0.0
      %3865 = vmatpush1.msra.mxu0 %v3747
      %3866 = vmatprep.subr.mxu0 0.0
      %3867 = vmatpush1.msra.mxu0 %v3746
      %3868 = vmatprep.subr.mxu0 0.0
      %3869 = vmatpush1.msra.mxu0 %v3745
      %3870 = vmatprep.subr.mxu0 0.0
      %3871 = vmatpush1.msra.mxu0 %v3744
      %3872 = vmatprep.subr.mxu0 0.0
      %3873 = vmatpush1.msra.mxu0 %v3743
      %3874 = vmatprep.subr.mxu0 0.0
      %3875 = vmatpush1.msra.mxu0 %v3742
      %3876 = vmatprep.subr.mxu0 0.0
      %3877 = vmatpush2.msra.mxu0 0.0
      %3878 = vmatprep.subr.mxu0 0.0
      %3879 = vmatpush2.msra.mxu0 0.0
      %3880 = vmatprep.subr.mxu0 0.0
      %3881 = vmatpush2.msra.mxu0 0.0
      %3882 = vmatprep.subr.mxu0 0.0
      %3883 = vmatpush2.msra.mxu0 0.0
      %3884 = vmatprep.subr.mxu0 0.0
      %3885 = vmatpush2.msra.mxu0 0.0
      %3886 = vmatprep.subr.mxu0 0.0
      %3887 = vmatpush2.msra.mxu0 0.0
      %3888 = vmatprep.subr.mxu0 0.0
      %3889 = vmatpush2.msra.mxu0 0.0
      %3890 = vmatprep.subr.mxu0 0.0
      %3891 = vmatpush2.msra.mxu0 0.0
      %3892 = vmatprep.subr.mxu0 0.0
      %3893 = vmatpush2.msra.mxu0 0.0
      %3894 = vmatprep.subr.mxu0 0.0
      %3895 = vmatpush2.msra.mxu0 0.0
      %3896 = vmatprep.subr.mxu0 0.0
      %3897 = vmatpush2.msra.mxu0 0.0
      %3898 = vmatprep.subr.mxu0 0.0
      %3899 = vmatpush2.msra.mxu0 0.0
      %3900 = vmatprep.subr.mxu0 0.0
      %3901 = vmatpush2.msra.mxu0 0.0
      %3902 = vmatprep.subr.mxu0 0.0
      %3903 = vmatpush2.msra.mxu0 0.0
      %3904 = vmatprep.subr.mxu0 0.0
      %3905 = vmatpush2.msra.mxu0 0.0
      %3906 = vmatprep.subr.mxu0 0.0
      %3907 = vmatpush2.msra.mxu0 0.0
      %3908 = vmatprep.mubr.f32.mxu0 0.0
      %3909 = vmatmul.mubr.f32.gmra.mxu0 %v3728
      %v3910 = vpop.f32.mrf.mxu0
      %v3911 = vadd.f32 %v3841, %v3910
      %v3912 = vpop.f32.mrf.mxu0
      %3913 = vdwg.mxu0
      %v3914 = vld [vmem:[%s12] sm:$0x1]
      %v3916 = vlaneseq
      %v3917 = vshrl.u32 %v3916, 7
      %v3918 = vsub.s32 0, %v3917
      %v3919 = vrot.slane %v3914, %v3918
      %v3921 = vadd.f32 %v3911, %v3919
      %v3922 = vtanh.pop %v3921
      %3923 = vst [vmem:[#allocation23] sm:$0xff] %v3922
    $region93: #{tpu_custom_call.1} parent=1 // pred_fallthru
      _
    // Predicated region
    $region94: #{tpu_custom_call.1} parent=1 // pred_check
      _
    $region95: #{tpu_custom_call.1} parent=1 // pred_check_branch
      %3925 = sbr.rel (0) target = $region97
    $region96: #{tpu_custom_call.1} parent=1 // pred_region
      %s3927 = ssub.s32 1024, 1024
      %3928 = vsyncadd [#allocation8], %s3927
      %s3929 = sshll.u32 [#allocation20], 4
      %s3930 = int_to_ptr.vmem [resolvable:$true] %s3929
      %3935 = dma.vmem_to_hbm [thread:$0]  %s3930, 1024, %s13, [#allocation8], 128, 128, 8
    $region97: #{tpu_custom_call.1} parent=1 // pred_fallthru
      _
    // Predicated region
    $region98: #{tpu_custom_call.1} parent=1 // pred_check
      _
    $region99: #{tpu_custom_call.1} parent=1 // pred_check_branch
      %3937 = sbr.rel (0) target = $region101
    $region100: #{tpu_custom_call.1} parent=1 // pred_region
      %s3938 = ssub.s32 0, 0
      %s3939 = smul.u32 8, %s3938
      %s3941 = ssub.s32 1024, 1024
      %3942 = vsyncadd [#allocation22], %s3941
      %s3943 = smul.addr %s3939, 128
      %s3944 = scalar_lea.hbm %s14, %s3943
      %s3945 = sshll.u32 [#allocation21], 4
      %s3946 = int_to_ptr.vmem [resolvable:$true] %s3945
      %3951 = dma.vmem_to_hbm [thread:$0]  %s3946, 1024, %s3944, [#allocation22], 128, 128, 8
    $region101: #{tpu_custom_call.1} parent=1 // pred_fallthru
      _
    // Predicated region
    $region102: #{tpu_custom_call.1} parent=1 // pred_check
      _
    $region103: #{tpu_custom_call.1} parent=1 // pred_check_branch
      %3953 = sbr.rel (0) target = $region105
    $region104: #{tpu_custom_call.1} parent=1 // pred_region
      %s3955 = ssub.s32 128, 128
      %3956 = vsyncadd [#allocation22], %s3955
      %s3958 = sshll.u32 [#allocation23], 4
      %s3959 = int_to_ptr.vmem [resolvable:$true] %s3958
      %3961 = dma.vmem_to_hbm [thread:$0]  %s3959, 128, %s15, [#allocation22]
    $region105: #{tpu_custom_call.1} parent=1 // pred_fallthru
      _
    // Predicated region
    $region106: #{tpu_custom_call.1} parent=1 // pred_check
      _
    $region107: #{tpu_custom_call.1} parent=1 // pred_check_branch
      %3963 = sbr.rel (0) target = $region109
    $region108: #{tpu_custom_call.1} parent=1 // pred_region
      %3964 = dma.done [#allocation8], 1024
    $region109: #{tpu_custom_call.1} parent=1 // pred_fallthru
      _
    // Predicated region
    $region110: #{tpu_custom_call.1} parent=1 // pred_check
      _
    $region111: #{tpu_custom_call.1} parent=1 // pred_check_branch
      %3966 = sbr.rel (0) target = $region113
    $region112: #{tpu_custom_call.1} parent=1 // pred_region
      %3967 = dma.done [#allocation22], 1024
    $region113: #{tpu_custom_call.1} parent=1 // pred_fallthru
      _
    // Predicated region
    $region114: #{tpu_custom_call.1} parent=1 // pred_check
      _
    $region115: #{tpu_custom_call.1} parent=1 // pred_check_branch
      %3969 = sbr.rel (0) target = $region117
    $region116: #{tpu_custom_call.1} parent=1 // pred_region
      %3970 = dma.done [#allocation22], 128
    $region117: #{tpu_custom_call.1} parent=1 // pred_fallthru
      _
    %3971 = vsyncpa [#allocation7], 1
    %3972 = vsyncpa [#allocation10], 1
    %3973 = vsyncpa [#allocation13], 1
    %3974 = vsyncpa [#allocation16], 1
    %3975 = vsyncpa [#allocation19], 1
    %3976 = vsyncpa [#allocation8], 1
    %3977 = vsyncpa [#allocation22], 1

</llo_original>
